<compile_context>
chip_gen: v7x
topology: tpu7x:2x2x1
jax: 0.10.0
libtpu: 0.0.40
codegen_flags: <defaults>
</compile_context>

<pallas_src>
import jax
import jax.numpy as jnp
from jax.experimental import pallas as pl
from jax.experimental.pallas import tpu as pltpu

LANE = 128


def _round_up(n, m):
    return ((n + m - 1) // m) * m


def make_ftws_kernel(out_dim, out_pad):
    """Kernel closed over the true (unpadded) output width."""
    main = (out_dim // LANE) * LANE      # lane-aligned prefix of REAL columns
    tail_valid = out_dim - main          # real columns in the last lane group

    def kernel(x_ref, w1_ref, b1_ref, w2_ref, b2_ref, w3_ref, b3_ref, o_ref):
        # ---- Layer 1 on the VPU: (B,4) x (4,128) as 4 broadcast FMAs -------
        x = x_ref[...]                   # (B, 4)  f32
        w1 = w1_ref[...]                 # (4, 128) f32
        h1 = b1_ref[...]                 # (1, 128) — broadcasts to (B, 128)
        for k in range(4):
            h1 = h1 + x[:, k:k + 1] * w1[k:k + 1, :]
        h1 = jnp.maximum(h1, 0.0)

        # ---- Layer 2: MXU in native weight dtype (bf16 x bf16 -> f32) ------
        w2 = w2_ref[...]
        h2 = jnp.dot(h1.astype(w2.dtype), w2,
                     preferred_element_type=jnp.float32)
        h2 = jnp.maximum(h2 + b2_ref[...], 0.0)

        # ---- Layer 3: (B,512) @ (512,out_pad) + b3 --------------------------
        w3 = w3_ref[...]
        r = jnp.dot(h2.astype(w3.dtype), w3,
                    preferred_element_type=jnp.float32)
        r = r + b3_ref[...]

        # ---- Global min/max over REAL columns only --------------------------
        if main == out_pad:
            mn = jnp.min(r)
            mx = jnp.max(r)
        else:
            # Only the last lane group needs masking; both slices 128-aligned.
            tail = r[:, main:out_pad]
            col = jax.lax.broadcasted_iota(jnp.int32, tail.shape, 1)
            valid = col < tail_valid
            mn = jnp.min(jnp.where(valid, tail, jnp.inf))
            mx = jnp.max(jnp.where(valid, tail, -jnp.inf))
            if main > 0:
                body = r[:, :main]
                mn = jnp.minimum(mn, jnp.min(body))
                mx = jnp.maximum(mx, jnp.max(body))

        # Scalar reciprocal + VPU multiply instead of a full-tensor divide.
        inv = 1.0 / (mx - mn)
        o_ref[...] = (r - mn) * inv

    return kernel


def init_params(key, res=40):
    """Deterministic parameter init (PyTorch-style uniform fan-in bounds).

    Natural (unpadded) shapes, float32 — faithful to the nn.Module."""
    dims = [(4, 128), (128, 512), (512, res * res)]
    params = {}
    for i, (fan_in, fan_out) in enumerate(dims, start=1):
        key, kw, kb = jax.random.split(key, 3)
        bound = 1.0 / jnp.sqrt(fan_in)
        params[f"w{i}"] = jax.random.uniform(
            kw, (fan_in, fan_out), jnp.float32, -bound, bound)
        # biases stored as (1, fan_out) so they broadcast cleanly in-kernel
        params[f"b{i}"] = jax.random.uniform(
            kb, (1, fan_out), jnp.float32, -bound, bound)
    return params


def prepare_params(params, weight_dtype=jnp.bfloat16):
    """One-time weight preprocessing: pad last-layer columns to a lane
    multiple and down-cast the big weights (w2/w3) for HBM streaming.
    bf16 is the default (kernel is HBM-bound on the W3 read); pass
    jnp.float32 only when bit-faithful parity with the f32 module matters."""
    out_dim = params["w3"].shape[1]
    out_pad = _round_up(out_dim, LANE)
    pad = out_pad - out_dim
    prepared = {
        "w1": params["w1"],                       # tiny, keep f32 (VPU layer)
        "b1": params["b1"],
        "w2": params["w2"].astype(weight_dtype),
        "b2": params["b2"],                       # biases stay f32
        "w3": jnp.pad(params["w3"], ((0, 0), (0, pad))).astype(weight_dtype),
        "b3": jnp.pad(params["b3"], ((0, 0), (0, pad))),
    }
    return prepared, out_dim


def ftws_forward(x, prepared, out_dim, *, depad=True):
    """x: (B, 4) float32.  prepared: output of prepare_params.

    depad=False returns the lane-padded (B, out_pad) slab (pad columns hold
    normalized garbage) and saves an extra XLA slice launch + HBM round trip
    — prefer it when the consumer reshapes/slices anyway."""
    B = x.shape[0]
    out_pad = prepared["w3"].shape[1]

    full = lambda a: pl.BlockSpec(a.shape, lambda: tuple(0 for _ in a.shape))

    args = (x, prepared["w1"], prepared["b1"], prepared["w2"], prepared["b2"],
            prepared["w3"], prepared["b3"])

    bytes_accessed = (sum(int(a.size) * a.dtype.itemsize for a in args)
                      + B * out_pad * 4)
    flops = 2 * B * (4 * 128 + 128 * 512 + 512 * out_pad)

    out = pl.pallas_call(
        make_ftws_kernel(out_dim, out_pad),
        out_shape=jax.ShapeDtypeStruct((B, out_pad), jnp.float32),
        grid=(),
        in_specs=[full(a) for a in args],
        out_specs=pl.BlockSpec((B, out_pad), lambda: (0, 0)),
        compiler_params=pltpu.CompilerParams(vmem_limit_bytes=16 << 20),
        cost_estimate=pl.CostEstimate(flops=flops, transcendentals=0,
                                      bytes_accessed=bytes_accessed),
    )(*args)

    if depad and out_pad != out_dim:
        return out[:, :out_dim]
    return out


def reference_forward(x, params):
    h1 = jnp.maximum(x @ params["w1"] + params["b1"], 0.0)
    h2 = jnp.maximum(h1 @ params["w2"] + params["b2"], 0.0)
    r = h2 @ params["w3"] + params["b3"]
    return (r - r.min()) / (r.max() - r.min())


if __name__ == "__main__":
    key = jax.random.PRNGKey(0)
    key, kx = jax.random.split(key)

    RES = 40          # default resolution from the module (output dim 1600)
    BATCH = 8

    params = init_params(key, res=RES)
    x = jax.random.normal(kx, (BATCH, 4), jnp.float32)

    ref = reference_forward(x, params)

    # Path 1 (default): bf16 weight streaming — halves HBM traffic on the
    # dominant W3 read; f32 accumulation in-kernel, only weights quantized.
    prep_bf16, out_dim = prepare_params(params)               # bf16 default
    out_pad = jax.block_until_ready(
        ftws_forward(x, prep_bf16, out_dim, depad=False))     # padded slab
    assert out_pad.shape == (BATCH, _round_up(RES * RES, LANE))
    out_bf16 = out_pad[:, :out_dim]
    assert out_bf16.shape == (BATCH, RES * RES)
    assert jnp.allclose(out_bf16, ref, atol=5e-2), "bf16 path diverged"

    # Path 2: f32 weights (bit-faithful to the PyTorch module's numerics).
    prep_f32, _ = prepare_params(params, jnp.float32)
    out_f32 = jax.block_until_ready(ftws_forward(x, prep_f32, out_dim))
    assert out_f32.shape == (BATCH, RES * RES)
    assert jnp.allclose(out_f32, ref, atol=1e-5, rtol=1e-5), "f32 mismatch"

    print("KERNEL_OK")
</pallas_src>

<mosaic_0001>
module attributes {stable_mosaic.version = 11 : i64} {
  func.func @kernel(%arg0: memref<8x4xf32, #tpu.memory_space<vmem>>, %arg1: memref<4x128xf32, #tpu.memory_space<vmem>>, %arg2: memref<1x128xf32, #tpu.memory_space<vmem>>, %arg3: memref<128x512xbf16, #tpu.memory_space<vmem>>, %arg4: memref<1x512xf32, #tpu.memory_space<vmem>>, %arg5: memref<512x1664xbf16, #tpu.memory_space<vmem>>, %arg6: memref<1x1664xf32, #tpu.memory_space<vmem>>, %arg7: memref<8x1664xf32, #tpu.memory_space<vmem>>) attributes {dimension_semantics = [], scalar_prefetch = 0 : i64, scratch_operands = 0 : i64, tpu.core_type = #tpu.core_type<tc>} {
    %c0 = arith.constant 0 : index
    %c0_0 = arith.constant 0 : index
    %0 = vector.load %arg0[%c0, %c0_0] : memref<8x4xf32, #tpu.memory_space<vmem>>, vector<8x4xf32>
    %c0_1 = arith.constant 0 : index
    %c0_2 = arith.constant 0 : index
    %1 = vector.load %arg1[%c0_1, %c0_2] : memref<4x128xf32, #tpu.memory_space<vmem>>, vector<4x128xf32>
    %c0_3 = arith.constant 0 : index
    %c0_4 = arith.constant 0 : index
    %2 = vector.load %arg2[%c0_3, %c0_4] : memref<1x128xf32, #tpu.memory_space<vmem>>, vector<1x128xf32>
    %3 = vector.extract_strided_slice %0 {offsets = [0, 0], sizes = [8, 1], strides = [1, 1]} : vector<8x4xf32> to vector<8x1xf32>
    %4 = vector.extract_strided_slice %1 {offsets = [0, 0], sizes = [1, 128], strides = [1, 1]} : vector<4x128xf32> to vector<1x128xf32>
    %5 = vector.broadcast %3 : vector<8x1xf32> to vector<8x128xf32>
    %6 = vector.broadcast %4 : vector<1x128xf32> to vector<8x128xf32>
    %7 = arith.mulf %5, %6 : vector<8x128xf32>
    %8 = vector.broadcast %2 : vector<1x128xf32> to vector<8x128xf32>
    %9 = arith.addf %8, %7 : vector<8x128xf32>
    %10 = vector.extract_strided_slice %0 {offsets = [0, 1], sizes = [8, 1], strides = [1, 1]} : vector<8x4xf32> to vector<8x1xf32>
    %11 = vector.extract_strided_slice %1 {offsets = [1, 0], sizes = [1, 128], strides = [1, 1]} : vector<4x128xf32> to vector<1x128xf32>
    %12 = vector.broadcast %10 : vector<8x1xf32> to vector<8x128xf32>
    %13 = vector.broadcast %11 : vector<1x128xf32> to vector<8x128xf32>
    %14 = arith.mulf %12, %13 : vector<8x128xf32>
    %15 = arith.addf %9, %14 : vector<8x128xf32>
    %16 = vector.extract_strided_slice %0 {offsets = [0, 2], sizes = [8, 1], strides = [1, 1]} : vector<8x4xf32> to vector<8x1xf32>
    %17 = vector.extract_strided_slice %1 {offsets = [2, 0], sizes = [1, 128], strides = [1, 1]} : vector<4x128xf32> to vector<1x128xf32>
    %18 = vector.broadcast %16 : vector<8x1xf32> to vector<8x128xf32>
    %19 = vector.broadcast %17 : vector<1x128xf32> to vector<8x128xf32>
    %20 = arith.mulf %18, %19 : vector<8x128xf32>
    %21 = arith.addf %15, %20 : vector<8x128xf32>
    %22 = vector.extract_strided_slice %0 {offsets = [0, 3], sizes = [8, 1], strides = [1, 1]} : vector<8x4xf32> to vector<8x1xf32>
    %23 = vector.extract_strided_slice %1 {offsets = [3, 0], sizes = [1, 128], strides = [1, 1]} : vector<4x128xf32> to vector<1x128xf32>
    %24 = vector.broadcast %22 : vector<8x1xf32> to vector<8x128xf32>
    %25 = vector.broadcast %23 : vector<1x128xf32> to vector<8x128xf32>
    %26 = arith.mulf %24, %25 : vector<8x128xf32>
    %27 = arith.addf %21, %26 : vector<8x128xf32>
    %cst = arith.constant 0.000000e+00 : f32
    %28 = vector.broadcast %cst : f32 to vector<8x128xf32>
    %29 = arith.maximumf %27, %28 : vector<8x128xf32>
    %c0_5 = arith.constant 0 : index
    %c0_6 = arith.constant 0 : index
    %30 = vector.load %arg3[%c0_5, %c0_6] : memref<128x512xbf16, #tpu.memory_space<vmem>>, vector<128x512xbf16>
    %31 = arith.truncf %29 : vector<8x128xf32> to vector<8x128xbf16>
    %cst_7 = arith.constant dense<0.000000e+00> : vector<8x512xf32>
    %32 = tpu.matmul %31, %30, %cst_7 {dimension_numbers = #tpu.dot_dimension_numbers<[1], [0], [0], [1], [0, 0, 1, 1], [], []>} : vector<8x128xbf16>, vector<128x512xbf16>, vector<8x512xf32> -> vector<8x512xf32>
    %c0_8 = arith.constant 0 : index
    %c0_9 = arith.constant 0 : index
    %33 = vector.load %arg4[%c0_8, %c0_9] : memref<1x512xf32, #tpu.memory_space<vmem>>, vector<1x512xf32>
    %34 = vector.broadcast %33 : vector<1x512xf32> to vector<8x512xf32>
    %35 = arith.addf %32, %34 : vector<8x512xf32>
    %cst_10 = arith.constant 0.000000e+00 : f32
    %36 = vector.broadcast %cst_10 : f32 to vector<8x512xf32>
    %37 = arith.maximumf %35, %36 : vector<8x512xf32>
    %c0_11 = arith.constant 0 : index
    %c0_12 = arith.constant 0 : index
    %38 = vector.load %arg5[%c0_11, %c0_12] : memref<512x1664xbf16, #tpu.memory_space<vmem>>, vector<512x1664xbf16>
    %39 = arith.truncf %37 : vector<8x512xf32> to vector<8x512xbf16>
    %cst_13 = arith.constant dense<0.000000e+00> : vector<8x1664xf32>
    %40 = tpu.matmul %39, %38, %cst_13 {dimension_numbers = #tpu.dot_dimension_numbers<[1], [0], [0], [1], [0, 0, 1, 1], [], []>} : vector<8x512xbf16>, vector<512x1664xbf16>, vector<8x1664xf32> -> vector<8x1664xf32>
    %c0_14 = arith.constant 0 : index
    %c0_15 = arith.constant 0 : index
    %41 = vector.load %arg6[%c0_14, %c0_15] : memref<1x1664xf32, #tpu.memory_space<vmem>>, vector<1x1664xf32>
    %42 = vector.broadcast %41 : vector<1x1664xf32> to vector<8x1664xf32>
    %43 = arith.addf %40, %42 : vector<8x1664xf32>
    %44 = vector.extract_strided_slice %43 {offsets = [0, 1536], sizes = [8, 128], strides = [1, 1]} : vector<8x1664xf32> to vector<8x128xf32>
    %45 = tpu.iota {dimensions = array<i32: 1>} : vector<8x128xi32>
    %c64_i32 = arith.constant 64 : i32
    %46 = vector.broadcast %c64_i32 : i32 to vector<8x128xi32>
    %47 = arith.cmpi slt, %45, %46 : vector<8x128xi32>
    %cst_16 = arith.constant 0x7F800000 : f32
    %48 = vector.broadcast %cst_16 : f32 to vector<8x128xf32>
    %49 = arith.select %47, %44, %48 : vector<8x128xi1>, vector<8x128xf32>
    %50 = vector.shape_cast %49 : vector<8x128xf32> to vector<1x8x128xf32>
    %cst_17 = arith.constant dense<0x7F800000> : vector<1xf32>
    %51 = vector.multi_reduction <minimumf>, %50, %cst_17 [1, 2] : vector<1x8x128xf32> to vector<1xf32>
    %52 = vector.shape_cast %51 : vector<1xf32> to vector<1x1x1xf32>
    %53 = vector.extract %52[0, 0, 0] : f32 from vector<1x1x1xf32>
    %cst_18 = arith.constant 0xFF800000 : f32
    %54 = vector.broadcast %cst_18 : f32 to vector<8x128xf32>
    %55 = arith.select %47, %44, %54 : vector<8x128xi1>, vector<8x128xf32>
    %56 = vector.shape_cast %55 : vector<8x128xf32> to vector<1x8x128xf32>
    %cst_19 = arith.constant dense<0xFF800000> : vector<1xf32>
    %57 = vector.multi_reduction <maximumf>, %56, %cst_19 [1, 2] : vector<1x8x128xf32> to vector<1xf32>
    %58 = vector.shape_cast %57 : vector<1xf32> to vector<1x1x1xf32>
    %59 = vector.extract %58[0, 0, 0] : f32 from vector<1x1x1xf32>
    %60 = vector.extract_strided_slice %43 {offsets = [0, 0], sizes = [8, 1536], strides = [1, 1]} : vector<8x1664xf32> to vector<8x1536xf32>
    %61 = vector.shape_cast %60 : vector<8x1536xf32> to vector<1x8x1536xf32>
    %cst_20 = arith.constant dense<0x7F800000> : vector<1xf32>
    %62 = vector.multi_reduction <minimumf>, %61, %cst_20 [1, 2] : vector<1x8x1536xf32> to vector<1xf32>
    %63 = vector.shape_cast %62 : vector<1xf32> to vector<1x1x1xf32>
    %64 = vector.extract %63[0, 0, 0] : f32 from vector<1x1x1xf32>
    %65 = arith.minimumf %53, %64 : f32
    %66 = vector.shape_cast %60 : vector<8x1536xf32> to vector<1x8x1536xf32>
    %cst_21 = arith.constant dense<0xFF800000> : vector<1xf32>
    %67 = vector.multi_reduction <maximumf>, %66, %cst_21 [1, 2] : vector<1x8x1536xf32> to vector<1xf32>
    %68 = vector.shape_cast %67 : vector<1xf32> to vector<1x1x1xf32>
    %69 = vector.extract %68[0, 0, 0] : f32 from vector<1x1x1xf32>
    %70 = arith.maximumf %59, %69 : f32
    %71 = arith.subf %70, %65 : f32
    %cst_22 = arith.constant 1.000000e+00 : f32
    %72 = arith.divf %cst_22, %71 : f32
    %73 = vector.broadcast %65 : f32 to vector<8x1664xf32>
    %74 = arith.subf %43, %73 : vector<8x1664xf32>
    %75 = vector.broadcast %72 : f32 to vector<8x1664xf32>
    %76 = arith.mulf %74, %75 : vector<8x1664xf32>
    %c0_23 = arith.constant 0 : index
    %c0_24 = arith.constant 0 : index
    %77 = vector.load %arg7[%c0_23, %c0_24] : memref<8x1664xf32, #tpu.memory_space<vmem>>, vector<8x1664xf32>
    tpu.vector_store %arg7[%c0_23, %c0_24], %76 {strides = array<i32>} : memref<8x1664xf32, #tpu.memory_space<vmem>>, vector<8x1664xf32>,
    return
  }
}

</mosaic_0001>

<llo_original>
// kernel: tpu_custom_call.1
$region0: #{tpu_custom_call.1}
  #allocation0 [shape = 'u32[]', space=smem, size = 0x4, offset = 0x4, fixed_abs, tag = 'smem constant byte address 0x4 - core index']
  #allocation1 [shape = 'u32[144,128]{1,0:T(1,128)}', space=vmem, size = 0x12000, scoped, tag = 'internal scratch']
  %s0 = inlined_call_operand.vmem [shape: f32[8,4], index: 0, kind: input, shape index: {}]
  %s1 = inlined_call_operand.hbm [shape: f32[4,128], index: 1, kind: input, shape index: {}]
  %s2 = inlined_call_operand.hbm [shape: f32[1,128], index: 2, kind: input, shape index: {}]
  %s3 = inlined_call_operand.hbm [shape: bf16[128,512], index: 3, kind: input, shape index: {}]
  %s4 = inlined_call_operand.hbm [shape: f32[1,512], index: 4, kind: input, shape index: {}]
  %s5 = inlined_call_operand.hbm [shape: bf16[512,1664], index: 5, kind: input, shape index: {}]
  %s6 = inlined_call_operand.hbm [shape: f32[1,1664], index: 6, kind: input, shape index: {}]
  %s7 = inlined_call_operand.hbm [shape: f32[8,1664], index: 7, kind: output, shape index: {}]
  %s8 = sld [smem:[#allocation0]]
  $region62: #{tpu_custom_call.1} parent=0
    _
  %s10 = ssub.s32 1, %s8
  %s11 = scalar_select 0, %s10, %s8
  $region1: #{tpu_custom_call.1} parent=0
    #allocation2 [shape = 'u8[2048]{0}', space=vmem, size = 0x800, scoped, tag = 'input window, operand 1, single buffered']
    #allocation3 [shape = 's32[1]{0}', space=sflag, size = 0x4, scoped, tag = 'scoped memory for tpu_custom_call.1']
    #allocation4 [shape = 's32[1]{0}', space=sflag, size = 0x4, scoped, tag = 'scoped memory for tpu_custom_call.1']
    #allocation5 [shape = 'u8[512]{0}', space=vmem, size = 0x400, scoped, tag = 'input window, operand 2, single buffered']
    #allocation6 [shape = 's32[1]{0}', space=sflag, size = 0x4, scoped, tag = 'scoped memory for tpu_custom_call.1']
    #allocation7 [shape = 'u8[131072]{0}', space=vmem, size = 0x20000, scoped, tag = 'input window, operand 3, single buffered']
    #allocation8 [shape = 'u8[2048]{0}', space=vmem, size = 0x800, scoped, tag = 'input window, operand 4, single buffered']
    #allocation9 [shape = 's32[1]{0}', space=sflag, size = 0x4, scoped, tag = 'scoped memory for tpu_custom_call.1']
    #allocation10 [shape = 'u8[1703936]{0}', space=vmem, size = 0x1a0000, scoped, tag = 'input window, operand 5, single buffered']
    #allocation11 [shape = 'u8[6656]{0}', space=vmem, size = 0x1c00, scoped, tag = 'input window, operand 6, single buffered']
    #allocation12 [shape = 's32[1]{0}', space=sflag, size = 0x4, scoped, tag = 'scoped memory for tpu_custom_call.1']
    #allocation13 [shape = 'u8[53248]{0}', space=vmem, size = 0xd000, scoped, tag = 'output window, operand 0, single buffered']
    %12 = vsyncpa [#allocation3], 0
    %13 = vsyncpa [#allocation6], 0
    %14 = vsyncpa [#allocation9], 0
    %15 = vsyncpa [#allocation12], 0
    %16 = vsyncpa [#allocation4], 0
    // Predicated region
    $region2: #{tpu_custom_call.1} parent=1 // pred_check
      _
    $region3: #{tpu_custom_call.1} parent=1 // pred_check_branch
      %18 = sbr.rel (0) target = $region5
    $region4: #{tpu_custom_call.1} parent=1 // pred_region
      _
    $region5: #{tpu_custom_call.1} parent=1 // pred_fallthru
      _
    // Predicated region
    $region6: #{tpu_custom_call.1} parent=1 // pred_check
      _
    $region7: #{tpu_custom_call.1} parent=1 // pred_check_branch
      %20 = sbr.rel (0) target = $region9
    $region8: #{tpu_custom_call.1} parent=1 // pred_region
      %s22 = ssub.s32 64, 64
      %23 = vsyncadd [#allocation3], %s22
      %s25 = sshll.u32 [#allocation2], 4
      %s26 = int_to_ptr.vmem [resolvable:$true] %s25
      %28 = dma.hbm_to_vmem [thread:$0]  %s1, 64, %s26, [#allocation3]
    $region9: #{tpu_custom_call.1} parent=1 // pred_fallthru
      _
    // Predicated region
    $region10: #{tpu_custom_call.1} parent=1 // pred_check
      _
    $region11: #{tpu_custom_call.1} parent=1 // pred_check_branch
      %30 = sbr.rel (0) target = $region13
    $region12: #{tpu_custom_call.1} parent=1 // pred_region
      %s32 = ssub.s32 16, 16
      %33 = vsyncadd [#allocation6], %s32
      %s35 = sshll.u32 [#allocation5], 4
      %s36 = int_to_ptr.vmem [resolvable:$true] %s35
      %38 = dma.hbm_to_vmem [thread:$0]  %s2, 16, %s36, [#allocation6]
    $region13: #{tpu_custom_call.1} parent=1 // pred_fallthru
      _
    // Predicated region
    $region14: #{tpu_custom_call.1} parent=1 // pred_check
      _
    $region15: #{tpu_custom_call.1} parent=1 // pred_check_branch
      %40 = sbr.rel (0) target = $region17
    $region16: #{tpu_custom_call.1} parent=1 // pred_region
      %s42 = ssub.s32 4096, 4096
      %43 = vsyncadd [#allocation6], %s42
      %s44 = sshll.u32 [#allocation7], 4
      %s45 = int_to_ptr.vmem [resolvable:$true] %s44
      %50 = dma.hbm_to_vmem [thread:$0]  %s3, 4096, %s45, [#allocation6], 256, 256, 16
    $region17: #{tpu_custom_call.1} parent=1 // pred_fallthru
      _
    // Predicated region
    $region18: #{tpu_custom_call.1} parent=1 // pred_check
      _
    $region19: #{tpu_custom_call.1} parent=1 // pred_check_branch
      %52 = sbr.rel (0) target = $region21
    $region20: #{tpu_custom_call.1} parent=1 // pred_region
      %s54 = ssub.s32 64, 64
      %55 = vsyncadd [#allocation9], %s54
      %s57 = sshll.u32 [#allocation8], 4
      %s58 = int_to_ptr.vmem [resolvable:$true] %s57
      %60 = dma.hbm_to_vmem [thread:$0]  %s4, 64, %s58, [#allocation9]
    $region21: #{tpu_custom_call.1} parent=1 // pred_fallthru
      _
    // Predicated region
    $region22: #{tpu_custom_call.1} parent=1 // pred_check
      _
    $region23: #{tpu_custom_call.1} parent=1 // pred_check_branch
      %62 = sbr.rel (0) target = $region25
    $region24: #{tpu_custom_call.1} parent=1 // pred_region
      %s64 = ssub.s32 53248, 53248
      %65 = vsyncadd [#allocation9], %s64
      %s66 = sshll.u32 [#allocation10], 4
      %s67 = int_to_ptr.vmem [resolvable:$true] %s66
      %72 = dma.hbm_to_vmem [thread:$0]  %s5, 53248, %s67, [#allocation9], 832, 832, 52
    $region25: #{tpu_custom_call.1} parent=1 // pred_fallthru
      _
    // Predicated region
    $region26: #{tpu_custom_call.1} parent=1 // pred_check
      _
    $region27: #{tpu_custom_call.1} parent=1 // pred_check_branch
      %74 = sbr.rel (0) target = $region29
    $region28: #{tpu_custom_call.1} parent=1 // pred_region
      %s76 = ssub.s32 208, 208
      %77 = vsyncadd [#allocation12], %s76
      %s79 = sshll.u32 [#allocation11], 4
      %s80 = int_to_ptr.vmem [resolvable:$true] %s79
      %82 = dma.hbm_to_vmem [thread:$0]  %s6, 208, %s80, [#allocation12]
    $region29: #{tpu_custom_call.1} parent=1 // pred_fallthru
      _
    // Predicated region
    $region30: #{tpu_custom_call.1} parent=1 // pred_check
      _
    $region31: #{tpu_custom_call.1} parent=1 // pred_check_branch
      %84 = sbr.rel (0) target = $region33
    $region32: #{tpu_custom_call.1} parent=1 // pred_region
      %85 = dma.done [#allocation3], 64
    $region33: #{tpu_custom_call.1} parent=1 // pred_fallthru
      _
    // Predicated region
    $region34: #{tpu_custom_call.1} parent=1 // pred_check
      _
    $region35: #{tpu_custom_call.1} parent=1 // pred_check_branch
      %87 = sbr.rel (0) target = $region37
    $region36: #{tpu_custom_call.1} parent=1 // pred_region
      %88 = dma.done [#allocation6], 16
    $region37: #{tpu_custom_call.1} parent=1 // pred_fallthru
      _
    // Predicated region
    $region38: #{tpu_custom_call.1} parent=1 // pred_check
      _
    $region39: #{tpu_custom_call.1} parent=1 // pred_check_branch
      %90 = sbr.rel (0) target = $region41
    $region40: #{tpu_custom_call.1} parent=1 // pred_region
      %91 = dma.done [#allocation6], 4096
    $region41: #{tpu_custom_call.1} parent=1 // pred_fallthru
      _
    // Predicated region
    $region42: #{tpu_custom_call.1} parent=1 // pred_check
      _
    $region43: #{tpu_custom_call.1} parent=1 // pred_check_branch
      %93 = sbr.rel (0) target = $region45
    $region44: #{tpu_custom_call.1} parent=1 // pred_region
      %94 = dma.done [#allocation9], 64
    $region45: #{tpu_custom_call.1} parent=1 // pred_fallthru
      _
    // Predicated region
    $region46: #{tpu_custom_call.1} parent=1 // pred_check
      _
    $region47: #{tpu_custom_call.1} parent=1 // pred_check_branch
      %96 = sbr.rel (0) target = $region49
    $region48: #{tpu_custom_call.1} parent=1 // pred_region
      %97 = dma.done [#allocation9], 53248
    $region49: #{tpu_custom_call.1} parent=1 // pred_fallthru
      _
    // Predicated region
    $region50: #{tpu_custom_call.1} parent=1 // pred_check
      _
    $region51: #{tpu_custom_call.1} parent=1 // pred_check_branch
      %99 = sbr.rel (0) target = $region53
    $region52: #{tpu_custom_call.1} parent=1 // pred_region
      %100 = dma.done [#allocation12], 208
    $region53: #{tpu_custom_call.1} parent=1 // pred_fallthru
      _
    %v102 = vld [vmem:[%s0] sm:$0xff]
    %v103 = vld [vmem:[#allocation2] sm:$0xf]
    %v104 = vld [vmem:[#allocation5] sm:$0x1]
    %106 = vset.pattern.permute.xlu0 0
    %107 = vperm.xlu0 %106, %v102
    %v108 = vpop.permute.xlu0 %107
    %v110 = vlaneseq
    %v111 = vshrl.u32 %v110, 7
    %v112 = vsub.s32 0, %v111
    %v113 = vrot.slane %v103, %v112
    %v114 = vmul.f32 %v108, %v113
    %v116 = vlaneseq
    %v117 = vshrl.u32 %v116, 7
    %v118 = vsub.s32 0, %v117
    %v119 = vrot.slane %v104, %v118
    %v121 = vadd.f32 %v119, %v114
    %122 = vset.pattern.permute.xlu0 1
    %123 = vperm.xlu0 %122, %v102
    %v124 = vpop.permute.xlu0 %123
    %v126 = vlaneseq
    %v127 = vshrl.u32 %v126, 7
    %v128 = vsub.s32 1, %v127
    %v129 = vrot.slane %v103, %v128
    %v130 = vmul.f32 %v124, %v129
    %v131 = vadd.f32 %v121, %v130
    %132 = vset.pattern.permute.xlu0 2
    %133 = vperm.xlu0 %132, %v102
    %v134 = vpop.permute.xlu0 %133
    %v136 = vlaneseq
    %v137 = vshrl.u32 %v136, 7
    %v138 = vsub.s32 2, %v137
    %v139 = vrot.slane %v103, %v138
    %v140 = vmul.f32 %v134, %v139
    %v141 = vadd.f32 %v131, %v140
    %142 = vset.pattern.permute.xlu0 3
    %143 = vperm.xlu0 %142, %v102
    %v144 = vpop.permute.xlu0 %143
    %v146 = vlaneseq
    %v147 = vshrl.u32 %v146, 7
    %v148 = vsub.s32 3, %v147
    %v149 = vrot.slane %v103, %v148
    %v150 = vmul.f32 %v144, %v149
    %v151 = vadd.f32 %v141, %v150
    %v152 = vmax.f32 %v151, 0.0
    %v153 = vld [vmem:[#allocation7] sm:$0xff]
    %v154 = vld [vmem:[#allocation7 + $0x8] sm:$0xff]
    %v155 = vld [vmem:[#allocation7 + $0x10] sm:$0xff]
    %v156 = vld [vmem:[#allocation7 + $0x18] sm:$0xff]
    %v157 = vld [vmem:[#allocation7 + $0x20] sm:$0xff]
    %v158 = vld [vmem:[#allocation7 + $0x28] sm:$0xff]
    %v159 = vld [vmem:[#allocation7 + $0x30] sm:$0xff]
    %v160 = vld [vmem:[#allocation7 + $0x38] sm:$0xff]
    %v161 = vld [vmem:[#allocation7 + $0x40] sm:$0xff]
    %v162 = vld [vmem:[#allocation7 + $0x48] sm:$0xff]
    %v163 = vld [vmem:[#allocation7 + $0x50] sm:$0xff]
    %v164 = vld [vmem:[#allocation7 + $0x58] sm:$0xff]
    %v165 = vld [vmem:[#allocation7 + $0x60] sm:$0xff]
    %v166 = vld [vmem:[#allocation7 + $0x68] sm:$0xff]
    %v167 = vld [vmem:[#allocation7 + $0x70] sm:$0xff]
    %v168 = vld [vmem:[#allocation7 + $0x78] sm:$0xff]
    %v169 = vld [vmem:[#allocation7 + $0x80] sm:$0xff]
    %v170 = vld [vmem:[#allocation7 + $0x88] sm:$0xff]
    %v171 = vld [vmem:[#allocation7 + $0x90] sm:$0xff]
    %v172 = vld [vmem:[#allocation7 + $0x98] sm:$0xff]
    %v173 = vld [vmem:[#allocation7 + $0xa0] sm:$0xff]
    %v174 = vld [vmem:[#allocation7 + $0xa8] sm:$0xff]
    %v175 = vld [vmem:[#allocation7 + $0xb0] sm:$0xff]
    %v176 = vld [vmem:[#allocation7 + $0xb8] sm:$0xff]
    %v177 = vld [vmem:[#allocation7 + $0xc0] sm:$0xff]
    %v178 = vld [vmem:[#allocation7 + $0xc8] sm:$0xff]
    %v179 = vld [vmem:[#allocation7 + $0xd0] sm:$0xff]
    %v180 = vld [vmem:[#allocation7 + $0xd8] sm:$0xff]
    %v181 = vld [vmem:[#allocation7 + $0xe0] sm:$0xff]
    %v182 = vld [vmem:[#allocation7 + $0xe8] sm:$0xff]
    %v183 = vld [vmem:[#allocation7 + $0xf0] sm:$0xff]
    %v184 = vld [vmem:[#allocation7 + $0xf8] sm:$0xff]
    %v185 = vpack.c.bf16 %v152, %v152
    %v186 = vld [vmem:[#allocation8] sm:$0xf]
    %v188 = vlaneseq
    %v189 = vshrl.u32 %v188, 7
    %v190 = vsub.s32 0, %v189
    %v191 = vrot.slane %v186, %v190
    %v192 = vlaneseq
    %v193 = vshrl.u32 %v192, 7
    %v194 = vsub.s32 1, %v193
    %v195 = vrot.slane %v186, %v194
    %v196 = vlaneseq
    %v197 = vshrl.u32 %v196, 7
    %v198 = vsub.s32 2, %v197
    %v199 = vrot.slane %v186, %v198
    %v200 = vlaneseq
    %v201 = vshrl.u32 %v200, 7
    %v202 = vsub.s32 3, %v201
    %v203 = vrot.slane %v186, %v202
    %v240 = vunpack.c.l.b16 %v153
    %v241 = vunpack.c.h.b16 %v153
    %v242 = vunpack.c.l.b16 %v154
    %v243 = vunpack.c.h.b16 %v154
    %v244 = vunpack.c.l.b16 %v155
    %v245 = vunpack.c.h.b16 %v155
    %v246 = vunpack.c.l.b16 %v156
    %v247 = vunpack.c.h.b16 %v156
    %v248 = vunpack.c.l.b16 %v157
    %v249 = vunpack.c.h.b16 %v157
    %v250 = vunpack.c.l.b16 %v158
    %v251 = vunpack.c.h.b16 %v158
    %v252 = vunpack.c.l.b16 %v159
    %v253 = vunpack.c.h.b16 %v159
    %v254 = vunpack.c.l.b16 %v160
    %v255 = vunpack.c.h.b16 %v160
    %v256 = vunpack.c.l.b16 %v161
    %v257 = vunpack.c.h.b16 %v161
    %v258 = vunpack.c.l.b16 %v162
    %v259 = vunpack.c.h.b16 %v162
    %v260 = vunpack.c.l.b16 %v163
    %v261 = vunpack.c.h.b16 %v163
    %v262 = vunpack.c.l.b16 %v164
    %v263 = vunpack.c.h.b16 %v164
    %v264 = vunpack.c.l.b16 %v165
    %v265 = vunpack.c.h.b16 %v165
    %v266 = vunpack.c.l.b16 %v166
    %v267 = vunpack.c.h.b16 %v166
    %v268 = vunpack.c.l.b16 %v167
    %v269 = vunpack.c.h.b16 %v167
    %v270 = vunpack.c.l.b16 %v168
    %v271 = vunpack.c.h.b16 %v168
    %v272 = vunpack.c.l.b16 %v169
    %v273 = vunpack.c.h.b16 %v169
    %v274 = vunpack.c.l.b16 %v170
    %v275 = vunpack.c.h.b16 %v170
    %v276 = vunpack.c.l.b16 %v171
    %v277 = vunpack.c.h.b16 %v171
    %v278 = vunpack.c.l.b16 %v172
    %v279 = vunpack.c.h.b16 %v172
    %v280 = vunpack.c.l.b16 %v173
    %v281 = vunpack.c.h.b16 %v173
    %v282 = vunpack.c.l.b16 %v174
    %v283 = vunpack.c.h.b16 %v174
    %v284 = vunpack.c.l.b16 %v175
    %v285 = vunpack.c.h.b16 %v175
    %v286 = vunpack.c.l.b16 %v176
    %v287 = vunpack.c.h.b16 %v176
    %v288 = vunpack.c.l.b16 %v177
    %v289 = vunpack.c.h.b16 %v177
    %v290 = vunpack.c.l.b16 %v178
    %v291 = vunpack.c.h.b16 %v178
    %v292 = vunpack.c.l.b16 %v179
    %v293 = vunpack.c.h.b16 %v179
    %v294 = vunpack.c.l.b16 %v180
    %v295 = vunpack.c.h.b16 %v180
    %v296 = vunpack.c.l.b16 %v181
    %v297 = vunpack.c.h.b16 %v181
    %v298 = vunpack.c.l.b16 %v182
    %v299 = vunpack.c.h.b16 %v182
    %v300 = vunpack.c.l.b16 %v183
    %v301 = vunpack.c.h.b16 %v183
    %v302 = vunpack.c.l.b16 %v184
    %v303 = vunpack.c.h.b16 %v184
    %v304 = vpack.c.b16 %v244, %v240
    %v305 = vpack.c.b16 %v245, %v241
    %v306 = vpack.c.b16 %v246, %v242
    %v307 = vpack.c.b16 %v247, %v243
    %v308 = vpack.c.b16 %v252, %v248
    %v309 = vpack.c.b16 %v253, %v249
    %v310 = vpack.c.b16 %v254, %v250
    %v311 = vpack.c.b16 %v255, %v251
    %v312 = vpack.c.b16 %v260, %v256
    %v313 = vpack.c.b16 %v261, %v257
    %v314 = vpack.c.b16 %v262, %v258
    %v315 = vpack.c.b16 %v263, %v259
    %v316 = vpack.c.b16 %v268, %v264
    %v317 = vpack.c.b16 %v269, %v265
    %v318 = vpack.c.b16 %v270, %v266
    %v319 = vpack.c.b16 %v271, %v267
    %v320 = vpack.c.b16 %v276, %v272
    %v321 = vpack.c.b16 %v277, %v273
    %v322 = vpack.c.b16 %v278, %v274
    %v323 = vpack.c.b16 %v279, %v275
    %v324 = vpack.c.b16 %v284, %v280
    %v325 = vpack.c.b16 %v285, %v281
    %v326 = vpack.c.b16 %v286, %v282
    %v327 = vpack.c.b16 %v287, %v283
    %v328 = vpack.c.b16 %v292, %v288
    %v329 = vpack.c.b16 %v293, %v289
    %v330 = vpack.c.b16 %v294, %v290
    %v331 = vpack.c.b16 %v295, %v291
    %v332 = vpack.c.b16 %v300, %v296
    %v333 = vpack.c.b16 %v301, %v297
    %v334 = vpack.c.b16 %v302, %v298
    %v335 = vpack.c.b16 %v303, %v299
    %368 = vmatprep.subr.bf16.mxu0 %v305
    %369 = vmatpush1.bf16.msra.mxu0 %v304
    %370 = vmatprep.subr.bf16.mxu0 %v309
    %371 = vmatpush1.bf16.msra.mxu0 %v308
    %372 = vmatprep.subr.bf16.mxu0 %v313
    %373 = vmatpush1.bf16.msra.mxu0 %v312
    %374 = vmatprep.subr.bf16.mxu0 %v317
    %375 = vmatpush1.bf16.msra.mxu0 %v316
    %376 = vmatprep.subr.bf16.mxu0 %v321
    %377 = vmatpush1.bf16.msra.mxu0 %v320
    %378 = vmatprep.subr.bf16.mxu0 %v325
    %379 = vmatpush1.bf16.msra.mxu0 %v324
    %380 = vmatprep.subr.bf16.mxu0 %v329
    %381 = vmatpush1.bf16.msra.mxu0 %v328
    %382 = vmatprep.subr.bf16.mxu0 %v333
    %383 = vmatpush1.bf16.msra.mxu0 %v332
    %384 = vmatprep.subr.bf16.mxu0 0
    %385 = vmatpush1.bf16.msra.mxu0 0
    %386 = vmatprep.subr.bf16.mxu0 0
    %387 = vmatpush1.bf16.msra.mxu0 0
    %388 = vmatprep.subr.bf16.mxu0 0
    %389 = vmatpush1.bf16.msra.mxu0 0
    %390 = vmatprep.subr.bf16.mxu0 0
    %391 = vmatpush1.bf16.msra.mxu0 0
    %392 = vmatprep.subr.bf16.mxu0 0
    %393 = vmatpush1.bf16.msra.mxu0 0
    %394 = vmatprep.subr.bf16.mxu0 0
    %395 = vmatpush1.bf16.msra.mxu0 0
    %396 = vmatprep.subr.bf16.mxu0 0
    %397 = vmatpush1.bf16.msra.mxu0 0
    %398 = vmatprep.subr.bf16.mxu0 0
    %399 = vmatpush1.bf16.msra.mxu0 0
    %400 = vmatprep.mubr.bf16.mxu0 0
    %401 = vmatmul.mubr.bf16.gmra.mrb[0].mxu0 %v185
    %v402 = vpop.f32.mrb[0].mxu0
    %v403 = vadd.f32 %v191, %v402
    %v404 = vpop.f32.mrb[0].mxu0
    %v405 = vadd.f32 %v195, %v404
    %v406 = vpop.f32.mrb[0].mxu0
    %v407 = vpop.f32.mrb[0].mxu0
    %408 = vdwg.mxu0
    %409 = vmatprep.subr.bf16.mxu0 %v307
    %410 = vmatpush1.bf16.msra.mxu0 %v306
    %411 = vmatprep.subr.bf16.mxu0 %v311
    %412 = vmatpush1.bf16.msra.mxu0 %v310
    %413 = vmatprep.subr.bf16.mxu0 %v315
    %414 = vmatpush1.bf16.msra.mxu0 %v314
    %415 = vmatprep.subr.bf16.mxu0 %v319
    %416 = vmatpush1.bf16.msra.mxu0 %v318
    %417 = vmatprep.subr.bf16.mxu0 %v323
    %418 = vmatpush1.bf16.msra.mxu0 %v322
    %419 = vmatprep.subr.bf16.mxu0 %v327
    %420 = vmatpush1.bf16.msra.mxu0 %v326
    %421 = vmatprep.subr.bf16.mxu0 %v331
    %422 = vmatpush1.bf16.msra.mxu0 %v330
    %423 = vmatprep.subr.bf16.mxu0 %v335
    %424 = vmatpush1.bf16.msra.mxu0 %v334
    %425 = vmatprep.subr.bf16.mxu0 0
    %426 = vmatpush1.bf16.msra.mxu0 0
    %427 = vmatprep.subr.bf16.mxu0 0
    %428 = vmatpush1.bf16.msra.mxu0 0
    %429 = vmatprep.subr.bf16.mxu0 0
    %430 = vmatpush1.bf16.msra.mxu0 0
    %431 = vmatprep.subr.bf16.mxu0 0
    %432 = vmatpush1.bf16.msra.mxu0 0
    %433 = vmatprep.subr.bf16.mxu0 0
    %434 = vmatpush1.bf16.msra.mxu0 0
    %435 = vmatprep.subr.bf16.mxu0 0
    %436 = vmatpush1.bf16.msra.mxu0 0
    %437 = vmatprep.subr.bf16.mxu0 0
    %438 = vmatpush1.bf16.msra.mxu0 0
    %439 = vmatprep.subr.bf16.mxu0 0
    %440 = vmatpush1.bf16.msra.mxu0 0
    %441 = vmatprep.mubr.bf16.mxu0 0
    %442 = vmatmul.mubr.bf16.gmra.mrb[0].mxu0 %v185
    %v443 = vpop.f32.mrb[0].mxu0
    %v444 = vadd.f32 %v199, %v443
    %v445 = vpop.f32.mrb[0].mxu0
    %v446 = vadd.f32 %v203, %v445
    %v447 = vpop.f32.mrb[0].mxu0
    %v448 = vpop.f32.mrb[0].mxu0
    %449 = vdwg.mxu0
    %v450 = vmax.f32 %v403, 0.0
    %v451 = vmax.f32 %v405, 0.0
    %v452 = vmax.f32 %v444, 0.0
    %v453 = vmax.f32 %v446, 0.0
    %v454 = vld [vmem:[#allocation10] sm:$0xff]
    %v455 = vld [vmem:[#allocation10 + $0x8] sm:$0xff]
    %v456 = vld [vmem:[#allocation10 + $0x10] sm:$0xff]
    %v457 = vld [vmem:[#allocation10 + $0x18] sm:$0xff]
    %v458 = vld [vmem:[#allocation10 + $0x20] sm:$0xff]
    %v459 = vld [vmem:[#allocation10 + $0x28] sm:$0xff]
    %v460 = vld [vmem:[#allocation10 + $0x30] sm:$0xf]
    %v461 = vld [vmem:[#allocation10 + $0x34] sm:$0xff]
    %v462 = vld [vmem:[#allocation10 + $0x3c] sm:$0xff]
    %v463 = vld [vmem:[#allocation10 + $0x44] sm:$0xff]
    %v464 = vld [vmem:[#allocation10 + $0x4c] sm:$0xff]
    %v465 = vld [vmem:[#allocation10 + $0x54] sm:$0xff]
    %v466 = vld [vmem:[#allocation10 + $0x5c] sm:$0xff]
    %v467 = vld [vmem:[#allocation10 + $0x64] sm:$0xf]
    %v468 = vld [vmem:[#allocation10 + $0x68] sm:$0xff]
    %v469 = vld [vmem:[#allocation10 + $0x70] sm:$0xff]
    %v470 = vld [vmem:[#allocation10 + $0x78] sm:$0xff]
    %v471 = vld [vmem:[#allocation10 + $0x80] sm:$0xff]
    %v472 = vld [vmem:[#allocation10 + $0x88] sm:$0xff]
    %v473 = vld [vmem:[#allocation10 + $0x90] sm:$0xff]
    %v474 = vld [vmem:[#allocation10 + $0x98] sm:$0xf]
    %v475 = vld [vmem:[#allocation10 + $0x9c] sm:$0xff]
    %v476 = vld [vmem:[#allocation10 + $0xa4] sm:$0xff]
    %v477 = vld [vmem:[#allocation10 + $0xac] sm:$0xff]
    %v478 = vld [vmem:[#allocation10 + $0xb4] sm:$0xff]
    %v479 = vld [vmem:[#allocation10 + $0xbc] sm:$0xff]
    %v480 = vld [vmem:[#allocation10 + $0xc4] sm:$0xff]
    %v481 = vld [vmem:[#allocation10 + $0xcc] sm:$0xf]
    %v482 = vld [vmem:[#allocation10 + $0xd0] sm:$0xff]
    %v483 = vld [vmem:[#allocation10 + $0xd8] sm:$0xff]
    %v484 = vld [vmem:[#allocation10 + $0xe0] sm:$0xff]
    %v485 = vld [vmem:[#allocation10 + $0xe8] sm:$0xff]
    %v486 = vld [vmem:[#allocation10 + $0xf0] sm:$0xff]
    %v487 = vld [vmem:[#allocation10 + $0xf8] sm:$0xff]
    %v488 = vld [vmem:[#allocation10 + $0x100] sm:$0xf]
    %v489 = vld [vmem:[#allocation10 + $0x104] sm:$0xff]
    %v490 = vld [vmem:[#allocation10 + $0x10c] sm:$0xff]
    %v491 = vld [vmem:[#allocation10 + $0x114] sm:$0xff]
    %v492 = vld [vmem:[#allocation10 + $0x11c] sm:$0xff]
    %v493 = vld [vmem:[#allocation10 + $0x124] sm:$0xff]
    %v494 = vld [vmem:[#allocation10 + $0x12c] sm:$0xff]
    %v495 = vld [vmem:[#allocation10 + $0x134] sm:$0xf]
    %v496 = vld [vmem:[#allocation10 + $0x138] sm:$0xff]
    %v497 = vld [vmem:[#allocation10 + $0x140] sm:$0xff]
    %v498 = vld [vmem:[#allocation10 + $0x148] sm:$0xff]
    %v499 = vld [vmem:[#allocation10 + $0x150] sm:$0xff]
    %v500 = vld [vmem:[#allocation10 + $0x158] sm:$0xff]
    %v501 = vld [vmem:[#allocation10 + $0x160] sm:$0xff]
    %v502 = vld [vmem:[#allocation10 + $0x168] sm:$0xf]
    %v503 = vld [vmem:[#allocation10 + $0x16c] sm:$0xff]
    %v504 = vld [vmem:[#allocation10 + $0x174] sm:$0xff]
    %v505 = vld [vmem:[#allocation10 + $0x17c] sm:$0xff]
    %v506 = vld [vmem:[#allocation10 + $0x184] sm:$0xff]
    %v507 = vld [vmem:[#allocation10 + $0x18c] sm:$0xff]
    %v508 = vld [vmem:[#allocation10 + $0x194] sm:$0xff]
    %v509 = vld [vmem:[#allocation10 + $0x19c] sm:$0xf]
    %v510 = vld [vmem:[#allocation10 + $0x1a0] sm:$0xff]
    %v511 = vld [vmem:[#allocation10 + $0x1a8] sm:$0xff]
    %v512 = vld [vmem:[#allocation10 + $0x1b0] sm:$0xff]
    %v513 = vld [vmem:[#allocation10 + $0x1b8] sm:$0xff]
    %v514 = vld [vmem:[#allocation10 + $0x1c0] sm:$0xff]
    %v515 = vld [vmem:[#allocation10 + $0x1c8] sm:$0xff]
    %v516 = vld [vmem:[#allocation10 + $0x1d0] sm:$0xf]
    %v517 = vld [vmem:[#allocation10 + $0x1d4] sm:$0xff]
    %v518 = vld [vmem:[#allocation10 + $0x1dc] sm:$0xff]
    %v519 = vld [vmem:[#allocation10 + $0x1e4] sm:$0xff]
    %v520 = vld [vmem:[#allocation10 + $0x1ec] sm:$0xff]
    %v521 = vld [vmem:[#allocation10 + $0x1f4] sm:$0xff]
    %v522 = vld [vmem:[#allocation10 + $0x1fc] sm:$0xff]
    %v523 = vld [vmem:[#allocation10 + $0x204] sm:$0xf]
    %v524 = vld [vmem:[#allocation10 + $0x208] sm:$0xff]
    %v525 = vld [vmem:[#allocation10 + $0x210] sm:$0xff]
    %v526 = vld [vmem:[#allocation10 + $0x218] sm:$0xff]
    %v527 = vld [vmem:[#allocation10 + $0x220] sm:$0xff]
    %v528 = vld [vmem:[#allocation10 + $0x228] sm:$0xff]
    %v529 = vld [vmem:[#allocation10 + $0x230] sm:$0xff]
    %v530 = vld [vmem:[#allocation10 + $0x238] sm:$0xf]
    %v531 = vld [vmem:[#allocation10 + $0x23c] sm:$0xff]
    %v532 = vld [vmem:[#allocation10 + $0x244] sm:$0xff]
    %v533 = vld [vmem:[#allocation10 + $0x24c] sm:$0xff]
    %v534 = vld [vmem:[#allocation10 + $0x254] sm:$0xff]
    %v535 = vld [vmem:[#allocation10 + $0x25c] sm:$0xff]
    %v536 = vld [vmem:[#allocation10 + $0x264] sm:$0xff]
    %v537 = vld [vmem:[#allocation10 + $0x26c] sm:$0xf]
    %v538 = vld [vmem:[#allocation10 + $0x270] sm:$0xff]
    %v539 = vld [vmem:[#allocation10 + $0x278] sm:$0xff]
    %v540 = vld [vmem:[#allocation10 + $0x280] sm:$0xff]
    %v541 = vld [vmem:[#allocation10 + $0x288] sm:$0xff]
    %v542 = vld [vmem:[#allocation10 + $0x290] sm:$0xff]
    %v543 = vld [vmem:[#allocation10 + $0x298] sm:$0xff]
    %v544 = vld [vmem:[#allocation10 + $0x2a0] sm:$0xf]
    %v545 = vld [vmem:[#allocation10 + $0x2a4] sm:$0xff]
    %v546 = vld [vmem:[#allocation10 + $0x2ac] sm:$0xff]
    %v547 = vld [vmem:[#allocation10 + $0x2b4] sm:$0xff]
    %v548 = vld [vmem:[#allocation10 + $0x2bc] sm:$0xff]
    %v549 = vld [vmem:[#allocation10 + $0x2c4] sm:$0xff]
    %v550 = vld [vmem:[#allocation10 + $0x2cc] sm:$0xff]
    %v551 = vld [vmem:[#allocation10 + $0x2d4] sm:$0xf]
    %v552 = vld [vmem:[#allocation10 + $0x2d8] sm:$0xff]
    %v553 = vld [vmem:[#allocation10 + $0x2e0] sm:$0xff]
    %v554 = vld [vmem:[#allocation10 + $0x2e8] sm:$0xff]
    %v555 = vld [vmem:[#allocation10 + $0x2f0] sm:$0xff]
    %v556 = vld [vmem:[#allocation10 + $0x2f8] sm:$0xff]
    %v557 = vld [vmem:[#allocation10 + $0x300] sm:$0xff]
    %v558 = vld [vmem:[#allocation10 + $0x308] sm:$0xf]
    %v559 = vld [vmem:[#allocation10 + $0x30c] sm:$0xff]
    %v560 = vld [vmem:[#allocation10 + $0x314] sm:$0xff]
    %v561 = vld [vmem:[#allocation10 + $0x31c] sm:$0xff]
    %v562 = vld [vmem:[#allocation10 + $0x324] sm:$0xff]
    %v563 = vld [vmem:[#allocation10 + $0x32c] sm:$0xff]
    %v564 = vld [vmem:[#allocation10 + $0x334] sm:$0xff]
    %v565 = vld [vmem:[#allocation10 + $0x33c] sm:$0xf]
    %v566 = vld [vmem:[#allocation10 + $0x340] sm:$0xff]
    %v567 = vld [vmem:[#allocation10 + $0x348] sm:$0xff]
    %v568 = vld [vmem:[#allocation10 + $0x350] sm:$0xff]
    %v569 = vld [vmem:[#allocation10 + $0x358] sm:$0xff]
    %v570 = vld [vmem:[#allocation10 + $0x360] sm:$0xff]
    %v571 = vld [vmem:[#allocation10 + $0x368] sm:$0xff]
    %v572 = vld [vmem:[#allocation10 + $0x370] sm:$0xf]
    %v573 = vld [vmem:[#allocation10 + $0x374] sm:$0xff]
    %v574 = vld [vmem:[#allocation10 + $0x37c] sm:$0xff]
    %v575 = vld [vmem:[#allocation10 + $0x384] sm:$0xff]
    %v576 = vld [vmem:[#allocation10 + $0x38c] sm:$0xff]
    %v577 = vld [vmem:[#allocation10 + $0x394] sm:$0xff]
    %v578 = vld [vmem:[#allocation10 + $0x39c] sm:$0xff]
    %v579 = vld [vmem:[#allocation10 + $0x3a4] sm:$0xf]
    %v580 = vld [vmem:[#allocation10 + $0x3a8] sm:$0xff]
    %v581 = vld [vmem:[#allocation10 + $0x3b0] sm:$0xff]
    %v582 = vld [vmem:[#allocation10 + $0x3b8] sm:$0xff]
    %v583 = vld [vmem:[#allocation10 + $0x3c0] sm:$0xff]
    %v584 = vld [vmem:[#allocation10 + $0x3c8] sm:$0xff]
    %v585 = vld [vmem:[#allocation10 + $0x3d0] sm:$0xff]
    %v586 = vld [vmem:[#allocation10 + $0x3d8] sm:$0xf]
    %v587 = vld [vmem:[#allocation10 + $0x3dc] sm:$0xff]
    %v588 = vld [vmem:[#allocation10 + $0x3e4] sm:$0xff]
    %v589 = vld [vmem:[#allocation10 + $0x3ec] sm:$0xff]
    %v590 = vld [vmem:[#allocation10 + $0x3f4] sm:$0xff]
    %v591 = vld [vmem:[#allocation10 + $0x3fc] sm:$0xff]
    %v592 = vld [vmem:[#allocation10 + $0x404] sm:$0xff]
    %v593 = vld [vmem:[#allocation10 + $0x40c] sm:$0xf]
    %v594 = vld [vmem:[#allocation10 + $0x410] sm:$0xff]
    %v595 = vld [vmem:[#allocation10 + $0x418] sm:$0xff]
    %v596 = vld [vmem:[#allocation10 + $0x420] sm:$0xff]
    %v597 = vld [vmem:[#allocation10 + $0x428] sm:$0xff]
    %v598 = vld [vmem:[#allocation10 + $0x430] sm:$0xff]
    %v599 = vld [vmem:[#allocation10 + $0x438] sm:$0xff]
    %v600 = vld [vmem:[#allocation10 + $0x440] sm:$0xf]
    %v601 = vld [vmem:[#allocation10 + $0x444] sm:$0xff]
    %v602 = vld [vmem:[#allocation10 + $0x44c] sm:$0xff]
    %v603 = vld [vmem:[#allocation10 + $0x454] sm:$0xff]
    %v604 = vld [vmem:[#allocation10 + $0x45c] sm:$0xff]
    %v605 = vld [vmem:[#allocation10 + $0x464] sm:$0xff]
    %v606 = vld [vmem:[#allocation10 + $0x46c] sm:$0xff]
    %v607 = vld [vmem:[#allocation10 + $0x474] sm:$0xf]
    %v608 = vld [vmem:[#allocation10 + $0x478] sm:$0xff]
    %v609 = vld [vmem:[#allocation10 + $0x480] sm:$0xff]
    %v610 = vld [vmem:[#allocation10 + $0x488] sm:$0xff]
    %v611 = vld [vmem:[#allocation10 + $0x490] sm:$0xff]
    %v612 = vld [vmem:[#allocation10 + $0x498] sm:$0xff]
    %v613 = vld [vmem:[#allocation10 + $0x4a0] sm:$0xff]
    %v614 = vld [vmem:[#allocation10 + $0x4a8] sm:$0xf]
    %v615 = vld [vmem:[#allocation10 + $0x4ac] sm:$0xff]
    %v616 = vld [vmem:[#allocation10 + $0x4b4] sm:$0xff]
    %v617 = vld [vmem:[#allocation10 + $0x4bc] sm:$0xff]
    %v618 = vld [vmem:[#allocation10 + $0x4c4] sm:$0xff]
    %v619 = vld [vmem:[#allocation10 + $0x4cc] sm:$0xff]
    %v620 = vld [vmem:[#allocation10 + $0x4d4] sm:$0xff]
    %v621 = vld [vmem:[#allocation10 + $0x4dc] sm:$0xf]
    %v622 = vld [vmem:[#allocation10 + $0x4e0] sm:$0xff]
    %v623 = vld [vmem:[#allocation10 + $0x4e8] sm:$0xff]
    %v624 = vld [vmem:[#allocation10 + $0x4f0] sm:$0xff]
    %v625 = vld [vmem:[#allocation10 + $0x4f8] sm:$0xff]
    %v626 = vld [vmem:[#allocation10 + $0x500] sm:$0xff]
    %v627 = vld [vmem:[#allocation10 + $0x508] sm:$0xff]
    %v628 = vld [vmem:[#allocation10 + $0x510] sm:$0xf]
    %v629 = vld [vmem:[#allocation10 + $0x514] sm:$0xff]
    %v630 = vld [vmem:[#allocation10 + $0x51c] sm:$0xff]
    %v631 = vld [vmem:[#allocation10 + $0x524] sm:$0xff]
    %v632 = vld [vmem:[#allocation10 + $0x52c] sm:$0xff]
    %v633 = vld [vmem:[#allocation10 + $0x534] sm:$0xff]
    %v634 = vld [vmem:[#allocation10 + $0x53c] sm:$0xff]
    %v635 = vld [vmem:[#allocation10 + $0x544] sm:$0xf]
    %v636 = vld [vmem:[#allocation10 + $0x548] sm:$0xff]
    %v637 = vld [vmem:[#allocation10 + $0x550] sm:$0xff]
    %v638 = vld [vmem:[#allocation10 + $0x558] sm:$0xff]
    %v639 = vld [vmem:[#allocation10 + $0x560] sm:$0xff]
    %v640 = vld [vmem:[#allocation10 + $0x568] sm:$0xff]
    %v641 = vld [vmem:[#allocation10 + $0x570] sm:$0xff]
    %v642 = vld [vmem:[#allocation10 + $0x578] sm:$0xf]
    %v643 = vld [vmem:[#allocation10 + $0x57c] sm:$0xff]
    %v644 = vld [vmem:[#allocation10 + $0x584] sm:$0xff]
    %v645 = vld [vmem:[#allocation10 + $0x58c] sm:$0xff]
    %v646 = vld [vmem:[#allocation10 + $0x594] sm:$0xff]
    %v647 = vld [vmem:[#allocation10 + $0x59c] sm:$0xff]
    %v648 = vld [vmem:[#allocation10 + $0x5a4] sm:$0xff]
    %v649 = vld [vmem:[#allocation10 + $0x5ac] sm:$0xf]
    %v650 = vld [vmem:[#allocation10 + $0x5b0] sm:$0xff]
    %v651 = vld [vmem:[#allocation10 + $0x5b8] sm:$0xff]
    %v652 = vld [vmem:[#allocation10 + $0x5c0] sm:$0xff]
    %v653 = vld [vmem:[#allocation10 + $0x5c8] sm:$0xff]
    %v654 = vld [vmem:[#allocation10 + $0x5d0] sm:$0xff]
    %v655 = vld [vmem:[#allocation10 + $0x5d8] sm:$0xff]
    %v656 = vld [vmem:[#allocation10 + $0x5e0] sm:$0xf]
    %v657 = vld [vmem:[#allocation10 + $0x5e4] sm:$0xff]
    %v658 = vld [vmem:[#allocation10 + $0x5ec] sm:$0xff]
    %v659 = vld [vmem:[#allocation10 + $0x5f4] sm:$0xff]
    %v660 = vld [vmem:[#allocation10 + $0x5fc] sm:$0xff]
    %v661 = vld [vmem:[#allocation10 + $0x604] sm:$0xff]
    %v662 = vld [vmem:[#allocation10 + $0x60c] sm:$0xff]
    %v663 = vld [vmem:[#allocation10 + $0x614] sm:$0xf]
    %v664 = vld [vmem:[#allocation10 + $0x618] sm:$0xff]
    %v665 = vld [vmem:[#allocation10 + $0x620] sm:$0xff]
    %v666 = vld [vmem:[#allocation10 + $0x628] sm:$0xff]
    %v667 = vld [vmem:[#allocation10 + $0x630] sm:$0xff]
    %v668 = vld [vmem:[#allocation10 + $0x638] sm:$0xff]
    %v669 = vld [vmem:[#allocation10 + $0x640] sm:$0xff]
    %v670 = vld [vmem:[#allocation10 + $0x648] sm:$0xf]
    %v671 = vld [vmem:[#allocation10 + $0x64c] sm:$0xff]
    %v672 = vld [vmem:[#allocation10 + $0x654] sm:$0xff]
    %v673 = vld [vmem:[#allocation10 + $0x65c] sm:$0xff]
    %v674 = vld [vmem:[#allocation10 + $0x664] sm:$0xff]
    %v675 = vld [vmem:[#allocation10 + $0x66c] sm:$0xff]
    %v676 = vld [vmem:[#allocation10 + $0x674] sm:$0xff]
    %v677 = vld [vmem:[#allocation10 + $0x67c] sm:$0xf]
    %v678 = vld [vmem:[#allocation10 + $0x680] sm:$0xff]
    %v679 = vld [vmem:[#allocation10 + $0x688] sm:$0xff]
    %v680 = vld [vmem:[#allocation10 + $0x690] sm:$0xff]
    %v681 = vld [vmem:[#allocation10 + $0x698] sm:$0xff]
    %v682 = vld [vmem:[#allocation10 + $0x6a0] sm:$0xff]
    %v683 = vld [vmem:[#allocation10 + $0x6a8] sm:$0xff]
    %v684 = vld [vmem:[#allocation10 + $0x6b0] sm:$0xf]
    %v685 = vld [vmem:[#allocation10 + $0x6b4] sm:$0xff]
    %v686 = vld [vmem:[#allocation10 + $0x6bc] sm:$0xff]
    %v687 = vld [vmem:[#allocation10 + $0x6c4] sm:$0xff]
    %v688 = vld [vmem:[#allocation10 + $0x6cc] sm:$0xff]
    %v689 = vld [vmem:[#allocation10 + $0x6d4] sm:$0xff]
    %v690 = vld [vmem:[#allocation10 + $0x6dc] sm:$0xff]
    %v691 = vld [vmem:[#allocation10 + $0x6e4] sm:$0xf]
    %v692 = vld [vmem:[#allocation10 + $0x6e8] sm:$0xff]
    %v693 = vld [vmem:[#allocation10 + $0x6f0] sm:$0xff]
    %v694 = vld [vmem:[#allocation10 + $0x6f8] sm:$0xff]
    %v695 = vld [vmem:[#allocation10 + $0x700] sm:$0xff]
    %v696 = vld [vmem:[#allocation10 + $0x708] sm:$0xff]
    %v697 = vld [vmem:[#allocation10 + $0x710] sm:$0xff]
    %v698 = vld [vmem:[#allocation10 + $0x718] sm:$0xf]
    %v699 = vld [vmem:[#allocation10 + $0x71c] sm:$0xff]
    %v700 = vld [vmem:[#allocation10 + $0x724] sm:$0xff]
    %v701 = vld [vmem:[#allocation10 + $0x72c] sm:$0xff]
    %v702 = vld [vmem:[#allocation10 + $0x734] sm:$0xff]
    %v703 = vld [vmem:[#allocation10 + $0x73c] sm:$0xff]
    %v704 = vld [vmem:[#allocation10 + $0x744] sm:$0xff]
    %v705 = vld [vmem:[#allocation10 + $0x74c] sm:$0xf]
    %v706 = vld [vmem:[#allocation10 + $0x750] sm:$0xff]
    %v707 = vld [vmem:[#allocation10 + $0x758] sm:$0xff]
    %v708 = vld [vmem:[#allocation10 + $0x760] sm:$0xff]
    %v709 = vld [vmem:[#allocation10 + $0x768] sm:$0xff]
    %v710 = vld [vmem:[#allocation10 + $0x770] sm:$0xff]
    %v711 = vld [vmem:[#allocation10 + $0x778] sm:$0xff]
    %v712 = vld [vmem:[#allocation10 + $0x780] sm:$0xf]
    %v713 = vld [vmem:[#allocation10 + $0x784] sm:$0xff]
    %v714 = vld [vmem:[#allocation10 + $0x78c] sm:$0xff]
    %v715 = vld [vmem:[#allocation10 + $0x794] sm:$0xff]
    %v716 = vld [vmem:[#allocation10 + $0x79c] sm:$0xff]
    %v717 = vld [vmem:[#allocation10 + $0x7a4] sm:$0xff]
    %v718 = vld [vmem:[#allocation10 + $0x7ac] sm:$0xff]
    %v719 = vld [vmem:[#allocation10 + $0x7b4] sm:$0xf]
    %v720 = vld [vmem:[#allocation10 + $0x7b8] sm:$0xff]
    %v721 = vld [vmem:[#allocation10 + $0x7c0] sm:$0xff]
    %v722 = vld [vmem:[#allocation10 + $0x7c8] sm:$0xff]
    %v723 = vld [vmem:[#allocation10 + $0x7d0] sm:$0xff]
    %v724 = vld [vmem:[#allocation10 + $0x7d8] sm:$0xff]
    %v725 = vld [vmem:[#allocation10 + $0x7e0] sm:$0xff]
    %v726 = vld [vmem:[#allocation10 + $0x7e8] sm:$0xf]
    %v727 = vld [vmem:[#allocation10 + $0x7ec] sm:$0xff]
    %v728 = vld [vmem:[#allocation10 + $0x7f4] sm:$0xff]
    %v729 = vld [vmem:[#allocation10 + $0x7fc] sm:$0xff]
    %v730 = vld [vmem:[#allocation10 + $0x804] sm:$0xff]
    %v731 = vld [vmem:[#allocation10 + $0x80c] sm:$0xff]
    %v732 = vld [vmem:[#allocation10 + $0x814] sm:$0xff]
    %v733 = vld [vmem:[#allocation10 + $0x81c] sm:$0xf]
    %v734 = vld [vmem:[#allocation10 + $0x820] sm:$0xff]
    %v735 = vld [vmem:[#allocation10 + $0x828] sm:$0xff]
    %v736 = vld [vmem:[#allocation10 + $0x830] sm:$0xff]
    %v737 = vld [vmem:[#allocation10 + $0x838] sm:$0xff]
    %v738 = vld [vmem:[#allocation10 + $0x840] sm:$0xff]
    %v739 = vld [vmem:[#allocation10 + $0x848] sm:$0xff]
    %v740 = vld [vmem:[#allocation10 + $0x850] sm:$0xf]
    %v741 = vld [vmem:[#allocation10 + $0x854] sm:$0xff]
    %v742 = vld [vmem:[#allocation10 + $0x85c] sm:$0xff]
    %v743 = vld [vmem:[#allocation10 + $0x864] sm:$0xff]
    %v744 = vld [vmem:[#allocation10 + $0x86c] sm:$0xff]
    %v745 = vld [vmem:[#allocation10 + $0x874] sm:$0xff]
    %v746 = vld [vmem:[#allocation10 + $0x87c] sm:$0xff]
    %v747 = vld [vmem:[#allocation10 + $0x884] sm:$0xf]
    %v748 = vld [vmem:[#allocation10 + $0x888] sm:$0xff]
    %v749 = vld [vmem:[#allocation10 + $0x890] sm:$0xff]
    %v750 = vld [vmem:[#allocation10 + $0x898] sm:$0xff]
    %v751 = vld [vmem:[#allocation10 + $0x8a0] sm:$0xff]
    %v752 = vld [vmem:[#allocation10 + $0x8a8] sm:$0xff]
    %v753 = vld [vmem:[#allocation10 + $0x8b0] sm:$0xff]
    %v754 = vld [vmem:[#allocation10 + $0x8b8] sm:$0xf]
    %v755 = vld [vmem:[#allocation10 + $0x8bc] sm:$0xff]
    %v756 = vld [vmem:[#allocation10 + $0x8c4] sm:$0xff]
    %v757 = vld [vmem:[#allocation10 + $0x8cc] sm:$0xff]
    %v758 = vld [vmem:[#allocation10 + $0x8d4] sm:$0xff]
    %v759 = vld [vmem:[#allocation10 + $0x8dc] sm:$0xff]
    %v760 = vld [vmem:[#allocation10 + $0x8e4] sm:$0xff]
    %v761 = vld [vmem:[#allocation10 + $0x8ec] sm:$0xf]
    %v762 = vld [vmem:[#allocation10 + $0x8f0] sm:$0xff]
    %v763 = vld [vmem:[#allocation10 + $0x8f8] sm:$0xff]
    %v764 = vld [vmem:[#allocation10 + $0x900] sm:$0xff]
    %v765 = vld [vmem:[#allocation10 + $0x908] sm:$0xff]
    %v766 = vld [vmem:[#allocation10 + $0x910] sm:$0xff]
    %v767 = vld [vmem:[#allocation10 + $0x918] sm:$0xff]
    %v768 = vld [vmem:[#allocation10 + $0x920] sm:$0xf]
    %v769 = vld [vmem:[#allocation10 + $0x924] sm:$0xff]
    %v770 = vld [vmem:[#allocation10 + $0x92c] sm:$0xff]
    %v771 = vld [vmem:[#allocation10 + $0x934] sm:$0xff]
    %v772 = vld [vmem:[#allocation10 + $0x93c] sm:$0xff]
    %v773 = vld [vmem:[#allocation10 + $0x944] sm:$0xff]
    %v774 = vld [vmem:[#allocation10 + $0x94c] sm:$0xff]
    %v775 = vld [vmem:[#allocation10 + $0x954] sm:$0xf]
    %v776 = vld [vmem:[#allocation10 + $0x958] sm:$0xff]
    %v777 = vld [vmem:[#allocation10 + $0x960] sm:$0xff]
    %v778 = vld [vmem:[#allocation10 + $0x968] sm:$0xff]
    %v779 = vld [vmem:[#allocation10 + $0x970] sm:$0xff]
    %v780 = vld [vmem:[#allocation10 + $0x978] sm:$0xff]
    %v781 = vld [vmem:[#allocation10 + $0x980] sm:$0xff]
    %v782 = vld [vmem:[#allocation10 + $0x988] sm:$0xf]
    %v783 = vld [vmem:[#allocation10 + $0x98c] sm:$0xff]
    %v784 = vld [vmem:[#allocation10 + $0x994] sm:$0xff]
    %v785 = vld [vmem:[#allocation10 + $0x99c] sm:$0xff]
    %v786 = vld [vmem:[#allocation10 + $0x9a4] sm:$0xff]
    %v787 = vld [vmem:[#allocation10 + $0x9ac] sm:$0xff]
    %v788 = vld [vmem:[#allocation10 + $0x9b4] sm:$0xff]
    %v789 = vld [vmem:[#allocation10 + $0x9bc] sm:$0xf]
    %v790 = vld [vmem:[#allocation10 + $0x9c0] sm:$0xff]
    %v791 = vld [vmem:[#allocation10 + $0x9c8] sm:$0xff]
    %v792 = vld [vmem:[#allocation10 + $0x9d0] sm:$0xff]
    %v793 = vld [vmem:[#allocation10 + $0x9d8] sm:$0xff]
    %v794 = vld [vmem:[#allocation10 + $0x9e0] sm:$0xff]
    %v795 = vld [vmem:[#allocation10 + $0x9e8] sm:$0xff]
    %v796 = vld [vmem:[#allocation10 + $0x9f0] sm:$0xf]
    %v797 = vld [vmem:[#allocation10 + $0x9f4] sm:$0xff]
    %v798 = vld [vmem:[#allocation10 + $0x9fc] sm:$0xff]
    %v799 = vld [vmem:[#allocation10 + $0xa04] sm:$0xff]
    %v800 = vld [vmem:[#allocation10 + $0xa0c] sm:$0xff]
    %v801 = vld [vmem:[#allocation10 + $0xa14] sm:$0xff]
    %v802 = vld [vmem:[#allocation10 + $0xa1c] sm:$0xff]
    %v803 = vld [vmem:[#allocation10 + $0xa24] sm:$0xf]
    %v804 = vld [vmem:[#allocation10 + $0xa28] sm:$0xff]
    %v805 = vld [vmem:[#allocation10 + $0xa30] sm:$0xff]
    %v806 = vld [vmem:[#allocation10 + $0xa38] sm:$0xff]
    %v807 = vld [vmem:[#allocation10 + $0xa40] sm:$0xff]
    %v808 = vld [vmem:[#allocation10 + $0xa48] sm:$0xff]
    %v809 = vld [vmem:[#allocation10 + $0xa50] sm:$0xff]
    %v810 = vld [vmem:[#allocation10 + $0xa58] sm:$0xf]
    %v811 = vld [vmem:[#allocation10 + $0xa5c] sm:$0xff]
    %v812 = vld [vmem:[#allocation10 + $0xa64] sm:$0xff]
    %v813 = vld [vmem:[#allocation10 + $0xa6c] sm:$0xff]
    %v814 = vld [vmem:[#allocation10 + $0xa74] sm:$0xff]
    %v815 = vld [vmem:[#allocation10 + $0xa7c] sm:$0xff]
    %v816 = vld [vmem:[#allocation10 + $0xa84] sm:$0xff]
    %v817 = vld [vmem:[#allocation10 + $0xa8c] sm:$0xf]
    %v818 = vld [vmem:[#allocation10 + $0xa90] sm:$0xff]
    %v819 = vld [vmem:[#allocation10 + $0xa98] sm:$0xff]
    %v820 = vld [vmem:[#allocation10 + $0xaa0] sm:$0xff]
    %v821 = vld [vmem:[#allocation10 + $0xaa8] sm:$0xff]
    %v822 = vld [vmem:[#allocation10 + $0xab0] sm:$0xff]
    %v823 = vld [vmem:[#allocation10 + $0xab8] sm:$0xff]
    %v824 = vld [vmem:[#allocation10 + $0xac0] sm:$0xf]
    %v825 = vld [vmem:[#allocation10 + $0xac4] sm:$0xff]
    %v826 = vld [vmem:[#allocation10 + $0xacc] sm:$0xff]
    %v827 = vld [vmem:[#allocation10 + $0xad4] sm:$0xff]
    %v828 = vld [vmem:[#allocation10 + $0xadc] sm:$0xff]
    %v829 = vld [vmem:[#allocation10 + $0xae4] sm:$0xff]
    %v830 = vld [vmem:[#allocation10 + $0xaec] sm:$0xff]
    %v831 = vld [vmem:[#allocation10 + $0xaf4] sm:$0xf]
    %v832 = vld [vmem:[#allocation10 + $0xaf8] sm:$0xff]
    %v833 = vld [vmem:[#allocation10 + $0xb00] sm:$0xff]
    %v834 = vld [vmem:[#allocation10 + $0xb08] sm:$0xff]
    %v835 = vld [vmem:[#allocation10 + $0xb10] sm:$0xff]
    %v836 = vld [vmem:[#allocation10 + $0xb18] sm:$0xff]
    %v837 = vld [vmem:[#allocation10 + $0xb20] sm:$0xff]
    %v838 = vld [vmem:[#allocation10 + $0xb28] sm:$0xf]
    %v839 = vld [vmem:[#allocation10 + $0xb2c] sm:$0xff]
    %v840 = vld [vmem:[#allocation10 + $0xb34] sm:$0xff]
    %v841 = vld [vmem:[#allocation10 + $0xb3c] sm:$0xff]
    %v842 = vld [vmem:[#allocation10 + $0xb44] sm:$0xff]
    %v843 = vld [vmem:[#allocation10 + $0xb4c] sm:$0xff]
    %v844 = vld [vmem:[#allocation10 + $0xb54] sm:$0xff]
    %v845 = vld [vmem:[#allocation10 + $0xb5c] sm:$0xf]
    %v846 = vld [vmem:[#allocation10 + $0xb60] sm:$0xff]
    %v847 = vld [vmem:[#allocation10 + $0xb68] sm:$0xff]
    %v848 = vld [vmem:[#allocation10 + $0xb70] sm:$0xff]
    %v849 = vld [vmem:[#allocation10 + $0xb78] sm:$0xff]
    %v850 = vld [vmem:[#allocation10 + $0xb80] sm:$0xff]
    %v851 = vld [vmem:[#allocation10 + $0xb88] sm:$0xff]
    %v852 = vld [vmem:[#allocation10 + $0xb90] sm:$0xf]
    %v853 = vld [vmem:[#allocation10 + $0xb94] sm:$0xff]
    %v854 = vld [vmem:[#allocation10 + $0xb9c] sm:$0xff]
    %v855 = vld [vmem:[#allocation10 + $0xba4] sm:$0xff]
    %v856 = vld [vmem:[#allocation10 + $0xbac] sm:$0xff]
    %v857 = vld [vmem:[#allocation10 + $0xbb4] sm:$0xff]
    %v858 = vld [vmem:[#allocation10 + $0xbbc] sm:$0xff]
    %v859 = vld [vmem:[#allocation10 + $0xbc4] sm:$0xf]
    %v860 = vld [vmem:[#allocation10 + $0xbc8] sm:$0xff]
    %v861 = vld [vmem:[#allocation10 + $0xbd0] sm:$0xff]
    %v862 = vld [vmem:[#allocation10 + $0xbd8] sm:$0xff]
    %v863 = vld [vmem:[#allocation10 + $0xbe0] sm:$0xff]
    %v864 = vld [vmem:[#allocation10 + $0xbe8] sm:$0xff]
    %v865 = vld [vmem:[#allocation10 + $0xbf0] sm:$0xff]
    %v866 = vld [vmem:[#allocation10 + $0xbf8] sm:$0xf]
    %v867 = vld [vmem:[#allocation10 + $0xbfc] sm:$0xff]
    %v868 = vld [vmem:[#allocation10 + $0xc04] sm:$0xff]
    %v869 = vld [vmem:[#allocation10 + $0xc0c] sm:$0xff]
    %v870 = vld [vmem:[#allocation10 + $0xc14] sm:$0xff]
    %v871 = vld [vmem:[#allocation10 + $0xc1c] sm:$0xff]
    %v872 = vld [vmem:[#allocation10 + $0xc24] sm:$0xff]
    %v873 = vld [vmem:[#allocation10 + $0xc2c] sm:$0xf]
    %v874 = vld [vmem:[#allocation10 + $0xc30] sm:$0xff]
    %v875 = vld [vmem:[#allocation10 + $0xc38] sm:$0xff]
    %v876 = vld [vmem:[#allocation10 + $0xc40] sm:$0xff]
    %v877 = vld [vmem:[#allocation10 + $0xc48] sm:$0xff]
    %v878 = vld [vmem:[#allocation10 + $0xc50] sm:$0xff]
    %v879 = vld [vmem:[#allocation10 + $0xc58] sm:$0xff]
    %v880 = vld [vmem:[#allocation10 + $0xc60] sm:$0xf]
    %v881 = vld [vmem:[#allocation10 + $0xc64] sm:$0xff]
    %v882 = vld [vmem:[#allocation10 + $0xc6c] sm:$0xff]
    %v883 = vld [vmem:[#allocation10 + $0xc74] sm:$0xff]
    %v884 = vld [vmem:[#allocation10 + $0xc7c] sm:$0xff]
    %v885 = vld [vmem:[#allocation10 + $0xc84] sm:$0xff]
    %v886 = vld [vmem:[#allocation10 + $0xc8c] sm:$0xff]
    %v887 = vld [vmem:[#allocation10 + $0xc94] sm:$0xf]
    %v888 = vld [vmem:[#allocation10 + $0xc98] sm:$0xff]
    %v889 = vld [vmem:[#allocation10 + $0xca0] sm:$0xff]
    %v890 = vld [vmem:[#allocation10 + $0xca8] sm:$0xff]
    %v891 = vld [vmem:[#allocation10 + $0xcb0] sm:$0xff]
    %v892 = vld [vmem:[#allocation10 + $0xcb8] sm:$0xff]
    %v893 = vld [vmem:[#allocation10 + $0xcc0] sm:$0xff]
    %v894 = vld [vmem:[#allocation10 + $0xcc8] sm:$0xf]
    %v895 = vld [vmem:[#allocation10 + $0xccc] sm:$0xff]
    %v896 = vld [vmem:[#allocation10 + $0xcd4] sm:$0xff]
    %v897 = vld [vmem:[#allocation10 + $0xcdc] sm:$0xff]
    %v898 = vld [vmem:[#allocation10 + $0xce4] sm:$0xff]
    %v899 = vld [vmem:[#allocation10 + $0xcec] sm:$0xff]
    %v900 = vld [vmem:[#allocation10 + $0xcf4] sm:$0xff]
    %v901 = vld [vmem:[#allocation10 + $0xcfc] sm:$0xf]
    %v902 = vpack.c.bf16 %v450, %v450
    %v903 = vpack.c.bf16 %v451, %v451
    %v904 = vpack.c.bf16 %v452, %v452
    %v905 = vpack.c.bf16 %v453, %v453
    %v906 = vld [vmem:[#allocation11] sm:$0xff]
    %v907 = vld [vmem:[#allocation11 + $0x8] sm:$0x1f]
    %v910 = vlaneseq
    %v911 = vshrl.u32 %v910, 7
    %v912 = vsub.s32 0, %v911
    %v913 = vrot.slane %v906, %v912
    %v914 = vlaneseq
    %v915 = vshrl.u32 %v914, 7
    %v916 = vsub.s32 1, %v915
    %v917 = vrot.slane %v906, %v916
    %v918 = vlaneseq
    %v919 = vshrl.u32 %v918, 7
    %v920 = vsub.s32 2, %v919
    %v921 = vrot.slane %v906, %v920
    %v922 = vlaneseq
    %v923 = vshrl.u32 %v922, 7
    %v924 = vsub.s32 3, %v923
    %v925 = vrot.slane %v906, %v924
    %v926 = vlaneseq
    %v927 = vshrl.u32 %v926, 7
    %v928 = vsub.s32 4, %v927
    %v929 = vrot.slane %v906, %v928
    %v930 = vlaneseq
    %v931 = vshrl.u32 %v930, 7
    %v932 = vsub.s32 5, %v931
    %v933 = vrot.slane %v906, %v932
    %v934 = vlaneseq
    %v935 = vshrl.u32 %v934, 7
    %v936 = vsub.s32 6, %v935
    %v937 = vrot.slane %v906, %v936
    %v938 = vlaneseq
    %v939 = vshrl.u32 %v938, 7
    %v940 = vsub.s32 7, %v939
    %v941 = vrot.slane %v906, %v940
    %v942 = vlaneseq
    %v943 = vshrl.u32 %v942, 7
    %v944 = vsub.s32 0, %v943
    %v945 = vrot.slane %v907, %v944
    %v946 = vlaneseq
    %v947 = vshrl.u32 %v946, 7
    %v948 = vsub.s32 1, %v947
    %v949 = vrot.slane %v907, %v948
    %v950 = vlaneseq
    %v951 = vshrl.u32 %v950, 7
    %v952 = vsub.s32 2, %v951
    %v953 = vrot.slane %v907, %v952
    %v954 = vlaneseq
    %v955 = vshrl.u32 %v954, 7
    %v956 = vsub.s32 3, %v955
    %v957 = vrot.slane %v907, %v956
    %v958 = vlaneseq
    %v959 = vshrl.u32 %v958, 7
    %v960 = vsub.s32 4, %v959
    %v961 = vrot.slane %v907, %v960
    %v1423 = vunpack.c.l.b16 %v454
    %v1424 = vunpack.c.h.b16 %v454
    %v1425 = vunpack.c.l.b16 %v455
    %v1426 = vunpack.c.h.b16 %v455
    %v1427 = vunpack.c.l.b16 %v456
    %v1428 = vunpack.c.h.b16 %v456
    %v1429 = vunpack.c.l.b16 %v457
    %v1430 = vunpack.c.h.b16 %v457
    %v1431 = vunpack.c.l.b16 %v458
    %v1432 = vunpack.c.h.b16 %v458
    %v1433 = vunpack.c.l.b16 %v459
    %v1434 = vunpack.c.h.b16 %v459
    %v1435 = vunpack.c.l.b16 %v460
    %v1436 = vunpack.c.l.b16 %v461
    %v1437 = vunpack.c.h.b16 %v461
    %v1438 = vunpack.c.l.b16 %v462
    %v1439 = vunpack.c.h.b16 %v462
    %v1440 = vunpack.c.l.b16 %v463
    %v1441 = vunpack.c.h.b16 %v463
    %v1442 = vunpack.c.l.b16 %v464
    %v1443 = vunpack.c.h.b16 %v464
    %v1444 = vunpack.c.l.b16 %v465
    %v1445 = vunpack.c.h.b16 %v465
    %v1446 = vunpack.c.l.b16 %v466
    %v1447 = vunpack.c.h.b16 %v466
    %v1448 = vunpack.c.l.b16 %v467
    %v1449 = vunpack.c.l.b16 %v468
    %v1450 = vunpack.c.h.b16 %v468
    %v1451 = vunpack.c.l.b16 %v469
    %v1452 = vunpack.c.h.b16 %v469
    %v1453 = vunpack.c.l.b16 %v470
    %v1454 = vunpack.c.h.b16 %v470
    %v1455 = vunpack.c.l.b16 %v471
    %v1456 = vunpack.c.h.b16 %v471
    %v1457 = vunpack.c.l.b16 %v472
    %v1458 = vunpack.c.h.b16 %v472
    %v1459 = vunpack.c.l.b16 %v473
    %v1460 = vunpack.c.h.b16 %v473
    %v1461 = vunpack.c.l.b16 %v474
    %v1462 = vunpack.c.l.b16 %v475
    %v1463 = vunpack.c.h.b16 %v475
    %v1464 = vunpack.c.l.b16 %v476
    %v1465 = vunpack.c.h.b16 %v476
    %v1466 = vunpack.c.l.b16 %v477
    %v1467 = vunpack.c.h.b16 %v477
    %v1468 = vunpack.c.l.b16 %v478
    %v1469 = vunpack.c.h.b16 %v478
    %v1470 = vunpack.c.l.b16 %v479
    %v1471 = vunpack.c.h.b16 %v479
    %v1472 = vunpack.c.l.b16 %v480
    %v1473 = vunpack.c.h.b16 %v480
    %v1474 = vunpack.c.l.b16 %v481
    %v1475 = vunpack.c.l.b16 %v482
    %v1476 = vunpack.c.h.b16 %v482
    %v1477 = vunpack.c.l.b16 %v483
    %v1478 = vunpack.c.h.b16 %v483
    %v1479 = vunpack.c.l.b16 %v484
    %v1480 = vunpack.c.h.b16 %v484
    %v1481 = vunpack.c.l.b16 %v485
    %v1482 = vunpack.c.h.b16 %v485
    %v1483 = vunpack.c.l.b16 %v486
    %v1484 = vunpack.c.h.b16 %v486
    %v1485 = vunpack.c.l.b16 %v487
    %v1486 = vunpack.c.h.b16 %v487
    %v1487 = vunpack.c.l.b16 %v488
    %v1488 = vunpack.c.l.b16 %v489
    %v1489 = vunpack.c.h.b16 %v489
    %v1490 = vunpack.c.l.b16 %v490
    %v1491 = vunpack.c.h.b16 %v490
    %v1492 = vunpack.c.l.b16 %v491
    %v1493 = vunpack.c.h.b16 %v491
    %v1494 = vunpack.c.l.b16 %v492
    %v1495 = vunpack.c.h.b16 %v492
    %v1496 = vunpack.c.l.b16 %v493
    %v1497 = vunpack.c.h.b16 %v493
    %v1498 = vunpack.c.l.b16 %v494
    %v1499 = vunpack.c.h.b16 %v494
    %v1500 = vunpack.c.l.b16 %v495
    %v1501 = vunpack.c.l.b16 %v496
    %v1502 = vunpack.c.h.b16 %v496
    %v1503 = vunpack.c.l.b16 %v497
    %v1504 = vunpack.c.h.b16 %v497
    %v1505 = vunpack.c.l.b16 %v498
    %v1506 = vunpack.c.h.b16 %v498
    %v1507 = vunpack.c.l.b16 %v499
    %v1508 = vunpack.c.h.b16 %v499
    %v1509 = vunpack.c.l.b16 %v500
    %v1510 = vunpack.c.h.b16 %v500
    %v1511 = vunpack.c.l.b16 %v501
    %v1512 = vunpack.c.h.b16 %v501
    %v1513 = vunpack.c.l.b16 %v502
    %v1514 = vunpack.c.l.b16 %v503
    %v1515 = vunpack.c.h.b16 %v503
    %v1516 = vunpack.c.l.b16 %v504
    %v1517 = vunpack.c.h.b16 %v504
    %v1518 = vunpack.c.l.b16 %v505
    %v1519 = vunpack.c.h.b16 %v505
    %v1520 = vunpack.c.l.b16 %v506
    %v1521 = vunpack.c.h.b16 %v506
    %v1522 = vunpack.c.l.b16 %v507
    %v1523 = vunpack.c.h.b16 %v507
    %v1524 = vunpack.c.l.b16 %v508
    %v1525 = vunpack.c.h.b16 %v508
    %v1526 = vunpack.c.l.b16 %v509
    %v1527 = vunpack.c.l.b16 %v510
    %v1528 = vunpack.c.h.b16 %v510
    %v1529 = vunpack.c.l.b16 %v511
    %v1530 = vunpack.c.h.b16 %v511
    %v1531 = vunpack.c.l.b16 %v512
    %v1532 = vunpack.c.h.b16 %v512
    %v1533 = vunpack.c.l.b16 %v513
    %v1534 = vunpack.c.h.b16 %v513
    %v1535 = vunpack.c.l.b16 %v514
    %v1536 = vunpack.c.h.b16 %v514
    %v1537 = vunpack.c.l.b16 %v515
    %v1538 = vunpack.c.h.b16 %v515
    %v1539 = vunpack.c.l.b16 %v516
    %v1540 = vunpack.c.l.b16 %v517
    %v1541 = vunpack.c.h.b16 %v517
    %v1542 = vunpack.c.l.b16 %v518
    %v1543 = vunpack.c.h.b16 %v518
    %v1544 = vunpack.c.l.b16 %v519
    %v1545 = vunpack.c.h.b16 %v519
    %v1546 = vunpack.c.l.b16 %v520
    %v1547 = vunpack.c.h.b16 %v520
    %v1548 = vunpack.c.l.b16 %v521
    %v1549 = vunpack.c.h.b16 %v521
    %v1550 = vunpack.c.l.b16 %v522
    %v1551 = vunpack.c.h.b16 %v522
    %v1552 = vunpack.c.l.b16 %v523
    %v1553 = vunpack.c.l.b16 %v524
    %v1554 = vunpack.c.h.b16 %v524
    %v1555 = vunpack.c.l.b16 %v525
    %v1556 = vunpack.c.h.b16 %v525
    %v1557 = vunpack.c.l.b16 %v526
    %v1558 = vunpack.c.h.b16 %v526
    %v1559 = vunpack.c.l.b16 %v527
    %v1560 = vunpack.c.h.b16 %v527
    %v1561 = vunpack.c.l.b16 %v528
    %v1562 = vunpack.c.h.b16 %v528
    %v1563 = vunpack.c.l.b16 %v529
    %v1564 = vunpack.c.h.b16 %v529
    %v1565 = vunpack.c.l.b16 %v530
    %v1566 = vunpack.c.l.b16 %v531
    %v1567 = vunpack.c.h.b16 %v531
    %v1568 = vunpack.c.l.b16 %v532
    %v1569 = vunpack.c.h.b16 %v532
    %v1570 = vunpack.c.l.b16 %v533
    %v1571 = vunpack.c.h.b16 %v533
    %v1572 = vunpack.c.l.b16 %v534
    %v1573 = vunpack.c.h.b16 %v534
    %v1574 = vunpack.c.l.b16 %v535
    %v1575 = vunpack.c.h.b16 %v535
    %v1576 = vunpack.c.l.b16 %v536
    %v1577 = vunpack.c.h.b16 %v536
    %v1578 = vunpack.c.l.b16 %v537
    %v1579 = vunpack.c.l.b16 %v538
    %v1580 = vunpack.c.h.b16 %v538
    %v1581 = vunpack.c.l.b16 %v539
    %v1582 = vunpack.c.h.b16 %v539
    %v1583 = vunpack.c.l.b16 %v540
    %v1584 = vunpack.c.h.b16 %v540
    %v1585 = vunpack.c.l.b16 %v541
    %v1586 = vunpack.c.h.b16 %v541
    %v1587 = vunpack.c.l.b16 %v542
    %v1588 = vunpack.c.h.b16 %v542
    %v1589 = vunpack.c.l.b16 %v543
    %v1590 = vunpack.c.h.b16 %v543
    %v1591 = vunpack.c.l.b16 %v544
    %v1592 = vunpack.c.l.b16 %v545
    %v1593 = vunpack.c.h.b16 %v545
    %v1594 = vunpack.c.l.b16 %v546
    %v1595 = vunpack.c.h.b16 %v546
    %v1596 = vunpack.c.l.b16 %v547
    %v1597 = vunpack.c.h.b16 %v547
    %v1598 = vunpack.c.l.b16 %v548
    %v1599 = vunpack.c.h.b16 %v548
    %v1600 = vunpack.c.l.b16 %v549
    %v1601 = vunpack.c.h.b16 %v549
    %v1602 = vunpack.c.l.b16 %v550
    %v1603 = vunpack.c.h.b16 %v550
    %v1604 = vunpack.c.l.b16 %v551
    %v1605 = vunpack.c.l.b16 %v552
    %v1606 = vunpack.c.h.b16 %v552
    %v1607 = vunpack.c.l.b16 %v553
    %v1608 = vunpack.c.h.b16 %v553
    %v1609 = vunpack.c.l.b16 %v554
    %v1610 = vunpack.c.h.b16 %v554
    %v1611 = vunpack.c.l.b16 %v555
    %v1612 = vunpack.c.h.b16 %v555
    %v1613 = vunpack.c.l.b16 %v556
    %v1614 = vunpack.c.h.b16 %v556
    %v1615 = vunpack.c.l.b16 %v557
    %v1616 = vunpack.c.h.b16 %v557
    %v1617 = vunpack.c.l.b16 %v558
    %v1618 = vunpack.c.l.b16 %v559
    %v1619 = vunpack.c.h.b16 %v559
    %v1620 = vunpack.c.l.b16 %v560
    %v1621 = vunpack.c.h.b16 %v560
    %v1622 = vunpack.c.l.b16 %v561
    %v1623 = vunpack.c.h.b16 %v561
    %v1624 = vunpack.c.l.b16 %v562
    %v1625 = vunpack.c.h.b16 %v562
    %v1626 = vunpack.c.l.b16 %v563
    %v1627 = vunpack.c.h.b16 %v563
    %v1628 = vunpack.c.l.b16 %v564
    %v1629 = vunpack.c.h.b16 %v564
    %v1630 = vunpack.c.l.b16 %v565
    %v1631 = vunpack.c.l.b16 %v566
    %v1632 = vunpack.c.h.b16 %v566
    %v1633 = vunpack.c.l.b16 %v567
    %v1634 = vunpack.c.h.b16 %v567
    %v1635 = vunpack.c.l.b16 %v568
    %v1636 = vunpack.c.h.b16 %v568
    %v1637 = vunpack.c.l.b16 %v569
    %v1638 = vunpack.c.h.b16 %v569
    %v1639 = vunpack.c.l.b16 %v570
    %v1640 = vunpack.c.h.b16 %v570
    %v1641 = vunpack.c.l.b16 %v571
    %v1642 = vunpack.c.h.b16 %v571
    %v1643 = vunpack.c.l.b16 %v572
    %v1644 = vunpack.c.l.b16 %v573
    %v1645 = vunpack.c.h.b16 %v573
    %v1646 = vunpack.c.l.b16 %v574
    %v1647 = vunpack.c.h.b16 %v574
    %v1648 = vunpack.c.l.b16 %v575
    %v1649 = vunpack.c.h.b16 %v575
    %v1650 = vunpack.c.l.b16 %v576
    %v1651 = vunpack.c.h.b16 %v576
    %v1652 = vunpack.c.l.b16 %v577
    %v1653 = vunpack.c.h.b16 %v577
    %v1654 = vunpack.c.l.b16 %v578
    %v1655 = vunpack.c.h.b16 %v578
    %v1656 = vunpack.c.l.b16 %v579
    %v1657 = vunpack.c.l.b16 %v580
    %v1658 = vunpack.c.h.b16 %v580
    %v1659 = vunpack.c.l.b16 %v581
    %v1660 = vunpack.c.h.b16 %v581
    %v1661 = vunpack.c.l.b16 %v582
    %v1662 = vunpack.c.h.b16 %v582
    %v1663 = vunpack.c.l.b16 %v583
    %v1664 = vunpack.c.h.b16 %v583
    %v1665 = vunpack.c.l.b16 %v584
    %v1666 = vunpack.c.h.b16 %v584
    %v1667 = vunpack.c.l.b16 %v585
    %v1668 = vunpack.c.h.b16 %v585
    %v1669 = vunpack.c.l.b16 %v586
    %v1670 = vunpack.c.l.b16 %v587
    %v1671 = vunpack.c.h.b16 %v587
    %v1672 = vunpack.c.l.b16 %v588
    %v1673 = vunpack.c.h.b16 %v588
    %v1674 = vunpack.c.l.b16 %v589
    %v1675 = vunpack.c.h.b16 %v589
    %v1676 = vunpack.c.l.b16 %v590
    %v1677 = vunpack.c.h.b16 %v590
    %v1678 = vunpack.c.l.b16 %v591
    %v1679 = vunpack.c.h.b16 %v591
    %v1680 = vunpack.c.l.b16 %v592
    %v1681 = vunpack.c.h.b16 %v592
    %v1682 = vunpack.c.l.b16 %v593
    %v1683 = vunpack.c.l.b16 %v594
    %v1684 = vunpack.c.h.b16 %v594
    %v1685 = vunpack.c.l.b16 %v595
    %v1686 = vunpack.c.h.b16 %v595
    %v1687 = vunpack.c.l.b16 %v596
    %v1688 = vunpack.c.h.b16 %v596
    %v1689 = vunpack.c.l.b16 %v597
    %v1690 = vunpack.c.h.b16 %v597
    %v1691 = vunpack.c.l.b16 %v598
    %v1692 = vunpack.c.h.b16 %v598
    %v1693 = vunpack.c.l.b16 %v599
    %v1694 = vunpack.c.h.b16 %v599
    %v1695 = vunpack.c.l.b16 %v600
    %v1696 = vunpack.c.l.b16 %v601
    %v1697 = vunpack.c.h.b16 %v601
    %v1698 = vunpack.c.l.b16 %v602
    %v1699 = vunpack.c.h.b16 %v602
    %v1700 = vunpack.c.l.b16 %v603
    %v1701 = vunpack.c.h.b16 %v603
    %v1702 = vunpack.c.l.b16 %v604
    %v1703 = vunpack.c.h.b16 %v604
    %v1704 = vunpack.c.l.b16 %v605
    %v1705 = vunpack.c.h.b16 %v605
    %v1706 = vunpack.c.l.b16 %v606
    %v1707 = vunpack.c.h.b16 %v606
    %v1708 = vunpack.c.l.b16 %v607
    %v1709 = vunpack.c.l.b16 %v608
    %v1710 = vunpack.c.h.b16 %v608
    %v1711 = vunpack.c.l.b16 %v609
    %v1712 = vunpack.c.h.b16 %v609
    %v1713 = vunpack.c.l.b16 %v610
    %v1714 = vunpack.c.h.b16 %v610
    %v1715 = vunpack.c.l.b16 %v611
    %v1716 = vunpack.c.h.b16 %v611
    %v1717 = vunpack.c.l.b16 %v612
    %v1718 = vunpack.c.h.b16 %v612
    %v1719 = vunpack.c.l.b16 %v613
    %v1720 = vunpack.c.h.b16 %v613
    %v1721 = vunpack.c.l.b16 %v614
    %v1722 = vunpack.c.l.b16 %v615
    %v1723 = vunpack.c.h.b16 %v615
    %v1724 = vunpack.c.l.b16 %v616
    %v1725 = vunpack.c.h.b16 %v616
    %v1726 = vunpack.c.l.b16 %v617
    %v1727 = vunpack.c.h.b16 %v617
    %v1728 = vunpack.c.l.b16 %v618
    %v1729 = vunpack.c.h.b16 %v618
    %v1730 = vunpack.c.l.b16 %v619
    %v1731 = vunpack.c.h.b16 %v619
    %v1732 = vunpack.c.l.b16 %v620
    %v1733 = vunpack.c.h.b16 %v620
    %v1734 = vunpack.c.l.b16 %v621
    %v1735 = vunpack.c.l.b16 %v622
    %v1736 = vunpack.c.h.b16 %v622
    %v1737 = vunpack.c.l.b16 %v623
    %v1738 = vunpack.c.h.b16 %v623
    %v1739 = vunpack.c.l.b16 %v624
    %v1740 = vunpack.c.h.b16 %v624
    %v1741 = vunpack.c.l.b16 %v625
    %v1742 = vunpack.c.h.b16 %v625
    %v1743 = vunpack.c.l.b16 %v626
    %v1744 = vunpack.c.h.b16 %v626
    %v1745 = vunpack.c.l.b16 %v627
    %v1746 = vunpack.c.h.b16 %v627
    %v1747 = vunpack.c.l.b16 %v628
    %v1748 = vunpack.c.l.b16 %v629
    %v1749 = vunpack.c.h.b16 %v629
    %v1750 = vunpack.c.l.b16 %v630
    %v1751 = vunpack.c.h.b16 %v630
    %v1752 = vunpack.c.l.b16 %v631
    %v1753 = vunpack.c.h.b16 %v631
    %v1754 = vunpack.c.l.b16 %v632
    %v1755 = vunpack.c.h.b16 %v632
    %v1756 = vunpack.c.l.b16 %v633
    %v1757 = vunpack.c.h.b16 %v633
    %v1758 = vunpack.c.l.b16 %v634
    %v1759 = vunpack.c.h.b16 %v634
    %v1760 = vunpack.c.l.b16 %v635
    %v1761 = vunpack.c.l.b16 %v636
    %v1762 = vunpack.c.h.b16 %v636
    %v1763 = vunpack.c.l.b16 %v637
    %v1764 = vunpack.c.h.b16 %v637
    %v1765 = vunpack.c.l.b16 %v638
    %v1766 = vunpack.c.h.b16 %v638
    %v1767 = vunpack.c.l.b16 %v639
    %v1768 = vunpack.c.h.b16 %v639
    %v1769 = vunpack.c.l.b16 %v640
    %v1770 = vunpack.c.h.b16 %v640
    %v1771 = vunpack.c.l.b16 %v641
    %v1772 = vunpack.c.h.b16 %v641
    %v1773 = vunpack.c.l.b16 %v642
    %v1774 = vunpack.c.l.b16 %v643
    %v1775 = vunpack.c.h.b16 %v643
    %v1776 = vunpack.c.l.b16 %v644
    %v1777 = vunpack.c.h.b16 %v644
    %v1778 = vunpack.c.l.b16 %v645
    %v1779 = vunpack.c.h.b16 %v645
    %v1780 = vunpack.c.l.b16 %v646
    %v1781 = vunpack.c.h.b16 %v646
    %v1782 = vunpack.c.l.b16 %v647
    %v1783 = vunpack.c.h.b16 %v647
    %v1784 = vunpack.c.l.b16 %v648
    %v1785 = vunpack.c.h.b16 %v648
    %v1786 = vunpack.c.l.b16 %v649
    %v1787 = vunpack.c.l.b16 %v650
    %v1788 = vunpack.c.h.b16 %v650
    %v1789 = vunpack.c.l.b16 %v651
    %v1790 = vunpack.c.h.b16 %v651
    %v1791 = vunpack.c.l.b16 %v652
    %v1792 = vunpack.c.h.b16 %v652
    %v1793 = vunpack.c.l.b16 %v653
    %v1794 = vunpack.c.h.b16 %v653
    %v1795 = vunpack.c.l.b16 %v654
    %v1796 = vunpack.c.h.b16 %v654
    %v1797 = vunpack.c.l.b16 %v655
    %v1798 = vunpack.c.h.b16 %v655
    %v1799 = vunpack.c.l.b16 %v656
    %v1800 = vunpack.c.l.b16 %v657
    %v1801 = vunpack.c.h.b16 %v657
    %v1802 = vunpack.c.l.b16 %v658
    %v1803 = vunpack.c.h.b16 %v658
    %v1804 = vunpack.c.l.b16 %v659
    %v1805 = vunpack.c.h.b16 %v659
    %v1806 = vunpack.c.l.b16 %v660
    %v1807 = vunpack.c.h.b16 %v660
    %v1808 = vunpack.c.l.b16 %v661
    %v1809 = vunpack.c.h.b16 %v661
    %v1810 = vunpack.c.l.b16 %v662
    %v1811 = vunpack.c.h.b16 %v662
    %v1812 = vunpack.c.l.b16 %v663
    %v1813 = vunpack.c.l.b16 %v664
    %v1814 = vunpack.c.h.b16 %v664
    %v1815 = vunpack.c.l.b16 %v665
    %v1816 = vunpack.c.h.b16 %v665
    %v1817 = vunpack.c.l.b16 %v666
    %v1818 = vunpack.c.h.b16 %v666
    %v1819 = vunpack.c.l.b16 %v667
    %v1820 = vunpack.c.h.b16 %v667
    %v1821 = vunpack.c.l.b16 %v668
    %v1822 = vunpack.c.h.b16 %v668
    %v1823 = vunpack.c.l.b16 %v669
    %v1824 = vunpack.c.h.b16 %v669
    %v1825 = vunpack.c.l.b16 %v670
    %v1826 = vunpack.c.l.b16 %v671
    %v1827 = vunpack.c.h.b16 %v671
    %v1828 = vunpack.c.l.b16 %v672
    %v1829 = vunpack.c.h.b16 %v672
    %v1830 = vunpack.c.l.b16 %v673
    %v1831 = vunpack.c.h.b16 %v673
    %v1832 = vunpack.c.l.b16 %v674
    %v1833 = vunpack.c.h.b16 %v674
    %v1834 = vunpack.c.l.b16 %v675
    %v1835 = vunpack.c.h.b16 %v675
    %v1836 = vunpack.c.l.b16 %v676
    %v1837 = vunpack.c.h.b16 %v676
    %v1838 = vunpack.c.l.b16 %v677
    %v1839 = vunpack.c.l.b16 %v678
    %v1840 = vunpack.c.h.b16 %v678
    %v1841 = vunpack.c.l.b16 %v679
    %v1842 = vunpack.c.h.b16 %v679
    %v1843 = vunpack.c.l.b16 %v680
    %v1844 = vunpack.c.h.b16 %v680
    %v1845 = vunpack.c.l.b16 %v681
    %v1846 = vunpack.c.h.b16 %v681
    %v1847 = vunpack.c.l.b16 %v682
    %v1848 = vunpack.c.h.b16 %v682
    %v1849 = vunpack.c.l.b16 %v683
    %v1850 = vunpack.c.h.b16 %v683
    %v1851 = vunpack.c.l.b16 %v684
    %v1852 = vunpack.c.l.b16 %v685
    %v1853 = vunpack.c.h.b16 %v685
    %v1854 = vunpack.c.l.b16 %v686
    %v1855 = vunpack.c.h.b16 %v686
    %v1856 = vunpack.c.l.b16 %v687
    %v1857 = vunpack.c.h.b16 %v687
    %v1858 = vunpack.c.l.b16 %v688
    %v1859 = vunpack.c.h.b16 %v688
    %v1860 = vunpack.c.l.b16 %v689
    %v1861 = vunpack.c.h.b16 %v689
    %v1862 = vunpack.c.l.b16 %v690
    %v1863 = vunpack.c.h.b16 %v690
    %v1864 = vunpack.c.l.b16 %v691
    %v1865 = vunpack.c.l.b16 %v692
    %v1866 = vunpack.c.h.b16 %v692
    %v1867 = vunpack.c.l.b16 %v693
    %v1868 = vunpack.c.h.b16 %v693
    %v1869 = vunpack.c.l.b16 %v694
    %v1870 = vunpack.c.h.b16 %v694
    %v1871 = vunpack.c.l.b16 %v695
    %v1872 = vunpack.c.h.b16 %v695
    %v1873 = vunpack.c.l.b16 %v696
    %v1874 = vunpack.c.h.b16 %v696
    %v1875 = vunpack.c.l.b16 %v697
    %v1876 = vunpack.c.h.b16 %v697
    %v1877 = vunpack.c.l.b16 %v698
    %v1878 = vunpack.c.l.b16 %v699
    %v1879 = vunpack.c.h.b16 %v699
    %v1880 = vunpack.c.l.b16 %v700
    %v1881 = vunpack.c.h.b16 %v700
    %v1882 = vunpack.c.l.b16 %v701
    %v1883 = vunpack.c.h.b16 %v701
    %v1884 = vunpack.c.l.b16 %v702
    %v1885 = vunpack.c.h.b16 %v702
    %v1886 = vunpack.c.l.b16 %v703
    %v1887 = vunpack.c.h.b16 %v703
    %v1888 = vunpack.c.l.b16 %v704
    %v1889 = vunpack.c.h.b16 %v704
    %v1890 = vunpack.c.l.b16 %v705
    %v1891 = vunpack.c.l.b16 %v706
    %v1892 = vunpack.c.h.b16 %v706
    %v1893 = vunpack.c.l.b16 %v707
    %v1894 = vunpack.c.h.b16 %v707
    %v1895 = vunpack.c.l.b16 %v708
    %v1896 = vunpack.c.h.b16 %v708
    %v1897 = vunpack.c.l.b16 %v709
    %v1898 = vunpack.c.h.b16 %v709
    %v1899 = vunpack.c.l.b16 %v710
    %v1900 = vunpack.c.h.b16 %v710
    %v1901 = vunpack.c.l.b16 %v711
    %v1902 = vunpack.c.h.b16 %v711
    %v1903 = vunpack.c.l.b16 %v712
    %v1904 = vunpack.c.l.b16 %v713
    %v1905 = vunpack.c.h.b16 %v713
    %v1906 = vunpack.c.l.b16 %v714
    %v1907 = vunpack.c.h.b16 %v714
    %v1908 = vunpack.c.l.b16 %v715
    %v1909 = vunpack.c.h.b16 %v715
    %v1910 = vunpack.c.l.b16 %v716
    %v1911 = vunpack.c.h.b16 %v716
    %v1912 = vunpack.c.l.b16 %v717
    %v1913 = vunpack.c.h.b16 %v717
    %v1914 = vunpack.c.l.b16 %v718
    %v1915 = vunpack.c.h.b16 %v718
    %v1916 = vunpack.c.l.b16 %v719
    %v1917 = vunpack.c.l.b16 %v720
    %v1918 = vunpack.c.h.b16 %v720
    %v1919 = vunpack.c.l.b16 %v721
    %v1920 = vunpack.c.h.b16 %v721
    %v1921 = vunpack.c.l.b16 %v722
    %v1922 = vunpack.c.h.b16 %v722
    %v1923 = vunpack.c.l.b16 %v723
    %v1924 = vunpack.c.h.b16 %v723
    %v1925 = vunpack.c.l.b16 %v724
    %v1926 = vunpack.c.h.b16 %v724
    %v1927 = vunpack.c.l.b16 %v725
    %v1928 = vunpack.c.h.b16 %v725
    %v1929 = vunpack.c.l.b16 %v726
    %v1930 = vunpack.c.l.b16 %v727
    %v1931 = vunpack.c.h.b16 %v727
    %v1932 = vunpack.c.l.b16 %v728
    %v1933 = vunpack.c.h.b16 %v728
    %v1934 = vunpack.c.l.b16 %v729
    %v1935 = vunpack.c.h.b16 %v729
    %v1936 = vunpack.c.l.b16 %v730
    %v1937 = vunpack.c.h.b16 %v730
    %v1938 = vunpack.c.l.b16 %v731
    %v1939 = vunpack.c.h.b16 %v731
    %v1940 = vunpack.c.l.b16 %v732
    %v1941 = vunpack.c.h.b16 %v732
    %v1942 = vunpack.c.l.b16 %v733
    %v1943 = vunpack.c.l.b16 %v734
    %v1944 = vunpack.c.h.b16 %v734
    %v1945 = vunpack.c.l.b16 %v735
    %v1946 = vunpack.c.h.b16 %v735
    %v1947 = vunpack.c.l.b16 %v736
    %v1948 = vunpack.c.h.b16 %v736
    %v1949 = vunpack.c.l.b16 %v737
    %v1950 = vunpack.c.h.b16 %v737
    %v1951 = vunpack.c.l.b16 %v738
    %v1952 = vunpack.c.h.b16 %v738
    %v1953 = vunpack.c.l.b16 %v739
    %v1954 = vunpack.c.h.b16 %v739
    %v1955 = vunpack.c.l.b16 %v740
    %v1956 = vunpack.c.l.b16 %v741
    %v1957 = vunpack.c.h.b16 %v741
    %v1958 = vunpack.c.l.b16 %v742
    %v1959 = vunpack.c.h.b16 %v742
    %v1960 = vunpack.c.l.b16 %v743
    %v1961 = vunpack.c.h.b16 %v743
    %v1962 = vunpack.c.l.b16 %v744
    %v1963 = vunpack.c.h.b16 %v744
    %v1964 = vunpack.c.l.b16 %v745
    %v1965 = vunpack.c.h.b16 %v745
    %v1966 = vunpack.c.l.b16 %v746
    %v1967 = vunpack.c.h.b16 %v746
    %v1968 = vunpack.c.l.b16 %v747
    %v1969 = vunpack.c.l.b16 %v748
    %v1970 = vunpack.c.h.b16 %v748
    %v1971 = vunpack.c.l.b16 %v749
    %v1972 = vunpack.c.h.b16 %v749
    %v1973 = vunpack.c.l.b16 %v750
    %v1974 = vunpack.c.h.b16 %v750
    %v1975 = vunpack.c.l.b16 %v751
    %v1976 = vunpack.c.h.b16 %v751
    %v1977 = vunpack.c.l.b16 %v752
    %v1978 = vunpack.c.h.b16 %v752
    %v1979 = vunpack.c.l.b16 %v753
    %v1980 = vunpack.c.h.b16 %v753
    %v1981 = vunpack.c.l.b16 %v754
    %v1982 = vunpack.c.l.b16 %v755
    %v1983 = vunpack.c.h.b16 %v755
    %v1984 = vunpack.c.l.b16 %v756
    %v1985 = vunpack.c.h.b16 %v756
    %v1986 = vunpack.c.l.b16 %v757
    %v1987 = vunpack.c.h.b16 %v757
    %v1988 = vunpack.c.l.b16 %v758
    %v1989 = vunpack.c.h.b16 %v758
    %v1990 = vunpack.c.l.b16 %v759
    %v1991 = vunpack.c.h.b16 %v759
    %v1992 = vunpack.c.l.b16 %v760
    %v1993 = vunpack.c.h.b16 %v760
    %v1994 = vunpack.c.l.b16 %v761
    %v1995 = vunpack.c.l.b16 %v762
    %v1996 = vunpack.c.h.b16 %v762
    %v1997 = vunpack.c.l.b16 %v763
    %v1998 = vunpack.c.h.b16 %v763
    %v1999 = vunpack.c.l.b16 %v764
    %v2000 = vunpack.c.h.b16 %v764
    %v2001 = vunpack.c.l.b16 %v765
    %v2002 = vunpack.c.h.b16 %v765
    %v2003 = vunpack.c.l.b16 %v766
    %v2004 = vunpack.c.h.b16 %v766
    %v2005 = vunpack.c.l.b16 %v767
    %v2006 = vunpack.c.h.b16 %v767
    %v2007 = vunpack.c.l.b16 %v768
    %v2008 = vunpack.c.l.b16 %v769
    %v2009 = vunpack.c.h.b16 %v769
    %v2010 = vunpack.c.l.b16 %v770
    %v2011 = vunpack.c.h.b16 %v770
    %v2012 = vunpack.c.l.b16 %v771
    %v2013 = vunpack.c.h.b16 %v771
    %v2014 = vunpack.c.l.b16 %v772
    %v2015 = vunpack.c.h.b16 %v772
    %v2016 = vunpack.c.l.b16 %v773
    %v2017 = vunpack.c.h.b16 %v773
    %v2018 = vunpack.c.l.b16 %v774
    %v2019 = vunpack.c.h.b16 %v774
    %v2020 = vunpack.c.l.b16 %v775
    %v2021 = vunpack.c.l.b16 %v776
    %v2022 = vunpack.c.h.b16 %v776
    %v2023 = vunpack.c.l.b16 %v777
    %v2024 = vunpack.c.h.b16 %v777
    %v2025 = vunpack.c.l.b16 %v778
    %v2026 = vunpack.c.h.b16 %v778
    %v2027 = vunpack.c.l.b16 %v779
    %v2028 = vunpack.c.h.b16 %v779
    %v2029 = vunpack.c.l.b16 %v780
    %v2030 = vunpack.c.h.b16 %v780
    %v2031 = vunpack.c.l.b16 %v781
    %v2032 = vunpack.c.h.b16 %v781
    %v2033 = vunpack.c.l.b16 %v782
    %v2034 = vunpack.c.l.b16 %v783
    %v2035 = vunpack.c.h.b16 %v783
    %v2036 = vunpack.c.l.b16 %v784
    %v2037 = vunpack.c.h.b16 %v784
    %v2038 = vunpack.c.l.b16 %v785
    %v2039 = vunpack.c.h.b16 %v785
    %v2040 = vunpack.c.l.b16 %v786
    %v2041 = vunpack.c.h.b16 %v786
    %v2042 = vunpack.c.l.b16 %v787
    %v2043 = vunpack.c.h.b16 %v787
    %v2044 = vunpack.c.l.b16 %v788
    %v2045 = vunpack.c.h.b16 %v788
    %v2046 = vunpack.c.l.b16 %v789
    %v2047 = vunpack.c.l.b16 %v790
    %v2048 = vunpack.c.h.b16 %v790
    %v2049 = vunpack.c.l.b16 %v791
    %v2050 = vunpack.c.h.b16 %v791
    %v2051 = vunpack.c.l.b16 %v792
    %v2052 = vunpack.c.h.b16 %v792
    %v2053 = vunpack.c.l.b16 %v793
    %v2054 = vunpack.c.h.b16 %v793
    %v2055 = vunpack.c.l.b16 %v794
    %v2056 = vunpack.c.h.b16 %v794
    %v2057 = vunpack.c.l.b16 %v795
    %v2058 = vunpack.c.h.b16 %v795
    %v2059 = vunpack.c.l.b16 %v796
    %v2060 = vunpack.c.l.b16 %v797
    %v2061 = vunpack.c.h.b16 %v797
    %v2062 = vunpack.c.l.b16 %v798
    %v2063 = vunpack.c.h.b16 %v798
    %v2064 = vunpack.c.l.b16 %v799
    %v2065 = vunpack.c.h.b16 %v799
    %v2066 = vunpack.c.l.b16 %v800
    %v2067 = vunpack.c.h.b16 %v800
    %v2068 = vunpack.c.l.b16 %v801
    %v2069 = vunpack.c.h.b16 %v801
    %v2070 = vunpack.c.l.b16 %v802
    %v2071 = vunpack.c.h.b16 %v802
    %v2072 = vunpack.c.l.b16 %v803
    %v2073 = vunpack.c.l.b16 %v804
    %v2074 = vunpack.c.h.b16 %v804
    %v2075 = vunpack.c.l.b16 %v805
    %v2076 = vunpack.c.h.b16 %v805
    %v2077 = vunpack.c.l.b16 %v806
    %v2078 = vunpack.c.h.b16 %v806
    %v2079 = vunpack.c.l.b16 %v807
    %v2080 = vunpack.c.h.b16 %v807
    %v2081 = vunpack.c.l.b16 %v808
    %v2082 = vunpack.c.h.b16 %v808
    %v2083 = vunpack.c.l.b16 %v809
    %v2084 = vunpack.c.h.b16 %v809
    %v2085 = vunpack.c.l.b16 %v810
    %v2086 = vunpack.c.l.b16 %v811
    %v2087 = vunpack.c.h.b16 %v811
    %v2088 = vunpack.c.l.b16 %v812
    %v2089 = vunpack.c.h.b16 %v812
    %v2090 = vunpack.c.l.b16 %v813
    %v2091 = vunpack.c.h.b16 %v813
    %v2092 = vunpack.c.l.b16 %v814
    %v2093 = vunpack.c.h.b16 %v814
    %v2094 = vunpack.c.l.b16 %v815
    %v2095 = vunpack.c.h.b16 %v815
    %v2096 = vunpack.c.l.b16 %v816
    %v2097 = vunpack.c.h.b16 %v816
    %v2098 = vunpack.c.l.b16 %v817
    %v2099 = vunpack.c.l.b16 %v818
    %v2100 = vunpack.c.h.b16 %v818
    %v2101 = vunpack.c.l.b16 %v819
    %v2102 = vunpack.c.h.b16 %v819
    %v2103 = vunpack.c.l.b16 %v820
    %v2104 = vunpack.c.h.b16 %v820
    %v2105 = vunpack.c.l.b16 %v821
    %v2106 = vunpack.c.h.b16 %v821
    %v2107 = vunpack.c.l.b16 %v822
    %v2108 = vunpack.c.h.b16 %v822
    %v2109 = vunpack.c.l.b16 %v823
    %v2110 = vunpack.c.h.b16 %v823
    %v2111 = vunpack.c.l.b16 %v824
    %v2112 = vunpack.c.l.b16 %v825
    %v2113 = vunpack.c.h.b16 %v825
    %v2114 = vunpack.c.l.b16 %v826
    %v2115 = vunpack.c.h.b16 %v826
    %v2116 = vunpack.c.l.b16 %v827
    %v2117 = vunpack.c.h.b16 %v827
    %v2118 = vunpack.c.l.b16 %v828
    %v2119 = vunpack.c.h.b16 %v828
    %v2120 = vunpack.c.l.b16 %v829
    %v2121 = vunpack.c.h.b16 %v829
    %v2122 = vunpack.c.l.b16 %v830
    %v2123 = vunpack.c.h.b16 %v830
    %v2124 = vunpack.c.l.b16 %v831
    %v2125 = vunpack.c.l.b16 %v832
    %v2126 = vunpack.c.h.b16 %v832
    %v2127 = vunpack.c.l.b16 %v833
    %v2128 = vunpack.c.h.b16 %v833
    %v2129 = vunpack.c.l.b16 %v834
    %v2130 = vunpack.c.h.b16 %v834
    %v2131 = vunpack.c.l.b16 %v835
    %v2132 = vunpack.c.h.b16 %v835
    %v2133 = vunpack.c.l.b16 %v836
    %v2134 = vunpack.c.h.b16 %v836
    %v2135 = vunpack.c.l.b16 %v837
    %v2136 = vunpack.c.h.b16 %v837
    %v2137 = vunpack.c.l.b16 %v838
    %v2138 = vunpack.c.l.b16 %v839
    %v2139 = vunpack.c.h.b16 %v839
    %v2140 = vunpack.c.l.b16 %v840
    %v2141 = vunpack.c.h.b16 %v840
    %v2142 = vunpack.c.l.b16 %v841
    %v2143 = vunpack.c.h.b16 %v841
    %v2144 = vunpack.c.l.b16 %v842
    %v2145 = vunpack.c.h.b16 %v842
    %v2146 = vunpack.c.l.b16 %v843
    %v2147 = vunpack.c.h.b16 %v843
    %v2148 = vunpack.c.l.b16 %v844
    %v2149 = vunpack.c.h.b16 %v844
    %v2150 = vunpack.c.l.b16 %v845
    %v2151 = vunpack.c.l.b16 %v846
    %v2152 = vunpack.c.h.b16 %v846
    %v2153 = vunpack.c.l.b16 %v847
    %v2154 = vunpack.c.h.b16 %v847
    %v2155 = vunpack.c.l.b16 %v848
    %v2156 = vunpack.c.h.b16 %v848
    %v2157 = vunpack.c.l.b16 %v849
    %v2158 = vunpack.c.h.b16 %v849
    %v2159 = vunpack.c.l.b16 %v850
    %v2160 = vunpack.c.h.b16 %v850
    %v2161 = vunpack.c.l.b16 %v851
    %v2162 = vunpack.c.h.b16 %v851
    %v2163 = vunpack.c.l.b16 %v852
    %v2164 = vunpack.c.l.b16 %v853
    %v2165 = vunpack.c.h.b16 %v853
    %v2166 = vunpack.c.l.b16 %v854
    %v2167 = vunpack.c.h.b16 %v854
    %v2168 = vunpack.c.l.b16 %v855
    %v2169 = vunpack.c.h.b16 %v855
    %v2170 = vunpack.c.l.b16 %v856
    %v2171 = vunpack.c.h.b16 %v856
    %v2172 = vunpack.c.l.b16 %v857
    %v2173 = vunpack.c.h.b16 %v857
    %v2174 = vunpack.c.l.b16 %v858
    %v2175 = vunpack.c.h.b16 %v858
    %v2176 = vunpack.c.l.b16 %v859
    %v2177 = vunpack.c.l.b16 %v860
    %v2178 = vunpack.c.h.b16 %v860
    %v2179 = vunpack.c.l.b16 %v861
    %v2180 = vunpack.c.h.b16 %v861
    %v2181 = vunpack.c.l.b16 %v862
    %v2182 = vunpack.c.h.b16 %v862
    %v2183 = vunpack.c.l.b16 %v863
    %v2184 = vunpack.c.h.b16 %v863
    %v2185 = vunpack.c.l.b16 %v864
    %v2186 = vunpack.c.h.b16 %v864
    %v2187 = vunpack.c.l.b16 %v865
    %v2188 = vunpack.c.h.b16 %v865
    %v2189 = vunpack.c.l.b16 %v866
    %v2190 = vunpack.c.l.b16 %v867
    %v2191 = vunpack.c.h.b16 %v867
    %v2192 = vunpack.c.l.b16 %v868
    %v2193 = vunpack.c.h.b16 %v868
    %v2194 = vunpack.c.l.b16 %v869
    %v2195 = vunpack.c.h.b16 %v869
    %v2196 = vunpack.c.l.b16 %v870
    %v2197 = vunpack.c.h.b16 %v870
    %v2198 = vunpack.c.l.b16 %v871
    %v2199 = vunpack.c.h.b16 %v871
    %v2200 = vunpack.c.l.b16 %v872
    %v2201 = vunpack.c.h.b16 %v872
    %v2202 = vunpack.c.l.b16 %v873
    %v2203 = vunpack.c.l.b16 %v874
    %v2204 = vunpack.c.h.b16 %v874
    %v2205 = vunpack.c.l.b16 %v875
    %v2206 = vunpack.c.h.b16 %v875
    %v2207 = vunpack.c.l.b16 %v876
    %v2208 = vunpack.c.h.b16 %v876
    %v2209 = vunpack.c.l.b16 %v877
    %v2210 = vunpack.c.h.b16 %v877
    %v2211 = vunpack.c.l.b16 %v878
    %v2212 = vunpack.c.h.b16 %v878
    %v2213 = vunpack.c.l.b16 %v879
    %v2214 = vunpack.c.h.b16 %v879
    %v2215 = vunpack.c.l.b16 %v880
    %v2216 = vunpack.c.l.b16 %v881
    %v2217 = vunpack.c.h.b16 %v881
    %v2218 = vunpack.c.l.b16 %v882
    %v2219 = vunpack.c.h.b16 %v882
    %v2220 = vunpack.c.l.b16 %v883
    %v2221 = vunpack.c.h.b16 %v883
    %v2222 = vunpack.c.l.b16 %v884
    %v2223 = vunpack.c.h.b16 %v884
    %v2224 = vunpack.c.l.b16 %v885
    %v2225 = vunpack.c.h.b16 %v885
    %v2226 = vunpack.c.l.b16 %v886
    %v2227 = vunpack.c.h.b16 %v886
    %v2228 = vunpack.c.l.b16 %v887
    %v2229 = vunpack.c.l.b16 %v888
    %v2230 = vunpack.c.h.b16 %v888
    %v2231 = vunpack.c.l.b16 %v889
    %v2232 = vunpack.c.h.b16 %v889
    %v2233 = vunpack.c.l.b16 %v890
    %v2234 = vunpack.c.h.b16 %v890
    %v2235 = vunpack.c.l.b16 %v891
    %v2236 = vunpack.c.h.b16 %v891
    %v2237 = vunpack.c.l.b16 %v892
    %v2238 = vunpack.c.h.b16 %v892
    %v2239 = vunpack.c.l.b16 %v893
    %v2240 = vunpack.c.h.b16 %v893
    %v2241 = vunpack.c.l.b16 %v894
    %v2242 = vunpack.c.l.b16 %v895
    %v2243 = vunpack.c.h.b16 %v895
    %v2244 = vunpack.c.l.b16 %v896
    %v2245 = vunpack.c.h.b16 %v896
    %v2246 = vunpack.c.l.b16 %v897
    %v2247 = vunpack.c.h.b16 %v897
    %v2248 = vunpack.c.l.b16 %v898
    %v2249 = vunpack.c.h.b16 %v898
    %v2250 = vunpack.c.l.b16 %v899
    %v2251 = vunpack.c.h.b16 %v899
    %v2252 = vunpack.c.l.b16 %v900
    %v2253 = vunpack.c.h.b16 %v900
    %v2254 = vunpack.c.l.b16 %v901
    %v2255 = vpack.c.b16 %v1436, %v1423
    %v2256 = vpack.c.b16 %v1437, %v1424
    %v2257 = vpack.c.b16 %v1438, %v1425
    %v2258 = vpack.c.b16 %v1439, %v1426
    %v2259 = vpack.c.b16 %v1440, %v1427
    %v2260 = vpack.c.b16 %v1441, %v1428
    %v2261 = vpack.c.b16 %v1442, %v1429
    %v2262 = vpack.c.b16 %v1443, %v1430
    %v2263 = vpack.c.b16 %v1444, %v1431
    %v2264 = vpack.c.b16 %v1445, %v1432
    %v2265 = vpack.c.b16 %v1446, %v1433
    %v2266 = vpack.c.b16 %v1447, %v1434
    %v2267 = vpack.c.b16 %v1448, %v1435
    %v2268 = vpack.c.b16 %v1462, %v1449
    %v2269 = vpack.c.b16 %v1463, %v1450
    %v2270 = vpack.c.b16 %v1464, %v1451
    %v2271 = vpack.c.b16 %v1465, %v1452
    %v2272 = vpack.c.b16 %v1466, %v1453
    %v2273 = vpack.c.b16 %v1467, %v1454
    %v2274 = vpack.c.b16 %v1468, %v1455
    %v2275 = vpack.c.b16 %v1469, %v1456
    %v2276 = vpack.c.b16 %v1470, %v1457
    %v2277 = vpack.c.b16 %v1471, %v1458
    %v2278 = vpack.c.b16 %v1472, %v1459
    %v2279 = vpack.c.b16 %v1473, %v1460
    %v2280 = vpack.c.b16 %v1474, %v1461
    %v2281 = vpack.c.b16 %v1488, %v1475
    %v2282 = vpack.c.b16 %v1489, %v1476
    %v2283 = vpack.c.b16 %v1490, %v1477
    %v2284 = vpack.c.b16 %v1491, %v1478
    %v2285 = vpack.c.b16 %v1492, %v1479
    %v2286 = vpack.c.b16 %v1493, %v1480
    %v2287 = vpack.c.b16 %v1494, %v1481
    %v2288 = vpack.c.b16 %v1495, %v1482
    %v2289 = vpack.c.b16 %v1496, %v1483
    %v2290 = vpack.c.b16 %v1497, %v1484
    %v2291 = vpack.c.b16 %v1498, %v1485
    %v2292 = vpack.c.b16 %v1499, %v1486
    %v2293 = vpack.c.b16 %v1500, %v1487
    %v2294 = vpack.c.b16 %v1514, %v1501
    %v2295 = vpack.c.b16 %v1515, %v1502
    %v2296 = vpack.c.b16 %v1516, %v1503
    %v2297 = vpack.c.b16 %v1517, %v1504
    %v2298 = vpack.c.b16 %v1518, %v1505
    %v2299 = vpack.c.b16 %v1519, %v1506
    %v2300 = vpack.c.b16 %v1520, %v1507
    %v2301 = vpack.c.b16 %v1521, %v1508
    %v2302 = vpack.c.b16 %v1522, %v1509
    %v2303 = vpack.c.b16 %v1523, %v1510
    %v2304 = vpack.c.b16 %v1524, %v1511
    %v2305 = vpack.c.b16 %v1525, %v1512
    %v2306 = vpack.c.b16 %v1526, %v1513
    %v2307 = vpack.c.b16 %v1540, %v1527
    %v2308 = vpack.c.b16 %v1541, %v1528
    %v2309 = vpack.c.b16 %v1542, %v1529
    %v2310 = vpack.c.b16 %v1543, %v1530
    %v2311 = vpack.c.b16 %v1544, %v1531
    %v2312 = vpack.c.b16 %v1545, %v1532
    %v2313 = vpack.c.b16 %v1546, %v1533
    %v2314 = vpack.c.b16 %v1547, %v1534
    %v2315 = vpack.c.b16 %v1548, %v1535
    %v2316 = vpack.c.b16 %v1549, %v1536
    %v2317 = vpack.c.b16 %v1550, %v1537
    %v2318 = vpack.c.b16 %v1551, %v1538
    %v2319 = vpack.c.b16 %v1552, %v1539
    %v2320 = vpack.c.b16 %v1566, %v1553
    %v2321 = vpack.c.b16 %v1567, %v1554
    %v2322 = vpack.c.b16 %v1568, %v1555
    %v2323 = vpack.c.b16 %v1569, %v1556
    %v2324 = vpack.c.b16 %v1570, %v1557
    %v2325 = vpack.c.b16 %v1571, %v1558
    %v2326 = vpack.c.b16 %v1572, %v1559
    %v2327 = vpack.c.b16 %v1573, %v1560
    %v2328 = vpack.c.b16 %v1574, %v1561
    %v2329 = vpack.c.b16 %v1575, %v1562
    %v2330 = vpack.c.b16 %v1576, %v1563
    %v2331 = vpack.c.b16 %v1577, %v1564
    %v2332 = vpack.c.b16 %v1578, %v1565
    %v2333 = vpack.c.b16 %v1592, %v1579
    %v2334 = vpack.c.b16 %v1593, %v1580
    %v2335 = vpack.c.b16 %v1594, %v1581
    %v2336 = vpack.c.b16 %v1595, %v1582
    %v2337 = vpack.c.b16 %v1596, %v1583
    %v2338 = vpack.c.b16 %v1597, %v1584
    %v2339 = vpack.c.b16 %v1598, %v1585
    %v2340 = vpack.c.b16 %v1599, %v1586
    %v2341 = vpack.c.b16 %v1600, %v1587
    %v2342 = vpack.c.b16 %v1601, %v1588
    %v2343 = vpack.c.b16 %v1602, %v1589
    %v2344 = vpack.c.b16 %v1603, %v1590
    %v2345 = vpack.c.b16 %v1604, %v1591
    %v2346 = vpack.c.b16 %v1618, %v1605
    %v2347 = vpack.c.b16 %v1619, %v1606
    %v2348 = vpack.c.b16 %v1620, %v1607
    %v2349 = vpack.c.b16 %v1621, %v1608
    %v2350 = vpack.c.b16 %v1622, %v1609
    %v2351 = vpack.c.b16 %v1623, %v1610
    %v2352 = vpack.c.b16 %v1624, %v1611
    %v2353 = vpack.c.b16 %v1625, %v1612
    %v2354 = vpack.c.b16 %v1626, %v1613
    %v2355 = vpack.c.b16 %v1627, %v1614
    %v2356 = vpack.c.b16 %v1628, %v1615
    %v2357 = vpack.c.b16 %v1629, %v1616
    %v2358 = vpack.c.b16 %v1630, %v1617
    %v2359 = vpack.c.b16 %v1644, %v1631
    %v2360 = vpack.c.b16 %v1645, %v1632
    %v2361 = vpack.c.b16 %v1646, %v1633
    %v2362 = vpack.c.b16 %v1647, %v1634
    %v2363 = vpack.c.b16 %v1648, %v1635
    %v2364 = vpack.c.b16 %v1649, %v1636
    %v2365 = vpack.c.b16 %v1650, %v1637
    %v2366 = vpack.c.b16 %v1651, %v1638
    %v2367 = vpack.c.b16 %v1652, %v1639
    %v2368 = vpack.c.b16 %v1653, %v1640
    %v2369 = vpack.c.b16 %v1654, %v1641
    %v2370 = vpack.c.b16 %v1655, %v1642
    %v2371 = vpack.c.b16 %v1656, %v1643
    %v2372 = vpack.c.b16 %v1670, %v1657
    %v2373 = vpack.c.b16 %v1671, %v1658
    %v2374 = vpack.c.b16 %v1672, %v1659
    %v2375 = vpack.c.b16 %v1673, %v1660
    %v2376 = vpack.c.b16 %v1674, %v1661
    %v2377 = vpack.c.b16 %v1675, %v1662
    %v2378 = vpack.c.b16 %v1676, %v1663
    %v2379 = vpack.c.b16 %v1677, %v1664
    %v2380 = vpack.c.b16 %v1678, %v1665
    %v2381 = vpack.c.b16 %v1679, %v1666
    %v2382 = vpack.c.b16 %v1680, %v1667
    %v2383 = vpack.c.b16 %v1681, %v1668
    %v2384 = vpack.c.b16 %v1682, %v1669
    %v2385 = vpack.c.b16 %v1696, %v1683
    %v2386 = vpack.c.b16 %v1697, %v1684
    %v2387 = vpack.c.b16 %v1698, %v1685
    %v2388 = vpack.c.b16 %v1699, %v1686
    %v2389 = vpack.c.b16 %v1700, %v1687
    %v2390 = vpack.c.b16 %v1701, %v1688
    %v2391 = vpack.c.b16 %v1702, %v1689
    %v2392 = vpack.c.b16 %v1703, %v1690
    %v2393 = vpack.c.b16 %v1704, %v1691
    %v2394 = vpack.c.b16 %v1705, %v1692
    %v2395 = vpack.c.b16 %v1706, %v1693
    %v2396 = vpack.c.b16 %v1707, %v1694
    %v2397 = vpack.c.b16 %v1708, %v1695
    %v2398 = vpack.c.b16 %v1722, %v1709
    %v2399 = vpack.c.b16 %v1723, %v1710
    %v2400 = vpack.c.b16 %v1724, %v1711
    %v2401 = vpack.c.b16 %v1725, %v1712
    %v2402 = vpack.c.b16 %v1726, %v1713
    %v2403 = vpack.c.b16 %v1727, %v1714
    %v2404 = vpack.c.b16 %v1728, %v1715
    %v2405 = vpack.c.b16 %v1729, %v1716
    %v2406 = vpack.c.b16 %v1730, %v1717
    %v2407 = vpack.c.b16 %v1731, %v1718
    %v2408 = vpack.c.b16 %v1732, %v1719
    %v2409 = vpack.c.b16 %v1733, %v1720
    %v2410 = vpack.c.b16 %v1734, %v1721
    %v2411 = vpack.c.b16 %v1748, %v1735
    %v2412 = vpack.c.b16 %v1749, %v1736
    %v2413 = vpack.c.b16 %v1750, %v1737
    %v2414 = vpack.c.b16 %v1751, %v1738
    %v2415 = vpack.c.b16 %v1752, %v1739
    %v2416 = vpack.c.b16 %v1753, %v1740
    %v2417 = vpack.c.b16 %v1754, %v1741
    %v2418 = vpack.c.b16 %v1755, %v1742
    %v2419 = vpack.c.b16 %v1756, %v1743
    %v2420 = vpack.c.b16 %v1757, %v1744
    %v2421 = vpack.c.b16 %v1758, %v1745
    %v2422 = vpack.c.b16 %v1759, %v1746
    %v2423 = vpack.c.b16 %v1760, %v1747
    %v2424 = vpack.c.b16 %v1774, %v1761
    %v2425 = vpack.c.b16 %v1775, %v1762
    %v2426 = vpack.c.b16 %v1776, %v1763
    %v2427 = vpack.c.b16 %v1777, %v1764
    %v2428 = vpack.c.b16 %v1778, %v1765
    %v2429 = vpack.c.b16 %v1779, %v1766
    %v2430 = vpack.c.b16 %v1780, %v1767
    %v2431 = vpack.c.b16 %v1781, %v1768
    %v2432 = vpack.c.b16 %v1782, %v1769
    %v2433 = vpack.c.b16 %v1783, %v1770
    %v2434 = vpack.c.b16 %v1784, %v1771
    %v2435 = vpack.c.b16 %v1785, %v1772
    %v2436 = vpack.c.b16 %v1786, %v1773
    %v2437 = vpack.c.b16 %v1800, %v1787
    %v2438 = vpack.c.b16 %v1801, %v1788
    %v2439 = vpack.c.b16 %v1802, %v1789
    %v2440 = vpack.c.b16 %v1803, %v1790
    %v2441 = vpack.c.b16 %v1804, %v1791
    %v2442 = vpack.c.b16 %v1805, %v1792
    %v2443 = vpack.c.b16 %v1806, %v1793
    %v2444 = vpack.c.b16 %v1807, %v1794
    %v2445 = vpack.c.b16 %v1808, %v1795
    %v2446 = vpack.c.b16 %v1809, %v1796
    %v2447 = vpack.c.b16 %v1810, %v1797
    %v2448 = vpack.c.b16 %v1811, %v1798
    %v2449 = vpack.c.b16 %v1812, %v1799
    %v2450 = vpack.c.b16 %v1826, %v1813
    %v2451 = vpack.c.b16 %v1827, %v1814
    %v2452 = vpack.c.b16 %v1828, %v1815
    %v2453 = vpack.c.b16 %v1829, %v1816
    %v2454 = vpack.c.b16 %v1830, %v1817
    %v2455 = vpack.c.b16 %v1831, %v1818
    %v2456 = vpack.c.b16 %v1832, %v1819
    %v2457 = vpack.c.b16 %v1833, %v1820
    %v2458 = vpack.c.b16 %v1834, %v1821
    %v2459 = vpack.c.b16 %v1835, %v1822
    %v2460 = vpack.c.b16 %v1836, %v1823
    %v2461 = vpack.c.b16 %v1837, %v1824
    %v2462 = vpack.c.b16 %v1838, %v1825
    %v2463 = vpack.c.b16 %v1852, %v1839
    %v2464 = vpack.c.b16 %v1853, %v1840
    %v2465 = vpack.c.b16 %v1854, %v1841
    %v2466 = vpack.c.b16 %v1855, %v1842
    %v2467 = vpack.c.b16 %v1856, %v1843
    %v2468 = vpack.c.b16 %v1857, %v1844
    %v2469 = vpack.c.b16 %v1858, %v1845
    %v2470 = vpack.c.b16 %v1859, %v1846
    %v2471 = vpack.c.b16 %v1860, %v1847
    %v2472 = vpack.c.b16 %v1861, %v1848
    %v2473 = vpack.c.b16 %v1862, %v1849
    %v2474 = vpack.c.b16 %v1863, %v1850
    %v2475 = vpack.c.b16 %v1864, %v1851
    %v2476 = vpack.c.b16 %v1878, %v1865
    %v2477 = vpack.c.b16 %v1879, %v1866
    %v2478 = vpack.c.b16 %v1880, %v1867
    %v2479 = vpack.c.b16 %v1881, %v1868
    %v2480 = vpack.c.b16 %v1882, %v1869
    %v2481 = vpack.c.b16 %v1883, %v1870
    %v2482 = vpack.c.b16 %v1884, %v1871
    %v2483 = vpack.c.b16 %v1885, %v1872
    %v2484 = vpack.c.b16 %v1886, %v1873
    %v2485 = vpack.c.b16 %v1887, %v1874
    %v2486 = vpack.c.b16 %v1888, %v1875
    %v2487 = vpack.c.b16 %v1889, %v1876
    %v2488 = vpack.c.b16 %v1890, %v1877
    %v2489 = vpack.c.b16 %v1904, %v1891
    %v2490 = vpack.c.b16 %v1905, %v1892
    %v2491 = vpack.c.b16 %v1906, %v1893
    %v2492 = vpack.c.b16 %v1907, %v1894
    %v2493 = vpack.c.b16 %v1908, %v1895
    %v2494 = vpack.c.b16 %v1909, %v1896
    %v2495 = vpack.c.b16 %v1910, %v1897
    %v2496 = vpack.c.b16 %v1911, %v1898
    %v2497 = vpack.c.b16 %v1912, %v1899
    %v2498 = vpack.c.b16 %v1913, %v1900
    %v2499 = vpack.c.b16 %v1914, %v1901
    %v2500 = vpack.c.b16 %v1915, %v1902
    %v2501 = vpack.c.b16 %v1916, %v1903
    %v2502 = vpack.c.b16 %v1930, %v1917
    %v2503 = vpack.c.b16 %v1931, %v1918
    %v2504 = vpack.c.b16 %v1932, %v1919
    %v2505 = vpack.c.b16 %v1933, %v1920
    %v2506 = vpack.c.b16 %v1934, %v1921
    %v2507 = vpack.c.b16 %v1935, %v1922
    %v2508 = vpack.c.b16 %v1936, %v1923
    %v2509 = vpack.c.b16 %v1937, %v1924
    %v2510 = vpack.c.b16 %v1938, %v1925
    %v2511 = vpack.c.b16 %v1939, %v1926
    %v2512 = vpack.c.b16 %v1940, %v1927
    %v2513 = vpack.c.b16 %v1941, %v1928
    %v2514 = vpack.c.b16 %v1942, %v1929
    %v2515 = vpack.c.b16 %v1956, %v1943
    %v2516 = vpack.c.b16 %v1957, %v1944
    %v2517 = vpack.c.b16 %v1958, %v1945
    %v2518 = vpack.c.b16 %v1959, %v1946
    %v2519 = vpack.c.b16 %v1960, %v1947
    %v2520 = vpack.c.b16 %v1961, %v1948
    %v2521 = vpack.c.b16 %v1962, %v1949
    %v2522 = vpack.c.b16 %v1963, %v1950
    %v2523 = vpack.c.b16 %v1964, %v1951
    %v2524 = vpack.c.b16 %v1965, %v1952
    %v2525 = vpack.c.b16 %v1966, %v1953
    %v2526 = vpack.c.b16 %v1967, %v1954
    %v2527 = vpack.c.b16 %v1968, %v1955
    %v2528 = vpack.c.b16 %v1982, %v1969
    %v2529 = vpack.c.b16 %v1983, %v1970
    %v2530 = vpack.c.b16 %v1984, %v1971
    %v2531 = vpack.c.b16 %v1985, %v1972
    %v2532 = vpack.c.b16 %v1986, %v1973
    %v2533 = vpack.c.b16 %v1987, %v1974
    %v2534 = vpack.c.b16 %v1988, %v1975
    %v2535 = vpack.c.b16 %v1989, %v1976
    %v2536 = vpack.c.b16 %v1990, %v1977
    %v2537 = vpack.c.b16 %v1991, %v1978
    %v2538 = vpack.c.b16 %v1992, %v1979
    %v2539 = vpack.c.b16 %v1993, %v1980
    %v2540 = vpack.c.b16 %v1994, %v1981
    %v2541 = vpack.c.b16 %v2008, %v1995
    %v2542 = vpack.c.b16 %v2009, %v1996
    %v2543 = vpack.c.b16 %v2010, %v1997
    %v2544 = vpack.c.b16 %v2011, %v1998
    %v2545 = vpack.c.b16 %v2012, %v1999
    %v2546 = vpack.c.b16 %v2013, %v2000
    %v2547 = vpack.c.b16 %v2014, %v2001
    %v2548 = vpack.c.b16 %v2015, %v2002
    %v2549 = vpack.c.b16 %v2016, %v2003
    %v2550 = vpack.c.b16 %v2017, %v2004
    %v2551 = vpack.c.b16 %v2018, %v2005
    %v2552 = vpack.c.b16 %v2019, %v2006
    %v2553 = vpack.c.b16 %v2020, %v2007
    %v2554 = vpack.c.b16 %v2034, %v2021
    %v2555 = vpack.c.b16 %v2035, %v2022
    %v2556 = vpack.c.b16 %v2036, %v2023
    %v2557 = vpack.c.b16 %v2037, %v2024
    %v2558 = vpack.c.b16 %v2038, %v2025
    %v2559 = vpack.c.b16 %v2039, %v2026
    %v2560 = vpack.c.b16 %v2040, %v2027
    %v2561 = vpack.c.b16 %v2041, %v2028
    %v2562 = vpack.c.b16 %v2042, %v2029
    %v2563 = vpack.c.b16 %v2043, %v2030
    %v2564 = vpack.c.b16 %v2044, %v2031
    %v2565 = vpack.c.b16 %v2045, %v2032
    %v2566 = vpack.c.b16 %v2046, %v2033
    %v2567 = vpack.c.b16 %v2060, %v2047
    %v2568 = vpack.c.b16 %v2061, %v2048
    %v2569 = vpack.c.b16 %v2062, %v2049
    %v2570 = vpack.c.b16 %v2063, %v2050
    %v2571 = vpack.c.b16 %v2064, %v2051
    %v2572 = vpack.c.b16 %v2065, %v2052
    %v2573 = vpack.c.b16 %v2066, %v2053
    %v2574 = vpack.c.b16 %v2067, %v2054
    %v2575 = vpack.c.b16 %v2068, %v2055
    %v2576 = vpack.c.b16 %v2069, %v2056
    %v2577 = vpack.c.b16 %v2070, %v2057
    %v2578 = vpack.c.b16 %v2071, %v2058
    %v2579 = vpack.c.b16 %v2072, %v2059
    %v2580 = vpack.c.b16 %v2086, %v2073
    %v2581 = vpack.c.b16 %v2087, %v2074
    %v2582 = vpack.c.b16 %v2088, %v2075
    %v2583 = vpack.c.b16 %v2089, %v2076
    %v2584 = vpack.c.b16 %v2090, %v2077
    %v2585 = vpack.c.b16 %v2091, %v2078
    %v2586 = vpack.c.b16 %v2092, %v2079
    %v2587 = vpack.c.b16 %v2093, %v2080
    %v2588 = vpack.c.b16 %v2094, %v2081
    %v2589 = vpack.c.b16 %v2095, %v2082
    %v2590 = vpack.c.b16 %v2096, %v2083
    %v2591 = vpack.c.b16 %v2097, %v2084
    %v2592 = vpack.c.b16 %v2098, %v2085
    %v2593 = vpack.c.b16 %v2112, %v2099
    %v2594 = vpack.c.b16 %v2113, %v2100
    %v2595 = vpack.c.b16 %v2114, %v2101
    %v2596 = vpack.c.b16 %v2115, %v2102
    %v2597 = vpack.c.b16 %v2116, %v2103
    %v2598 = vpack.c.b16 %v2117, %v2104
    %v2599 = vpack.c.b16 %v2118, %v2105
    %v2600 = vpack.c.b16 %v2119, %v2106
    %v2601 = vpack.c.b16 %v2120, %v2107
    %v2602 = vpack.c.b16 %v2121, %v2108
    %v2603 = vpack.c.b16 %v2122, %v2109
    %v2604 = vpack.c.b16 %v2123, %v2110
    %v2605 = vpack.c.b16 %v2124, %v2111
    %v2606 = vpack.c.b16 %v2138, %v2125
    %v2607 = vpack.c.b16 %v2139, %v2126
    %v2608 = vpack.c.b16 %v2140, %v2127
    %v2609 = vpack.c.b16 %v2141, %v2128
    %v2610 = vpack.c.b16 %v2142, %v2129
    %v2611 = vpack.c.b16 %v2143, %v2130
    %v2612 = vpack.c.b16 %v2144, %v2131
    %v2613 = vpack.c.b16 %v2145, %v2132
    %v2614 = vpack.c.b16 %v2146, %v2133
    %v2615 = vpack.c.b16 %v2147, %v2134
    %v2616 = vpack.c.b16 %v2148, %v2135
    %v2617 = vpack.c.b16 %v2149, %v2136
    %v2618 = vpack.c.b16 %v2150, %v2137
    %v2619 = vpack.c.b16 %v2164, %v2151
    %v2620 = vpack.c.b16 %v2165, %v2152
    %v2621 = vpack.c.b16 %v2166, %v2153
    %v2622 = vpack.c.b16 %v2167, %v2154
    %v2623 = vpack.c.b16 %v2168, %v2155
    %v2624 = vpack.c.b16 %v2169, %v2156
    %v2625 = vpack.c.b16 %v2170, %v2157
    %v2626 = vpack.c.b16 %v2171, %v2158
    %v2627 = vpack.c.b16 %v2172, %v2159
    %v2628 = vpack.c.b16 %v2173, %v2160
    %v2629 = vpack.c.b16 %v2174, %v2161
    %v2630 = vpack.c.b16 %v2175, %v2162
    %v2631 = vpack.c.b16 %v2176, %v2163
    %v2632 = vpack.c.b16 %v2190, %v2177
    %v2633 = vpack.c.b16 %v2191, %v2178
    %v2634 = vpack.c.b16 %v2192, %v2179
    %v2635 = vpack.c.b16 %v2193, %v2180
    %v2636 = vpack.c.b16 %v2194, %v2181
    %v2637 = vpack.c.b16 %v2195, %v2182
    %v2638 = vpack.c.b16 %v2196, %v2183
    %v2639 = vpack.c.b16 %v2197, %v2184
    %v2640 = vpack.c.b16 %v2198, %v2185
    %v2641 = vpack.c.b16 %v2199, %v2186
    %v2642 = vpack.c.b16 %v2200, %v2187
    %v2643 = vpack.c.b16 %v2201, %v2188
    %v2644 = vpack.c.b16 %v2202, %v2189
    %v2645 = vpack.c.b16 %v2216, %v2203
    %v2646 = vpack.c.b16 %v2217, %v2204
    %v2647 = vpack.c.b16 %v2218, %v2205
    %v2648 = vpack.c.b16 %v2219, %v2206
    %v2649 = vpack.c.b16 %v2220, %v2207
    %v2650 = vpack.c.b16 %v2221, %v2208
    %v2651 = vpack.c.b16 %v2222, %v2209
    %v2652 = vpack.c.b16 %v2223, %v2210
    %v2653 = vpack.c.b16 %v2224, %v2211
    %v2654 = vpack.c.b16 %v2225, %v2212
    %v2655 = vpack.c.b16 %v2226, %v2213
    %v2656 = vpack.c.b16 %v2227, %v2214
    %v2657 = vpack.c.b16 %v2228, %v2215
    %v2658 = vpack.c.b16 %v2242, %v2229
    %v2659 = vpack.c.b16 %v2243, %v2230
    %v2660 = vpack.c.b16 %v2244, %v2231
    %v2661 = vpack.c.b16 %v2245, %v2232
    %v2662 = vpack.c.b16 %v2246, %v2233
    %v2663 = vpack.c.b16 %v2247, %v2234
    %v2664 = vpack.c.b16 %v2248, %v2235
    %v2665 = vpack.c.b16 %v2249, %v2236
    %v2666 = vpack.c.b16 %v2250, %v2237
    %v2667 = vpack.c.b16 %v2251, %v2238
    %v2668 = vpack.c.b16 %v2252, %v2239
    %v2669 = vpack.c.b16 %v2253, %v2240
    %v2670 = vpack.c.b16 %v2254, %v2241
    %3087 = vmatprep.subr.bf16.mxu0 %v2256
    %3088 = vmatpush1.bf16.msra.mxu0 %v2255
    %3089 = vmatprep.subr.bf16.mxu0 %v2269
    %3090 = vmatpush1.bf16.msra.mxu0 %v2268
    %3091 = vmatprep.subr.bf16.mxu0 %v2282
    %3092 = vmatpush1.bf16.msra.mxu0 %v2281
    %3093 = vmatprep.subr.bf16.mxu0 %v2295
    %3094 = vmatpush1.bf16.msra.mxu0 %v2294
    %3095 = vmatprep.subr.bf16.mxu0 %v2308
    %3096 = vmatpush1.bf16.msra.mxu0 %v2307
    %3097 = vmatprep.subr.bf16.mxu0 %v2321
    %3098 = vmatpush1.bf16.msra.mxu0 %v2320
    %3099 = vmatprep.subr.bf16.mxu0 %v2334
    %3100 = vmatpush1.bf16.msra.mxu0 %v2333
    %3101 = vmatprep.subr.bf16.mxu0 %v2347
    %3102 = vmatpush1.bf16.msra.mxu0 %v2346
    %3103 = vmatprep.subr.bf16.mxu0 %v2360
    %3104 = vmatpush1.bf16.msra.mxu0 %v2359
    %3105 = vmatprep.subr.bf16.mxu0 %v2373
    %3106 = vmatpush1.bf16.msra.mxu0 %v2372
    %3107 = vmatprep.subr.bf16.mxu0 %v2386
    %3108 = vmatpush1.bf16.msra.mxu0 %v2385
    %3109 = vmatprep.subr.bf16.mxu0 %v2399
    %3110 = vmatpush1.bf16.msra.mxu0 %v2398
    %3111 = vmatprep.subr.bf16.mxu0 %v2412
    %3112 = vmatpush1.bf16.msra.mxu0 %v2411
    %3113 = vmatprep.subr.bf16.mxu0 %v2425
    %3114 = vmatpush1.bf16.msra.mxu0 %v2424
    %3115 = vmatprep.subr.bf16.mxu0 %v2438
    %3116 = vmatpush1.bf16.msra.mxu0 %v2437
    %3117 = vmatprep.subr.bf16.mxu0 %v2451
    %3118 = vmatpush1.bf16.msra.mxu0 %v2450
    %3119 = vmatprep.mubr.bf16.mxu0 %v903
    %3120 = vmatmul.mubr.bf16.gmra.mrb[0].mxu0 %v902
    %v3121 = vpop.f32.mrb[0].mxu0
    %v3122 = vadd.f32 %v913, %v3121
    %v3123 = vpop.f32.mrb[0].mxu0
    %v3124 = vadd.f32 %v917, %v3123
    %v3125 = vpop.f32.mrb[0].mxu0
    %v3126 = vpop.f32.mrb[0].mxu0
    %3127 = vdwg.mxu0
    %3128 = vmatprep.subr.bf16.mxu0 %v2464
    %3129 = vmatpush1.bf16.msra.mxu0 %v2463
    %3130 = vmatprep.subr.bf16.mxu0 %v2477
    %3131 = vmatpush1.bf16.msra.mxu0 %v2476
    %3132 = vmatprep.subr.bf16.mxu0 %v2490
    %3133 = vmatpush1.bf16.msra.mxu0 %v2489
    %3134 = vmatprep.subr.bf16.mxu0 %v2503
    %3135 = vmatpush1.bf16.msra.mxu0 %v2502
    %3136 = vmatprep.subr.bf16.mxu0 %v2516
    %3137 = vmatpush1.bf16.msra.mxu0 %v2515
    %3138 = vmatprep.subr.bf16.mxu0 %v2529
    %3139 = vmatpush1.bf16.msra.mxu0 %v2528
    %3140 = vmatprep.subr.bf16.mxu0 %v2542
    %3141 = vmatpush1.bf16.msra.mxu0 %v2541
    %3142 = vmatprep.subr.bf16.mxu0 %v2555
    %3143 = vmatpush1.bf16.msra.mxu0 %v2554
    %3144 = vmatprep.subr.bf16.mxu0 %v2568
    %3145 = vmatpush1.bf16.msra.mxu0 %v2567
    %3146 = vmatprep.subr.bf16.mxu0 %v2581
    %3147 = vmatpush1.bf16.msra.mxu0 %v2580
    %3148 = vmatprep.subr.bf16.mxu0 %v2594
    %3149 = vmatpush1.bf16.msra.mxu0 %v2593
    %3150 = vmatprep.subr.bf16.mxu0 %v2607
    %3151 = vmatpush1.bf16.msra.mxu0 %v2606
    %3152 = vmatprep.subr.bf16.mxu0 %v2620
    %3153 = vmatpush1.bf16.msra.mxu0 %v2619
    %3154 = vmatprep.subr.bf16.mxu0 %v2633
    %3155 = vmatpush1.bf16.msra.mxu0 %v2632
    %3156 = vmatprep.subr.bf16.mxu0 %v2646
    %3157 = vmatpush1.bf16.msra.mxu0 %v2645
    %3158 = vmatprep.subr.bf16.mxu0 %v2659
    %3159 = vmatpush1.bf16.msra.mxu0 %v2658
    %3160 = vmatprep.mubr.bf16.mxu0 %v905
    %3161 = vmatmul.mubr.bf16.gmra.mrb[0].mxu0 %v904
    %v3162 = vpop.f32.mrb[0].mxu0
    %v3163 = vadd.f32 %v3122, %v3162
    %v3164 = vpop.f32.mrb[0].mxu0
    %v3165 = vadd.f32 %v3124, %v3164
    %v3166 = vpop.f32.mrb[0].mxu0
    %v3167 = vpop.f32.mrb[0].mxu0
    %3168 = vdwg.mxu0
    %3169 = vmatprep.subr.bf16.mxu0 %v2258
    %3170 = vmatpush1.bf16.msra.mxu0 %v2257
    %3171 = vmatprep.subr.bf16.mxu0 %v2271
    %3172 = vmatpush1.bf16.msra.mxu0 %v2270
    %3173 = vmatprep.subr.bf16.mxu0 %v2284
    %3174 = vmatpush1.bf16.msra.mxu0 %v2283
    %3175 = vmatprep.subr.bf16.mxu0 %v2297
    %3176 = vmatpush1.bf16.msra.mxu0 %v2296
    %3177 = vmatprep.subr.bf16.mxu0 %v2310
    %3178 = vmatpush1.bf16.msra.mxu0 %v2309
    %3179 = vmatprep.subr.bf16.mxu0 %v2323
    %3180 = vmatpush1.bf16.msra.mxu0 %v2322
    %3181 = vmatprep.subr.bf16.mxu0 %v2336
    %3182 = vmatpush1.bf16.msra.mxu0 %v2335
    %3183 = vmatprep.subr.bf16.mxu0 %v2349
    %3184 = vmatpush1.bf16.msra.mxu0 %v2348
    %3185 = vmatprep.subr.bf16.mxu0 %v2362
    %3186 = vmatpush1.bf16.msra.mxu0 %v2361
    %3187 = vmatprep.subr.bf16.mxu0 %v2375
    %3188 = vmatpush1.bf16.msra.mxu0 %v2374
    %3189 = vmatprep.subr.bf16.mxu0 %v2388
    %3190 = vmatpush1.bf16.msra.mxu0 %v2387
    %3191 = vmatprep.subr.bf16.mxu0 %v2401
    %3192 = vmatpush1.bf16.msra.mxu0 %v2400
    %3193 = vmatprep.subr.bf16.mxu0 %v2414
    %3194 = vmatpush1.bf16.msra.mxu0 %v2413
    %3195 = vmatprep.subr.bf16.mxu0 %v2427
    %3196 = vmatpush1.bf16.msra.mxu0 %v2426
    %3197 = vmatprep.subr.bf16.mxu0 %v2440
    %3198 = vmatpush1.bf16.msra.mxu0 %v2439
    %3199 = vmatprep.subr.bf16.mxu0 %v2453
    %3200 = vmatpush1.bf16.msra.mxu0 %v2452
    %3201 = vmatprep.mubr.bf16.mxu0 %v903
    %3202 = vmatmul.mubr.bf16.gmra.mrb[0].mxu0 %v902
    %v3203 = vpop.f32.mrb[0].mxu0
    %v3204 = vadd.f32 %v921, %v3203
    %v3205 = vpop.f32.mrb[0].mxu0
    %v3206 = vadd.f32 %v925, %v3205
    %v3207 = vpop.f32.mrb[0].mxu0
    %v3208 = vpop.f32.mrb[0].mxu0
    %3209 = vdwg.mxu0
    %3210 = vmatprep.subr.bf16.mxu0 %v2466
    %3211 = vmatpush1.bf16.msra.mxu0 %v2465
    %3212 = vmatprep.subr.bf16.mxu0 %v2479
    %3213 = vmatpush1.bf16.msra.mxu0 %v2478
    %3214 = vmatprep.subr.bf16.mxu0 %v2492
    %3215 = vmatpush1.bf16.msra.mxu0 %v2491
    %3216 = vmatprep.subr.bf16.mxu0 %v2505
    %3217 = vmatpush1.bf16.msra.mxu0 %v2504
    %3218 = vmatprep.subr.bf16.mxu0 %v2518
    %3219 = vmatpush1.bf16.msra.mxu0 %v2517
    %3220 = vmatprep.subr.bf16.mxu0 %v2531
    %3221 = vmatpush1.bf16.msra.mxu0 %v2530
    %3222 = vmatprep.subr.bf16.mxu0 %v2544
    %3223 = vmatpush1.bf16.msra.mxu0 %v2543
    %3224 = vmatprep.subr.bf16.mxu0 %v2557
    %3225 = vmatpush1.bf16.msra.mxu0 %v2556
    %3226 = vmatprep.subr.bf16.mxu0 %v2570
    %3227 = vmatpush1.bf16.msra.mxu0 %v2569
    %3228 = vmatprep.subr.bf16.mxu0 %v2583
    %3229 = vmatpush1.bf16.msra.mxu0 %v2582
    %3230 = vmatprep.subr.bf16.mxu0 %v2596
    %3231 = vmatpush1.bf16.msra.mxu0 %v2595
    %3232 = vmatprep.subr.bf16.mxu0 %v2609
    %3233 = vmatpush1.bf16.msra.mxu0 %v2608
    %3234 = vmatprep.subr.bf16.mxu0 %v2622
    %3235 = vmatpush1.bf16.msra.mxu0 %v2621
    %3236 = vmatprep.subr.bf16.mxu0 %v2635
    %3237 = vmatpush1.bf16.msra.mxu0 %v2634
    %3238 = vmatprep.subr.bf16.mxu0 %v2648
    %3239 = vmatpush1.bf16.msra.mxu0 %v2647
    %3240 = vmatprep.subr.bf16.mxu0 %v2661
    %3241 = vmatpush1.bf16.msra.mxu0 %v2660
    %3242 = vmatprep.mubr.bf16.mxu0 %v905
    %3243 = vmatmul.mubr.bf16.gmra.mrb[0].mxu0 %v904
    %v3244 = vpop.f32.mrb[0].mxu0
    %v3245 = vadd.f32 %v3204, %v3244
    %v3246 = vpop.f32.mrb[0].mxu0
    %v3247 = vadd.f32 %v3206, %v3246
    %v3248 = vpop.f32.mrb[0].mxu0
    %v3249 = vpop.f32.mrb[0].mxu0
    %3250 = vdwg.mxu0
    %3251 = vmatprep.subr.bf16.mxu0 %v2260
    %3252 = vmatpush1.bf16.msra.mxu0 %v2259
    %3253 = vmatprep.subr.bf16.mxu0 %v2273
    %3254 = vmatpush1.bf16.msra.mxu0 %v2272
    %3255 = vmatprep.subr.bf16.mxu0 %v2286
    %3256 = vmatpush1.bf16.msra.mxu0 %v2285
    %3257 = vmatprep.subr.bf16.mxu0 %v2299
    %3258 = vmatpush1.bf16.msra.mxu0 %v2298
    %3259 = vmatprep.subr.bf16.mxu0 %v2312
    %3260 = vmatpush1.bf16.msra.mxu0 %v2311
    %3261 = vmatprep.subr.bf16.mxu0 %v2325
    %3262 = vmatpush1.bf16.msra.mxu0 %v2324
    %3263 = vmatprep.subr.bf16.mxu0 %v2338
    %3264 = vmatpush1.bf16.msra.mxu0 %v2337
    %3265 = vmatprep.subr.bf16.mxu0 %v2351
    %3266 = vmatpush1.bf16.msra.mxu0 %v2350
    %3267 = vmatprep.subr.bf16.mxu0 %v2364
    %3268 = vmatpush1.bf16.msra.mxu0 %v2363
    %3269 = vmatprep.subr.bf16.mxu0 %v2377
    %3270 = vmatpush1.bf16.msra.mxu0 %v2376
    %3271 = vmatprep.subr.bf16.mxu0 %v2390
    %3272 = vmatpush1.bf16.msra.mxu0 %v2389
    %3273 = vmatprep.subr.bf16.mxu0 %v2403
    %3274 = vmatpush1.bf16.msra.mxu0 %v2402
    %3275 = vmatprep.subr.bf16.mxu0 %v2416
    %3276 = vmatpush1.bf16.msra.mxu0 %v2415
    %3277 = vmatprep.subr.bf16.mxu0 %v2429
    %3278 = vmatpush1.bf16.msra.mxu0 %v2428
    %3279 = vmatprep.subr.bf16.mxu0 %v2442
    %3280 = vmatpush1.bf16.msra.mxu0 %v2441
    %3281 = vmatprep.subr.bf16.mxu0 %v2455
    %3282 = vmatpush1.bf16.msra.mxu0 %v2454
    %3283 = vmatprep.mubr.bf16.mxu0 %v903
    %3284 = vmatmul.mubr.bf16.gmra.mrb[0].mxu0 %v902
    %v3285 = vpop.f32.mrb[0].mxu0
    %v3286 = vadd.f32 %v929, %v3285
    %v3287 = vpop.f32.mrb[0].mxu0
    %v3288 = vadd.f32 %v933, %v3287
    %v3289 = vpop.f32.mrb[0].mxu0
    %v3290 = vpop.f32.mrb[0].mxu0
    %3291 = vdwg.mxu0
    %3292 = vmatprep.subr.bf16.mxu0 %v2468
    %3293 = vmatpush1.bf16.msra.mxu0 %v2467
    %3294 = vmatprep.subr.bf16.mxu0 %v2481
    %3295 = vmatpush1.bf16.msra.mxu0 %v2480
    %3296 = vmatprep.subr.bf16.mxu0 %v2494
    %3297 = vmatpush1.bf16.msra.mxu0 %v2493
    %3298 = vmatprep.subr.bf16.mxu0 %v2507
    %3299 = vmatpush1.bf16.msra.mxu0 %v2506
    %3300 = vmatprep.subr.bf16.mxu0 %v2520
    %3301 = vmatpush1.bf16.msra.mxu0 %v2519
    %3302 = vmatprep.subr.bf16.mxu0 %v2533
    %3303 = vmatpush1.bf16.msra.mxu0 %v2532
    %3304 = vmatprep.subr.bf16.mxu0 %v2546
    %3305 = vmatpush1.bf16.msra.mxu0 %v2545
    %3306 = vmatprep.subr.bf16.mxu0 %v2559
    %3307 = vmatpush1.bf16.msra.mxu0 %v2558
    %3308 = vmatprep.subr.bf16.mxu0 %v2572
    %3309 = vmatpush1.bf16.msra.mxu0 %v2571
    %3310 = vmatprep.subr.bf16.mxu0 %v2585
    %3311 = vmatpush1.bf16.msra.mxu0 %v2584
    %3312 = vmatprep.subr.bf16.mxu0 %v2598
    %3313 = vmatpush1.bf16.msra.mxu0 %v2597
    %3314 = vmatprep.subr.bf16.mxu0 %v2611
    %3315 = vmatpush1.bf16.msra.mxu0 %v2610
    %3316 = vmatprep.subr.bf16.mxu0 %v2624
    %3317 = vmatpush1.bf16.msra.mxu0 %v2623
    %3318 = vmatprep.subr.bf16.mxu0 %v2637
    %3319 = vmatpush1.bf16.msra.mxu0 %v2636
    %3320 = vmatprep.subr.bf16.mxu0 %v2650
    %3321 = vmatpush1.bf16.msra.mxu0 %v2649
    %3322 = vmatprep.subr.bf16.mxu0 %v2663
    %3323 = vmatpush1.bf16.msra.mxu0 %v2662
    %3324 = vmatprep.mubr.bf16.mxu0 %v905
    %3325 = vmatmul.mubr.bf16.gmra.mrb[0].mxu0 %v904
    %v3326 = vpop.f32.mrb[0].mxu0
    %v3327 = vadd.f32 %v3286, %v3326
    %v3328 = vpop.f32.mrb[0].mxu0
    %v3329 = vadd.f32 %v3288, %v3328
    %v3330 = vpop.f32.mrb[0].mxu0
    %v3331 = vpop.f32.mrb[0].mxu0
    %3332 = vdwg.mxu0
    %3333 = vmatprep.subr.bf16.mxu0 %v2262
    %3334 = vmatpush1.bf16.msra.mxu0 %v2261
    %3335 = vmatprep.subr.bf16.mxu0 %v2275
    %3336 = vmatpush1.bf16.msra.mxu0 %v2274
    %3337 = vmatprep.subr.bf16.mxu0 %v2288
    %3338 = vmatpush1.bf16.msra.mxu0 %v2287
    %3339 = vmatprep.subr.bf16.mxu0 %v2301
    %3340 = vmatpush1.bf16.msra.mxu0 %v2300
    %3341 = vmatprep.subr.bf16.mxu0 %v2314
    %3342 = vmatpush1.bf16.msra.mxu0 %v2313
    %3343 = vmatprep.subr.bf16.mxu0 %v2327
    %3344 = vmatpush1.bf16.msra.mxu0 %v2326
    %3345 = vmatprep.subr.bf16.mxu0 %v2340
    %3346 = vmatpush1.bf16.msra.mxu0 %v2339
    %3347 = vmatprep.subr.bf16.mxu0 %v2353
    %3348 = vmatpush1.bf16.msra.mxu0 %v2352
    %3349 = vmatprep.subr.bf16.mxu0 %v2366
    %3350 = vmatpush1.bf16.msra.mxu0 %v2365
    %3351 = vmatprep.subr.bf16.mxu0 %v2379
    %3352 = vmatpush1.bf16.msra.mxu0 %v2378
    %3353 = vmatprep.subr.bf16.mxu0 %v2392
    %3354 = vmatpush1.bf16.msra.mxu0 %v2391
    %3355 = vmatprep.subr.bf16.mxu0 %v2405
    %3356 = vmatpush1.bf16.msra.mxu0 %v2404
    %3357 = vmatprep.subr.bf16.mxu0 %v2418
    %3358 = vmatpush1.bf16.msra.mxu0 %v2417
    %3359 = vmatprep.subr.bf16.mxu0 %v2431
    %3360 = vmatpush1.bf16.msra.mxu0 %v2430
    %3361 = vmatprep.subr.bf16.mxu0 %v2444
    %3362 = vmatpush1.bf16.msra.mxu0 %v2443
    %3363 = vmatprep.subr.bf16.mxu0 %v2457
    %3364 = vmatpush1.bf16.msra.mxu0 %v2456
    %3365 = vmatprep.mubr.bf16.mxu0 %v903
    %3366 = vmatmul.mubr.bf16.gmra.mrb[0].mxu0 %v902
    %v3367 = vpop.f32.mrb[0].mxu0
    %v3368 = vadd.f32 %v937, %v3367
    %v3369 = vpop.f32.mrb[0].mxu0
    %v3370 = vadd.f32 %v941, %v3369
    %v3371 = vpop.f32.mrb[0].mxu0
    %v3372 = vpop.f32.mrb[0].mxu0
    %3373 = vdwg.mxu0
    %3374 = vmatprep.subr.bf16.mxu0 %v2470
    %3375 = vmatpush1.bf16.msra.mxu0 %v2469
    %3376 = vmatprep.subr.bf16.mxu0 %v2483
    %3377 = vmatpush1.bf16.msra.mxu0 %v2482
    %3378 = vmatprep.subr.bf16.mxu0 %v2496
    %3379 = vmatpush1.bf16.msra.mxu0 %v2495
    %3380 = vmatprep.subr.bf16.mxu0 %v2509
    %3381 = vmatpush1.bf16.msra.mxu0 %v2508
    %3382 = vmatprep.subr.bf16.mxu0 %v2522
    %3383 = vmatpush1.bf16.msra.mxu0 %v2521
    %3384 = vmatprep.subr.bf16.mxu0 %v2535
    %3385 = vmatpush1.bf16.msra.mxu0 %v2534
    %3386 = vmatprep.subr.bf16.mxu0 %v2548
    %3387 = vmatpush1.bf16.msra.mxu0 %v2547
    %3388 = vmatprep.subr.bf16.mxu0 %v2561
    %3389 = vmatpush1.bf16.msra.mxu0 %v2560
    %3390 = vmatprep.subr.bf16.mxu0 %v2574
    %3391 = vmatpush1.bf16.msra.mxu0 %v2573
    %3392 = vmatprep.subr.bf16.mxu0 %v2587
    %3393 = vmatpush1.bf16.msra.mxu0 %v2586
    %3394 = vmatprep.subr.bf16.mxu0 %v2600
    %3395 = vmatpush1.bf16.msra.mxu0 %v2599
    %3396 = vmatprep.subr.bf16.mxu0 %v2613
    %3397 = vmatpush1.bf16.msra.mxu0 %v2612
    %3398 = vmatprep.subr.bf16.mxu0 %v2626
    %3399 = vmatpush1.bf16.msra.mxu0 %v2625
    %3400 = vmatprep.subr.bf16.mxu0 %v2639
    %3401 = vmatpush1.bf16.msra.mxu0 %v2638
    %3402 = vmatprep.subr.bf16.mxu0 %v2652
    %3403 = vmatpush1.bf16.msra.mxu0 %v2651
    %3404 = vmatprep.subr.bf16.mxu0 %v2665
    %3405 = vmatpush1.bf16.msra.mxu0 %v2664
    %3406 = vmatprep.mubr.bf16.mxu0 %v905
    %3407 = vmatmul.mubr.bf16.gmra.mrb[0].mxu0 %v904
    %v3408 = vpop.f32.mrb[0].mxu0
    %v3409 = vadd.f32 %v3368, %v3408
    %v3410 = vpop.f32.mrb[0].mxu0
    %v3411 = vadd.f32 %v3370, %v3410
    %v3412 = vpop.f32.mrb[0].mxu0
    %v3413 = vpop.f32.mrb[0].mxu0
    %3414 = vdwg.mxu0
    %3415 = vmatprep.subr.bf16.mxu0 %v2264
    %3416 = vmatpush1.bf16.msra.mxu0 %v2263
    %3417 = vmatprep.subr.bf16.mxu0 %v2277
    %3418 = vmatpush1.bf16.msra.mxu0 %v2276
    %3419 = vmatprep.subr.bf16.mxu0 %v2290
    %3420 = vmatpush1.bf16.msra.mxu0 %v2289
    %3421 = vmatprep.subr.bf16.mxu0 %v2303
    %3422 = vmatpush1.bf16.msra.mxu0 %v2302
    %3423 = vmatprep.subr.bf16.mxu0 %v2316
    %3424 = vmatpush1.bf16.msra.mxu0 %v2315
    %3425 = vmatprep.subr.bf16.mxu0 %v2329
    %3426 = vmatpush1.bf16.msra.mxu0 %v2328
    %3427 = vmatprep.subr.bf16.mxu0 %v2342
    %3428 = vmatpush1.bf16.msra.mxu0 %v2341
    %3429 = vmatprep.subr.bf16.mxu0 %v2355
    %3430 = vmatpush1.bf16.msra.mxu0 %v2354
    %3431 = vmatprep.subr.bf16.mxu0 %v2368
    %3432 = vmatpush1.bf16.msra.mxu0 %v2367
    %3433 = vmatprep.subr.bf16.mxu0 %v2381
    %3434 = vmatpush1.bf16.msra.mxu0 %v2380
    %3435 = vmatprep.subr.bf16.mxu0 %v2394
    %3436 = vmatpush1.bf16.msra.mxu0 %v2393
    %3437 = vmatprep.subr.bf16.mxu0 %v2407
    %3438 = vmatpush1.bf16.msra.mxu0 %v2406
    %3439 = vmatprep.subr.bf16.mxu0 %v2420
    %3440 = vmatpush1.bf16.msra.mxu0 %v2419
    %3441 = vmatprep.subr.bf16.mxu0 %v2433
    %3442 = vmatpush1.bf16.msra.mxu0 %v2432
    %3443 = vmatprep.subr.bf16.mxu0 %v2446
    %3444 = vmatpush1.bf16.msra.mxu0 %v2445
    %3445 = vmatprep.subr.bf16.mxu0 %v2459
    %3446 = vmatpush1.bf16.msra.mxu0 %v2458
    %3447 = vmatprep.mubr.bf16.mxu0 %v903
    %3448 = vmatmul.mubr.bf16.gmra.mrb[0].mxu0 %v902
    %v3449 = vpop.f32.mrb[0].mxu0
    %v3450 = vadd.f32 %v945, %v3449
    %v3451 = vpop.f32.mrb[0].mxu0
    %v3452 = vadd.f32 %v949, %v3451
    %v3453 = vpop.f32.mrb[0].mxu0
    %v3454 = vpop.f32.mrb[0].mxu0
    %3455 = vdwg.mxu0
    %3456 = vmatprep.subr.bf16.mxu0 %v2472
    %3457 = vmatpush1.bf16.msra.mxu0 %v2471
    %3458 = vmatprep.subr.bf16.mxu0 %v2485
    %3459 = vmatpush1.bf16.msra.mxu0 %v2484
    %3460 = vmatprep.subr.bf16.mxu0 %v2498
    %3461 = vmatpush1.bf16.msra.mxu0 %v2497
    %3462 = vmatprep.subr.bf16.mxu0 %v2511
    %3463 = vmatpush1.bf16.msra.mxu0 %v2510
    %3464 = vmatprep.subr.bf16.mxu0 %v2524
    %3465 = vmatpush1.bf16.msra.mxu0 %v2523
    %3466 = vmatprep.subr.bf16.mxu0 %v2537
    %3467 = vmatpush1.bf16.msra.mxu0 %v2536
    %3468 = vmatprep.subr.bf16.mxu0 %v2550
    %3469 = vmatpush1.bf16.msra.mxu0 %v2549
    %3470 = vmatprep.subr.bf16.mxu0 %v2563
    %3471 = vmatpush1.bf16.msra.mxu0 %v2562
    %3472 = vmatprep.subr.bf16.mxu0 %v2576
    %3473 = vmatpush1.bf16.msra.mxu0 %v2575
    %3474 = vmatprep.subr.bf16.mxu0 %v2589
    %3475 = vmatpush1.bf16.msra.mxu0 %v2588
    %3476 = vmatprep.subr.bf16.mxu0 %v2602
    %3477 = vmatpush1.bf16.msra.mxu0 %v2601
    %3478 = vmatprep.subr.bf16.mxu0 %v2615
    %3479 = vmatpush1.bf16.msra.mxu0 %v2614
    %3480 = vmatprep.subr.bf16.mxu0 %v2628
    %3481 = vmatpush1.bf16.msra.mxu0 %v2627
    %3482 = vmatprep.subr.bf16.mxu0 %v2641
    %3483 = vmatpush1.bf16.msra.mxu0 %v2640
    %3484 = vmatprep.subr.bf16.mxu0 %v2654
    %3485 = vmatpush1.bf16.msra.mxu0 %v2653
    %3486 = vmatprep.subr.bf16.mxu0 %v2667
    %3487 = vmatpush1.bf16.msra.mxu0 %v2666
    %3488 = vmatprep.mubr.bf16.mxu0 %v905
    %3489 = vmatmul.mubr.bf16.gmra.mrb[0].mxu0 %v904
    %v3490 = vpop.f32.mrb[0].mxu0
    %v3491 = vadd.f32 %v3450, %v3490
    %v3492 = vpop.f32.mrb[0].mxu0
    %v3493 = vadd.f32 %v3452, %v3492
    %v3494 = vpop.f32.mrb[0].mxu0
    %v3495 = vpop.f32.mrb[0].mxu0
    %3496 = vdwg.mxu0
    %3497 = vmatprep.subr.bf16.mxu0 %v2266
    %3498 = vmatpush1.bf16.msra.mxu0 %v2265
    %3499 = vmatprep.subr.bf16.mxu0 %v2279
    %3500 = vmatpush1.bf16.msra.mxu0 %v2278
    %3501 = vmatprep.subr.bf16.mxu0 %v2292
    %3502 = vmatpush1.bf16.msra.mxu0 %v2291
    %3503 = vmatprep.subr.bf16.mxu0 %v2305
    %3504 = vmatpush1.bf16.msra.mxu0 %v2304
    %3505 = vmatprep.subr.bf16.mxu0 %v2318
    %3506 = vmatpush1.bf16.msra.mxu0 %v2317
    %3507 = vmatprep.subr.bf16.mxu0 %v2331
    %3508 = vmatpush1.bf16.msra.mxu0 %v2330
    %3509 = vmatprep.subr.bf16.mxu0 %v2344
    %3510 = vmatpush1.bf16.msra.mxu0 %v2343
    %3511 = vmatprep.subr.bf16.mxu0 %v2357
    %3512 = vmatpush1.bf16.msra.mxu0 %v2356
    %3513 = vmatprep.subr.bf16.mxu0 %v2370
    %3514 = vmatpush1.bf16.msra.mxu0 %v2369
    %3515 = vmatprep.subr.bf16.mxu0 %v2383
    %3516 = vmatpush1.bf16.msra.mxu0 %v2382
    %3517 = vmatprep.subr.bf16.mxu0 %v2396
    %3518 = vmatpush1.bf16.msra.mxu0 %v2395
    %3519 = vmatprep.subr.bf16.mxu0 %v2409
    %3520 = vmatpush1.bf16.msra.mxu0 %v2408
    %3521 = vmatprep.subr.bf16.mxu0 %v2422
    %3522 = vmatpush1.bf16.msra.mxu0 %v2421
    %3523 = vmatprep.subr.bf16.mxu0 %v2435
    %3524 = vmatpush1.bf16.msra.mxu0 %v2434
    %3525 = vmatprep.subr.bf16.mxu0 %v2448
    %3526 = vmatpush1.bf16.msra.mxu0 %v2447
    %3527 = vmatprep.subr.bf16.mxu0 %v2461
    %3528 = vmatpush1.bf16.msra.mxu0 %v2460
    %3529 = vmatprep.mubr.bf16.mxu0 %v903
    %3530 = vmatmul.mubr.bf16.gmra.mrb[0].mxu0 %v902
    %v3531 = vpop.f32.mrb[0].mxu0
    %v3532 = vadd.f32 %v953, %v3531
    %v3533 = vpop.f32.mrb[0].mxu0
    %v3534 = vadd.f32 %v957, %v3533
    %v3535 = vpop.f32.mrb[0].mxu0
    %v3536 = vpop.f32.mrb[0].mxu0
    %3537 = vdwg.mxu0
    %3538 = vmatprep.subr.bf16.mxu0 %v2474
    %3539 = vmatpush1.bf16.msra.mxu0 %v2473
    %3540 = vmatprep.subr.bf16.mxu0 %v2487
    %3541 = vmatpush1.bf16.msra.mxu0 %v2486
    %3542 = vmatprep.subr.bf16.mxu0 %v2500
    %3543 = vmatpush1.bf16.msra.mxu0 %v2499
    %3544 = vmatprep.subr.bf16.mxu0 %v2513
    %3545 = vmatpush1.bf16.msra.mxu0 %v2512
    %3546 = vmatprep.subr.bf16.mxu0 %v2526
    %3547 = vmatpush1.bf16.msra.mxu0 %v2525
    %3548 = vmatprep.subr.bf16.mxu0 %v2539
    %3549 = vmatpush1.bf16.msra.mxu0 %v2538
    %3550 = vmatprep.subr.bf16.mxu0 %v2552
    %3551 = vmatpush1.bf16.msra.mxu0 %v2551
    %3552 = vmatprep.subr.bf16.mxu0 %v2565
    %3553 = vmatpush1.bf16.msra.mxu0 %v2564
    %3554 = vmatprep.subr.bf16.mxu0 %v2578
    %3555 = vmatpush1.bf16.msra.mxu0 %v2577
    %3556 = vmatprep.subr.bf16.mxu0 %v2591
    %3557 = vmatpush1.bf16.msra.mxu0 %v2590
    %3558 = vmatprep.subr.bf16.mxu0 %v2604
    %3559 = vmatpush1.bf16.msra.mxu0 %v2603
    %3560 = vmatprep.subr.bf16.mxu0 %v2617
    %3561 = vmatpush1.bf16.msra.mxu0 %v2616
    %3562 = vmatprep.subr.bf16.mxu0 %v2630
    %3563 = vmatpush1.bf16.msra.mxu0 %v2629
    %3564 = vmatprep.subr.bf16.mxu0 %v2643
    %3565 = vmatpush1.bf16.msra.mxu0 %v2642
    %3566 = vmatprep.subr.bf16.mxu0 %v2656
    %3567 = vmatpush1.bf16.msra.mxu0 %v2655
    %3568 = vmatprep.subr.bf16.mxu0 %v2669
    %3569 = vmatpush1.bf16.msra.mxu0 %v2668
    %3570 = vmatprep.mubr.bf16.mxu0 %v905
    %3571 = vmatmul.mubr.bf16.gmra.mrb[0].mxu0 %v904
    %v3572 = vpop.f32.mrb[0].mxu0
    %v3573 = vadd.f32 %v3532, %v3572
    %v3574 = vpop.f32.mrb[0].mxu0
    %v3575 = vadd.f32 %v3534, %v3574
    %v3576 = vpop.f32.mrb[0].mxu0
    %v3577 = vpop.f32.mrb[0].mxu0
    %3578 = vdwg.mxu0
    %3579 = vmatprep.subr.bf16.mxu0 0
    %3580 = vmatpush1.bf16.msra.mxu0 %v2267
    %3581 = vmatprep.subr.bf16.mxu0 0
    %3582 = vmatpush1.bf16.msra.mxu0 %v2280
    %3583 = vmatprep.subr.bf16.mxu0 0
    %3584 = vmatpush1.bf16.msra.mxu0 %v2293
    %3585 = vmatprep.subr.bf16.mxu0 0
    %3586 = vmatpush1.bf16.msra.mxu0 %v2306
    %3587 = vmatprep.subr.bf16.mxu0 0
    %3588 = vmatpush1.bf16.msra.mxu0 %v2319
    %3589 = vmatprep.subr.bf16.mxu0 0
    %3590 = vmatpush1.bf16.msra.mxu0 %v2332
    %3591 = vmatprep.subr.bf16.mxu0 0
    %3592 = vmatpush1.bf16.msra.mxu0 %v2345
    %3593 = vmatprep.subr.bf16.mxu0 0
    %3594 = vmatpush1.bf16.msra.mxu0 %v2358
    %3595 = vmatprep.subr.bf16.mxu0 0
    %3596 = vmatpush1.bf16.msra.mxu0 %v2371
    %3597 = vmatprep.subr.bf16.mxu0 0
    %3598 = vmatpush1.bf16.msra.mxu0 %v2384
    %3599 = vmatprep.subr.bf16.mxu0 0
    %3600 = vmatpush1.bf16.msra.mxu0 %v2397
    %3601 = vmatprep.subr.bf16.mxu0 0
    %3602 = vmatpush1.bf16.msra.mxu0 %v2410
    %3603 = vmatprep.subr.bf16.mxu0 0
    %3604 = vmatpush1.bf16.msra.mxu0 %v2423
    %3605 = vmatprep.subr.bf16.mxu0 0
    %3606 = vmatpush1.bf16.msra.mxu0 %v2436
    %3607 = vmatprep.subr.bf16.mxu0 0
    %3608 = vmatpush1.bf16.msra.mxu0 %v2449
    %3609 = vmatprep.subr.bf16.mxu0 0
    %3610 = vmatpush1.bf16.msra.mxu0 %v2462
    %3611 = vmatprep.mubr.bf16.mxu0 %v903
    %3612 = vmatmul.mubr.bf16.gmra.mrb[0].mxu0 %v902
    %v3613 = vpop.f32.mrb[0].mxu0
    %v3614 = vadd.f32 %v961, %v3613
    %v3615 = vpop.f32.mrb[0].mxu0
    %v3616 = vpop.f32.mrb[0].mxu0
    %v3617 = vpop.f32.mrb[0].mxu0
    %3618 = vdwg.mxu0
    %3619 = vmatprep.subr.bf16.mxu0 0
    %3620 = vmatpush1.bf16.msra.mxu0 %v2475
    %3621 = vmatprep.subr.bf16.mxu0 0
    %3622 = vmatpush1.bf16.msra.mxu0 %v2488
    %3623 = vmatprep.subr.bf16.mxu0 0
    %3624 = vmatpush1.bf16.msra.mxu0 %v2501
    %3625 = vmatprep.subr.bf16.mxu0 0
    %3626 = vmatpush1.bf16.msra.mxu0 %v2514
    %3627 = vmatprep.subr.bf16.mxu0 0
    %3628 = vmatpush1.bf16.msra.mxu0 %v2527
    %3629 = vmatprep.subr.bf16.mxu0 0
    %3630 = vmatpush1.bf16.msra.mxu0 %v2540
    %3631 = vmatprep.subr.bf16.mxu0 0
    %3632 = vmatpush1.bf16.msra.mxu0 %v2553
    %3633 = vmatprep.subr.bf16.mxu0 0
    %3634 = vmatpush1.bf16.msra.mxu0 %v2566
    %3635 = vmatprep.subr.bf16.mxu0 0
    %3636 = vmatpush1.bf16.msra.mxu0 %v2579
    %3637 = vmatprep.subr.bf16.mxu0 0
    %3638 = vmatpush1.bf16.msra.mxu0 %v2592
    %3639 = vmatprep.subr.bf16.mxu0 0
    %3640 = vmatpush1.bf16.msra.mxu0 %v2605
    %3641 = vmatprep.subr.bf16.mxu0 0
    %3642 = vmatpush1.bf16.msra.mxu0 %v2618
    %3643 = vmatprep.subr.bf16.mxu0 0
    %3644 = vmatpush1.bf16.msra.mxu0 %v2631
    %3645 = vmatprep.subr.bf16.mxu0 0
    %3646 = vmatpush1.bf16.msra.mxu0 %v2644
    %3647 = vmatprep.subr.bf16.mxu0 0
    %3648 = vmatpush1.bf16.msra.mxu0 %v2657
    %3649 = vmatprep.subr.bf16.mxu0 0
    %3650 = vmatpush1.bf16.msra.mxu0 %v2670
    %3651 = vmatprep.mubr.bf16.mxu0 %v905
    %3652 = vmatmul.mubr.bf16.gmra.mrb[0].mxu0 %v904
    %v3653 = vpop.f32.mrb[0].mxu0
    %v3654 = vadd.f32 %v3614, %v3653
    %v3655 = vpop.f32.mrb[0].mxu0
    %v3656 = vpop.f32.mrb[0].mxu0
    %v3657 = vpop.f32.mrb[0].mxu0
    %3658 = vdwg.mxu0
    %v3659 = vlaneseq
    %v3660 = vand.u32 %v3659, 127
    %vm3661 = vcmp.lt.s32.totalorder %v3660, 64
    %v3662 = vsel %vm3661, %v3654, inf
    %3663 = vmin.xlane.f32.xlu0 %v3662
    %v3664 = vpop.xlane.xlu0 %3663
    %v3665 = vrot.slane %v3664, 4
    %v3666 = vmin.f32 %v3664, %v3665
    %v3667 = vrot.slane %v3666, 2
    %v3668 = vmin.f32 %v3666, %v3667
    %v3669 = vrot.slane %v3668, 1
    %v3670 = vmin.f32 %v3668, %v3669
    %s3671 = vtos %v3670
    %v3672 = vsel %vm3661, %v3654, -inf
    %3673 = vmax.xlane.f32.xlu0 %v3672
    %v3674 = vpop.xlane.xlu0 %3673
    %v3675 = vrot.slane %v3674, 4
    %v3676 = vmax.f32 %v3674, %v3675
    %v3677 = vrot.slane %v3676, 2
    %v3678 = vmax.f32 %v3676, %v3677
    %v3679 = vrot.slane %v3678, 1
    %v3680 = vmax.f32 %v3678, %v3679
    %s3681 = vtos %v3680
    %v3682 = vmin.f32 %v3163, %v3327
    %v3683 = vmin.f32 %v3165, %v3329
    %v3684 = vmin.f32 %v3245, %v3409
    %v3685 = vmin.f32 %v3247, %v3411
    %v3686 = vmin.f32 %v3682, %v3491
    %v3687 = vmin.f32 %v3683, %v3493
    %v3688 = vmin.f32 %v3684, %v3573
    %v3689 = vmin.f32 %v3685, %v3575
    %v3690 = vmin.f32 %v3686, %v3687
    %v3691 = vmin.f32 %v3688, %v3689
    %v3692 = vmin.f32 %v3690, %v3691
    %3693 = vmin.xlane.f32.xlu0 %v3692
    %v3694 = vpop.xlane.xlu0 %3693
    %v3695 = vrot.slane %v3694, 4
    %v3696 = vmin.f32 %v3694, %v3695
    %v3697 = vrot.slane %v3696, 2
    %v3698 = vmin.f32 %v3696, %v3697
    %v3699 = vrot.slane %v3698, 1
    %v3700 = vmin.f32 %v3698, %v3699
    %s3701 = vtos %v3700
    %s3702 = smin.f32 %s3671, %s3701
    %v3703 = vmax.f32 %v3163, %v3327
    %v3704 = vmax.f32 %v3165, %v3329
    %v3705 = vmax.f32 %v3245, %v3409
    %v3706 = vmax.f32 %v3247, %v3411
    %v3707 = vmax.f32 %v3703, %v3491
    %v3708 = vmax.f32 %v3704, %v3493
    %v3709 = vmax.f32 %v3705, %v3573
    %v3710 = vmax.f32 %v3706, %v3575
    %v3711 = vmax.f32 %v3707, %v3708
    %v3712 = vmax.f32 %v3709, %v3710
    %v3713 = vmax.f32 %v3711, %v3712
    %3714 = vmax.xlane.f32.xlu0 %v3713
    %v3715 = vpop.xlane.xlu0 %3714
    %v3716 = vrot.slane %v3715, 4
    %v3717 = vmax.f32 %v3715, %v3716
    %v3718 = vrot.slane %v3717, 2
    %v3719 = vmax.f32 %v3717, %v3718
    %v3720 = vrot.slane %v3719, 1
    %v3721 = vmax.f32 %v3719, %v3720
    %s3722 = vtos %v3721
    %s3723 = smax.f32 %s3681, %s3722
    %s3724 = ssub.f32 %s3723, %s3702
    %v3725 = vstv %s3724
    %v3726 = vrcp.pop %v3725
    %s3727 = vtos %v3726
    %v3728 = vstv %s3702
    %v3729 = vsub.f32 %v3163, %v3728
    %v3730 = vsub.f32 %v3165, %v3728
    %v3731 = vsub.f32 %v3245, %v3728
    %v3732 = vsub.f32 %v3247, %v3728
    %v3733 = vsub.f32 %v3327, %v3728
    %v3734 = vsub.f32 %v3329, %v3728
    %v3735 = vsub.f32 %v3409, %v3728
    %v3736 = vsub.f32 %v3411, %v3728
    %v3737 = vsub.f32 %v3491, %v3728
    %v3738 = vsub.f32 %v3493, %v3728
    %v3739 = vsub.f32 %v3573, %v3728
    %v3740 = vsub.f32 %v3575, %v3728
    %v3741 = vsub.f32 %v3654, %v3728
    %v3742 = vstv %s3727
    %v3743 = vmul.f32 %v3729, %v3742
    %v3744 = vmul.f32 %v3730, %v3742
    %v3745 = vmul.f32 %v3731, %v3742
    %v3746 = vmul.f32 %v3732, %v3742
    %v3747 = vmul.f32 %v3733, %v3742
    %v3748 = vmul.f32 %v3734, %v3742
    %v3749 = vmul.f32 %v3735, %v3742
    %v3750 = vmul.f32 %v3736, %v3742
    %v3751 = vmul.f32 %v3737, %v3742
    %v3752 = vmul.f32 %v3738, %v3742
    %v3753 = vmul.f32 %v3739, %v3742
    %v3754 = vmul.f32 %v3740, %v3742
    %v3755 = vmul.f32 %v3741, %v3742
    %3756 = vst [vmem:[#allocation13] sm:$0xff] %v3743
    %3757 = vst [vmem:[#allocation13 + $0x8] sm:$0xff] %v3744
    %3758 = vst [vmem:[#allocation13 + $0x10] sm:$0xff] %v3745
    %3759 = vst [vmem:[#allocation13 + $0x18] sm:$0xff] %v3746
    %3760 = vst [vmem:[#allocation13 + $0x20] sm:$0xff] %v3747
    %3761 = vst [vmem:[#allocation13 + $0x28] sm:$0xff] %v3748
    %3762 = vst [vmem:[#allocation13 + $0x30] sm:$0xff] %v3749
    %3763 = vst [vmem:[#allocation13 + $0x38] sm:$0xff] %v3750
    %3764 = vst [vmem:[#allocation13 + $0x40] sm:$0xff] %v3751
    %3765 = vst [vmem:[#allocation13 + $0x48] sm:$0xff] %v3752
    %3766 = vst [vmem:[#allocation13 + $0x50] sm:$0xff] %v3753
    %3767 = vst [vmem:[#allocation13 + $0x58] sm:$0xff] %v3754
    %3768 = vst [vmem:[#allocation13 + $0x60] sm:$0xff] %v3755
    // Predicated region
    $region54: #{tpu_custom_call.1} parent=1 // pred_check
      _
    $region55: #{tpu_custom_call.1} parent=1 // pred_check_branch
      %3770 = sbr.rel (0) target = $region57
    $region56: #{tpu_custom_call.1} parent=1 // pred_region
      %s3772 = ssub.s32 1664, 1664
      %3773 = vsyncadd [#allocation4], %s3772
      %s3775 = sshll.u32 [#allocation13], 4
      %s3776 = int_to_ptr.vmem [resolvable:$true] %s3775
      %3778 = dma.vmem_to_hbm [thread:$0]  %s3776, 1664, %s7, [#allocation4]
    $region57: #{tpu_custom_call.1} parent=1 // pred_fallthru
      _
    // Predicated region
    $region58: #{tpu_custom_call.1} parent=1 // pred_check
      _
    $region59: #{tpu_custom_call.1} parent=1 // pred_check_branch
      %3780 = sbr.rel (0) target = $region61
    $region60: #{tpu_custom_call.1} parent=1 // pred_region
      %3781 = dma.done [#allocation4], 1664
    $region61: #{tpu_custom_call.1} parent=1 // pred_fallthru
      _
    %3782 = vsyncpa [#allocation3], 1
    %3783 = vsyncpa [#allocation6], 1
    %3784 = vsyncpa [#allocation9], 1
    %3785 = vsyncpa [#allocation12], 1
    %3786 = vsyncpa [#allocation4], 1

</llo_original>
